<compile_context>
chip_gen: v7x
topology: tpu7x:2x2x1
jax: 0.10.0
libtpu: 0.0.40
codegen_flags: <defaults>
</compile_context>

<pallas_src>
import functools

import jax
import jax.numpy as jnp
import numpy as np
from jax import lax
from jax.experimental import pallas as pl
from jax.experimental.pallas import tpu as pltpu

# MXU operands are cast to this dtype (accumulation stays f32, all gate
# elementwise math stays f32 — important on v5e which has no bf16 VPU/EUP).
# Set to jnp.float32 for a higher-precision path (tolerances then tighten).
MXU_DTYPE = jnp.bfloat16

# Tile targets.  Per grid step the double-buffered working set stays far below
# the v7x 32 MiB scoped / 64 MiB physical VMEM budget even at the module's
# default h = w = 128 (a few hundred KB per step).
_CONV_ROW_TILE = 256
_GATES_ROW_TILE = 256
_LAST_COL_TILE = 256
_VMEM_LIMIT = 32 * 1024 * 1024


def _pick_tile(n, target, align):
    """Largest t <= target with n % t == 0 and t % align == 0; falls back to n."""
    if n <= target:
        return n
    t = (target // align) * align
    while t >= align:
        if n % t == 0:
            return t
        t -= align
    return n


def _compiler_params():
    return pltpu.CompilerParams(dimension_semantics=("parallel",),
                                vmem_limit_bytes=_VMEM_LIMIT)


def _sigmoid(x):
    # == lax.logistic: a single EUP tanh, no VPU divide.
    return 0.5 * jnp.tanh(0.5 * x) + 0.5


# ----------------------------------------------------------------------------
# Kernel 1: 3x3 "same" convolution as one im2col MXU matmul, row-tiled grid
# ----------------------------------------------------------------------------
def _conv3x3_kernel(p_ref, w_ref, b_ref, o_ref):
    o_ref[...] = (jnp.dot(p_ref[...], w_ref[...],
                          preferred_element_type=jnp.float32) + b_ref[...])


def _im2col_3x3(x_nchw):
    """NCHW -> (B*H*W, 9*Cin) patches; K-axis order is (di, dj, Cin)."""
    B, Cin, H, W = x_nchw.shape
    xp = jnp.pad(jnp.transpose(x_nchw, (0, 2, 3, 1)).astype(jnp.float32),
                 ((0, 0), (1, 1), (1, 1), (0, 0)))          # (B, H+2, W+2, Cin)
    taps = [xp[:, di:di + H, dj:dj + W, :] for di in range(3) for dj in range(3)]
    return jnp.concatenate(taps, axis=-1).reshape(B * H * W, 9 * Cin)


def conv3x3(x_nchw, w_oihw, bias):
    """PyTorch-equivalent Conv2d(k=3, stride=1, pad=1). Returns (B*H*W, Cout) f32."""
    B, Cin, H, W = x_nchw.shape
    Cout = w_oihw.shape[0]
    BHW, K = B * H * W, 9 * Cin
    patches = _im2col_3x3(x_nchw).astype(MXU_DTYPE)                     # (BHW, K)
    w = jnp.transpose(w_oihw, (2, 3, 1, 0)).reshape(K, Cout).astype(MXU_DTYPE)
    b = bias.reshape(1, Cout).astype(jnp.float32)
    tm = _pick_tile(BHW, _CONV_ROW_TILE, 8)
    return pl.pallas_call(
        _conv3x3_kernel,
        out_shape=jax.ShapeDtypeStruct((BHW, Cout), jnp.float32),
        grid=(BHW // tm,),
        in_specs=[pl.BlockSpec((tm, K), lambda i: (i, 0)),
                  pl.BlockSpec((K, Cout), lambda i: (0, 0)),
                  pl.BlockSpec((1, Cout), lambda i: (0, 0))],
        out_specs=pl.BlockSpec((tm, Cout), lambda i: (i, 0)),
        compiler_params=_compiler_params(),
    )(patches, w, b)


# ----------------------------------------------------------------------------
# Kernel 2: fused MIMS + MIMBlock gating, channel-major (nC, B*H, W), batched
#           channel einsums for the ct/oc spatial matmuls (no per-channel loop)
# ----------------------------------------------------------------------------
def _gates_kernel(t_ref, s_ref, x_ref, mh_ref, mx_ref, m_ref, mc_ref,
                  ctw_ref, ocw_ref, newc_ref, newm_ref, og_ref, *, C):
    fb = 1.0  # forget bias
    t = t_ref[...]          # (3C, tbh, W)
    s = s_ref[...]          # (4C, tbh, W)
    x = x_ref[...]          # (4C, tbh, W)
    mh = mh_ref[...]        # (4C, tbh, W)
    mx = mx_ref[...]        # (4C, tbh, W)
    m = m_ref[...]          # (C,  tbh, W)
    mc = mc_ref[...]        # (C,  tbh, W)   MIMS cell state (convlstm_c)
    ctw = ctw_ref[...]      # (2C, W, W)     MXU dtype
    ocw = ocw_ref[...]      # (C,  W, W)     MXU dtype

    # ---------------- MIMS(diff_h, c, convlstm_c) ---------------------------
    # ct_activation = matmul(c_t.repeat([1,2,1,1]), ct_weight): channel-batched
    # per-row spatial matmuls, contracting over the (lane) W axis.
    mc_mx = mc.astype(ctw.dtype)
    i_c = jnp.einsum('crk,ckj->crj', mc_mx, ctw[:C],
                     preferred_element_type=jnp.float32)
    f_c = jnp.einsum('crk,ckj->crj', mc_mx, ctw[C:],
                     preferred_element_type=jnp.float32)
    i_m = _sigmoid(mh[0:C] + i_c + mx[0:C])
    g_m = jnp.tanh(mh[C:2 * C] + mx[C:2 * C])
    f_m = _sigmoid(mh[2 * C:3 * C] + f_c + mx[2 * C:3 * C] + fb)
    o_m = mh[3 * C:4 * C] + mx[3 * C:4 * C]
    mims_c = f_m * mc + i_m * g_m
    o_c = jnp.einsum('crk,ckj->crj', mims_c.astype(ocw.dtype), ocw,
                     preferred_element_type=jnp.float32)
    mims_h = _sigmoid(o_m + o_c) * jnp.tanh(mims_c)

    # ---------------- MIMBlock gates ----------------------------------------
    i_x, g_x, f_x, o_x = x[0:C], x[C:2 * C], x[2 * C:3 * C], x[3 * C:4 * C]
    i_t, g_t, o_t = t[0:C], t[C:2 * C], t[2 * C:3 * C]
    i_s, g_s, f_s, o_s = s[0:C], s[C:2 * C], s[2 * C:3 * C], s[3 * C:4 * C]

    i = _sigmoid(i_x + i_t)
    i_ = _sigmoid(i_x + i_s)
    g = jnp.tanh(g_x + g_t)
    g_ = jnp.tanh(g_x + g_s)
    f_ = _sigmoid(f_x + f_s + fb)
    o = _sigmoid(o_x + o_t + o_s)

    newm_ref[...] = f_ * m + i_ * g_
    newc_ref[...] = mims_h + i * g
    og_ref[...] = o


# ----------------------------------------------------------------------------
# Kernel 3: last 1x1 conv (split into two (C,C) matmuls) + output gate,
#           lane-dense (C, B*H*W) operands, column-tiled grid
# ----------------------------------------------------------------------------
def _last_kernel(nc_ref, nm_ref, og_ref, w1_ref, w2_ref, b_ref, out_ref):
    cell = (jnp.dot(w1_ref[...], nc_ref[...].astype(MXU_DTYPE),
                    preferred_element_type=jnp.float32)
            + jnp.dot(w2_ref[...], nm_ref[...].astype(MXU_DTYPE),
                      preferred_element_type=jnp.float32)
            + b_ref[...])
    out_ref[...] = og_ref[...] * jnp.tanh(cell)


# ----------------------------------------------------------------------------
# Full MIMBlock forward
# ----------------------------------------------------------------------------
def mimblock_forward(params, x, diff_h, h, c, m, convlstm_c):
    B, _, H, W = x.shape
    C = params["out_ch"]
    assert H == W, "MIMS ct/oc spatial matmuls require H == W (as in the PyTorch module)"
    BH, BHW = B * H, B * H * W

    # ---- five 3x3 convolutions: one im2col MXU matmul each ------------------
    t_out = conv3x3(h, params["t_cc_w"], params["t_cc_b"])            # (BHW, 3C)
    s_out = conv3x3(m, params["s_cc_w"], params["s_cc_b"])            # (BHW, 4C)
    x_out = conv3x3(x, params["x_cc_w"], params["x_cc_b"])            # (BHW, 4C)
    mh_out = conv3x3(c, params["mims_h_w"], params["mims_h_b"])       # (BHW, 4C)
    mx_out = conv3x3(diff_h, params["mims_x_w"], params["mims_x_b"])  # (BHW, 4C)

    # ---- channel-major (nC, B*H, W) layout for the fused gates kernel -------
    def to_cm(flat, nch):      # (B*H*W, nch) -> (nch, B*H, W)
        return flat.reshape(B, H, W, nch).transpose(3, 0, 1, 2).reshape(nch, BH, W)

    def state_to_cm(st):       # NCHW (B, C, H, W) -> (C, B*H, W)
        return st.astype(jnp.float32).transpose(1, 0, 2, 3).reshape(C, BH, W)

    tbh = _pick_tile(BH, _GATES_ROW_TILE, 8)

    def row_spec(nch):
        return pl.BlockSpec((nch, tbh, W), lambda i: (0, i, 0))

    def wgt_spec(nch):
        return pl.BlockSpec((nch, W, W), lambda i: (0, 0, 0))

    new_c3, new_m3, og3 = pl.pallas_call(
        functools.partial(_gates_kernel, C=C),
        out_shape=(jax.ShapeDtypeStruct((C, BH, W), jnp.float32),) * 3,
        grid=(BH // tbh,),
        in_specs=[row_spec(3 * C), row_spec(4 * C), row_spec(4 * C),
                  row_spec(4 * C), row_spec(4 * C), row_spec(C), row_spec(C),
                  wgt_spec(2 * C), wgt_spec(C)],
        out_specs=(row_spec(C), row_spec(C), row_spec(C)),
        compiler_params=_compiler_params(),
    )(to_cm(t_out, 3 * C), to_cm(s_out, 4 * C), to_cm(x_out, 4 * C),
      to_cm(mh_out, 4 * C), to_cm(mx_out, 4 * C),
      state_to_cm(m), state_to_cm(convlstm_c),
      params["ct_w"].astype(MXU_DTYPE), params["oc_w"].astype(MXU_DTYPE))

    # ---- last 1x1 conv + output gate on lane-dense (C, B*H*W) views ---------
    nc2 = new_c3.reshape(C, BHW)      # free reshapes (contiguous dim merge)
    nm2 = new_m3.reshape(C, BHW)
    og2 = og3.reshape(C, BHW)
    w_last = params["last_w"].reshape(C, 2 * C)
    w1 = w_last[:, :C].astype(MXU_DTYPE)
    w2 = w_last[:, C:].astype(MXU_DTYPE)
    b_last = params["last_b"].reshape(C, 1).astype(jnp.float32)

    tn = _pick_tile(BHW, _LAST_COL_TILE, 128)
    col_spec = pl.BlockSpec((C, tn), lambda j: (0, j))
    w_spec = pl.BlockSpec((C, C), lambda j: (0, 0))
    new_h2 = pl.pallas_call(
        _last_kernel,
        out_shape=jax.ShapeDtypeStruct((C, BHW), jnp.float32),
        grid=(BHW // tn,),
        in_specs=[col_spec, col_spec, col_spec, w_spec, w_spec,
                  pl.BlockSpec((C, 1), lambda j: (0, 0))],
        out_specs=col_spec,
        compiler_params=_compiler_params(),
    )(nc2, nm2, og2, w1, w2, b_last)

    def cm_to_nchw(a):         # (C, ...) channel-major -> NCHW
        return a.reshape(C, B, H, W).transpose(1, 0, 2, 3)

    return cm_to_nchw(new_h2), cm_to_nchw(new_c3), cm_to_nchw(new_m3)


# ----------------------------------------------------------------------------
# Deterministic parameter init (shapes from the PyTorch __init__)
# ----------------------------------------------------------------------------
def init_params(key, in_ch, out_ch, H, W):
    C = out_ch
    ks = jax.random.split(key, 14)

    def conv_w(k, co, ci):
        return 0.1 * jax.random.normal(k, (co, ci, 3, 3), jnp.float32)

    def bias(k, co):
        return 0.1 * jax.random.normal(k, (co,), jnp.float32)

    return dict(
        out_ch=C,
        t_cc_w=conv_w(ks[0], 3 * C, C), t_cc_b=bias(ks[1], 3 * C),
        s_cc_w=conv_w(ks[2], 4 * C, C), s_cc_b=bias(ks[3], 4 * C),
        x_cc_w=conv_w(ks[4], 4 * C, in_ch), x_cc_b=bias(ks[5], 4 * C),
        mims_h_w=conv_w(ks[6], 4 * C, C), mims_h_b=bias(ks[7], 4 * C),
        mims_x_w=conv_w(ks[8], 4 * C, C), mims_x_b=bias(ks[9], 4 * C),
        ct_w=jax.random.normal(ks[10], (2 * C, H, W), jnp.float32),  # normal(0,1)
        oc_w=jax.random.normal(ks[11], (C, H, W), jnp.float32),      # normal(0,1)
        last_w=0.1 * jax.random.normal(ks[12], (C, 2 * C, 1, 1), jnp.float32),
        last_b=0.1 * jax.random.normal(ks[13], (C,), jnp.float32),
    )


# ----------------------------------------------------------------------------
# Pure-JAX reference (mirrors the PyTorch forward exactly), HIGHEST precision
# ----------------------------------------------------------------------------
def _conv_ref(x, w, b, pad):
    out = lax.conv_general_dilated(x, w, (1, 1), ((pad, pad), (pad, pad)),
                                   dimension_numbers=("NCHW", "OIHW", "NCHW"),
                                   precision=lax.Precision.HIGHEST)
    return out + b.reshape(1, -1, 1, 1)


def mimblock_reference(params, x, diff_h, h, c, m, convlstm_c):
    fb = 1.0
    hp = lax.Precision.HIGHEST
    sg = jax.nn.sigmoid
    i_t, g_t, o_t = jnp.split(_conv_ref(h, params["t_cc_w"], params["t_cc_b"], 1), 3, axis=1)
    i_s, g_s, f_s, o_s = jnp.split(_conv_ref(m, params["s_cc_w"], params["s_cc_b"], 1), 4, axis=1)
    i_x, g_x, f_x, o_x = jnp.split(_conv_ref(x, params["x_cc_w"], params["x_cc_b"], 1), 4, axis=1)
    i = sg(i_x + i_t)
    i_ = sg(i_x + i_s)
    g = jnp.tanh(g_x + g_t)
    g_ = jnp.tanh(g_x + g_s)
    f_ = sg(f_x + f_s + fb)
    o = sg(o_x + o_t + o_s)
    new_m = f_ * m + i_ * g_
    # MIMS(diff_h, c, convlstm_c)
    ih, gh, fh, oh = jnp.split(_conv_ref(c, params["mims_h_w"], params["mims_h_b"], 1), 4, axis=1)
    ct_act = jnp.matmul(jnp.tile(convlstm_c, (1, 2, 1, 1)), params["ct_w"], precision=hp)
    i_cc, f_cc = jnp.split(ct_act, 2, axis=1)
    ix2, gx2, fx2, ox2 = jnp.split(_conv_ref(diff_h, params["mims_x_w"], params["mims_x_b"], 1), 4, axis=1)
    i_mm = sg(ih + i_cc + ix2)
    f_mm = sg(fh + f_cc + fx2 + fb)
    g_mm = gh + gx2
    o_mm = oh + ox2
    c_new = f_mm * convlstm_c + i_mm * jnp.tanh(g_mm)
    o_c = jnp.matmul(c_new, params["oc_w"], precision=hp)
    mims_h = sg(o_mm + o_c) * jnp.tanh(c_new)
    new_c = mims_h + i * g
    cat = jnp.concatenate([new_c, new_m], axis=1)
    cell = _conv_ref(cat, params["last_w"], params["last_b"], 0)
    new_h = o * jnp.tanh(cell)
    return new_h, new_c, new_m


if __name__ == "__main__":
    B, in_ch, out_ch, H, W = 2, 4, 4, 16, 16
    key = jax.random.PRNGKey(0)
    kp, kx, kd, kh, kc, km = jax.random.split(key, 6)
    params = init_params(kp, in_ch, out_ch, H, W)

    x = jax.random.normal(kx, (B, in_ch, H, W), jnp.float32)
    diff_h = jax.random.normal(kd, (B, out_ch, H, W), jnp.float32)
    h = jax.random.normal(kh, (B, out_ch, H, W), jnp.float32)
    c = jax.random.normal(kc, (B, out_ch, H, W), jnp.float32)
    m = jax.random.normal(km, (B, out_ch, H, W), jnp.float32)
    # First forward call: self.convlstm_c is None -> zeros state inside MIMS.
    convlstm_c = jnp.zeros((B, out_ch, H, W), jnp.float32)

    fwd = jax.jit(functools.partial(mimblock_forward, params))
    new_h, new_c, new_m = fwd(x, diff_h, h, c, m, convlstm_c)
    jax.block_until_ready((new_h, new_c, new_m))

    ref_h, ref_c, ref_m = mimblock_reference(params, x, diff_h, h, c, m, convlstm_c)
    # Tolerance covers the bf16 MXU-operand path (all accumulation and gate
    # elementwise math is f32); tighter tolerances apply with MXU_DTYPE=float32.
    tol = dict(atol=1e-2, rtol=1e-2)
    np.testing.assert_allclose(np.asarray(new_h), np.asarray(ref_h), **tol)
    np.testing.assert_allclose(np.asarray(new_c), np.asarray(ref_c), **tol)
    np.testing.assert_allclose(np.asarray(new_m), np.asarray(ref_m), **tol)

    print("KERNEL_OK")
</pallas_src>

<mosaic_0001>
module attributes {stable_mosaic.version = 11 : i64} {
  func.func @_conv3x3_kernel(%arg0: i32, %arg1: memref<256x36xbf16, #tpu.memory_space<vmem>>, %arg2: memref<36x12xbf16, #tpu.memory_space<vmem>>, %arg3: memref<1x12xf32, #tpu.memory_space<vmem>>, %arg4: memref<256x12xf32, #tpu.memory_space<vmem>>) attributes {dimension_semantics = [#tpu.dimension_semantics<parallel>], iteration_bounds = array<i64: 2>, scalar_prefetch = 0 : i64, scratch_operands = 0 : i64, tpu.core_type = #tpu.core_type<tc>, window_params = [{transform_indices = @transform_0, window_bounds = array<i64: 256, 36>}, {pipeline_mode = #tpu.pipeline_mode<synchronous>, transform_indices = @transform_1, window_bounds = array<i64: 36, 12>}, {pipeline_mode = #tpu.pipeline_mode<synchronous>, transform_indices = @transform_2, window_bounds = array<i64: 1, 12>}, {transform_indices = @transform_3, window_bounds = array<i64: 256, 12>}]} {
    %c0 = arith.constant 0 : index
    %c0_0 = arith.constant 0 : index
    %0 = vector.load %arg1[%c0, %c0_0] : memref<256x36xbf16, #tpu.memory_space<vmem>>, vector<256x36xbf16>
    %c0_1 = arith.constant 0 : index
    %c0_2 = arith.constant 0 : index
    %1 = vector.load %arg2[%c0_1, %c0_2] : memref<36x12xbf16, #tpu.memory_space<vmem>>, vector<36x12xbf16>
    %cst = arith.constant dense<0.000000e+00> : vector<256x12xf32>
    %2 = tpu.matmul %0, %1, %cst {dimension_numbers = #tpu.dot_dimension_numbers<[1], [0], [0], [1], [0, 0, 1, 1], [], []>} : vector<256x36xbf16>, vector<36x12xbf16>, vector<256x12xf32> -> vector<256x12xf32>
    %c0_3 = arith.constant 0 : index
    %c0_4 = arith.constant 0 : index
    %3 = vector.load %arg3[%c0_3, %c0_4] : memref<1x12xf32, #tpu.memory_space<vmem>>, vector<1x12xf32>
    %4 = vector.broadcast %3 : vector<1x12xf32> to vector<256x12xf32>
    %5 = arith.addf %2, %4 : vector<256x12xf32>
    %c0_5 = arith.constant 0 : index
    %c0_6 = arith.constant 0 : index
    %6 = vector.load %arg4[%c0_5, %c0_6] : memref<256x12xf32, #tpu.memory_space<vmem>>, vector<256x12xf32>
    tpu.vector_store %arg4[%c0_5, %c0_6], %5 {strides = array<i32>} : memref<256x12xf32, #tpu.memory_space<vmem>>, vector<256x12xf32>,
    return
  }
  func.func @transform_0(%arg0: i32) -> (i32, i32) {
    %c0_i32 = arith.constant 0 : i32
    %c0_i32_0 = arith.constant 0 : i32
    return %arg0, %c0_i32 : i32, i32
  }
  func.func @transform_1(%arg0: i32) -> (i32, i32) {
    %c0_i32 = arith.constant 0 : i32
    %c0_i32_0 = arith.constant 0 : i32
    %c0_i32_1 = arith.constant 0 : i32
    return %c0_i32, %c0_i32_0 : i32, i32
  }
  func.func @transform_2(%arg0: i32) -> (i32, i32) {
    %c0_i32 = arith.constant 0 : i32
    %c0_i32_0 = arith.constant 0 : i32
    %c0_i32_1 = arith.constant 0 : i32
    return %c0_i32, %c0_i32_0 : i32, i32
  }
  func.func @transform_3(%arg0: i32) -> (i32, i32) {
    %c0_i32 = arith.constant 0 : i32
    %c0_i32_0 = arith.constant 0 : i32
    return %arg0, %c0_i32 : i32, i32
  }
}

module attributes {stable_mosaic.version = 11 : i64} {
  func.func @_conv3x3_kernel(%arg0: i32, %arg1: memref<256x36xbf16, #tpu.memory_space<vmem>>, %arg2: memref<36x16xbf16, #tpu.memory_space<vmem>>, %arg3: memref<1x16xf32, #tpu.memory_space<vmem>>, %arg4: memref<256x16xf32, #tpu.memory_space<vmem>>) attributes {dimension_semantics = [#tpu.dimension_semantics<parallel>], iteration_bounds = array<i64: 2>, scalar_prefetch = 0 : i64, scratch_operands = 0 : i64, tpu.core_type = #tpu.core_type<tc>, window_params = [{transform_indices = @transform_0, window_bounds = array<i64: 256, 36>}, {pipeline_mode = #tpu.pipeline_mode<synchronous>, transform_indices = @transform_1, window_bounds = array<i64: 36, 16>}, {pipeline_mode = #tpu.pipeline_mode<synchronous>, transform_indices = @transform_2, window_bounds = array<i64: 1, 16>}, {transform_indices = @transform_3, window_bounds = array<i64: 256, 16>}]} {
    %c0 = arith.constant 0 : index
    %c0_0 = arith.constant 0 : index
    %0 = vector.load %arg1[%c0, %c0_0] : memref<256x36xbf16, #tpu.memory_space<vmem>>, vector<256x36xbf16>
    %c0_1 = arith.constant 0 : index
    %c0_2 = arith.constant 0 : index
    %1 = vector.load %arg2[%c0_1, %c0_2] : memref<36x16xbf16, #tpu.memory_space<vmem>>, vector<36x16xbf16>
    %cst = arith.constant dense<0.000000e+00> : vector<256x16xf32>
    %2 = tpu.matmul %0, %1, %cst {dimension_numbers = #tpu.dot_dimension_numbers<[1], [0], [0], [1], [0, 0, 1, 1], [], []>} : vector<256x36xbf16>, vector<36x16xbf16>, vector<256x16xf32> -> vector<256x16xf32>
    %c0_3 = arith.constant 0 : index
    %c0_4 = arith.constant 0 : index
    %3 = vector.load %arg3[%c0_3, %c0_4] : memref<1x16xf32, #tpu.memory_space<vmem>>, vector<1x16xf32>
    %4 = vector.broadcast %3 : vector<1x16xf32> to vector<256x16xf32>
    %5 = arith.addf %2, %4 : vector<256x16xf32>
    %c0_5 = arith.constant 0 : index
    %c0_6 = arith.constant 0 : index
    %6 = vector.load %arg4[%c0_5, %c0_6] : memref<256x16xf32, #tpu.memory_space<vmem>>, vector<256x16xf32>
    tpu.vector_store %arg4[%c0_5, %c0_6], %5 {strides = array<i32>} : memref<256x16xf32, #tpu.memory_space<vmem>>, vector<256x16xf32>,
    return
  }
  func.func @transform_0(%arg0: i32) -> (i32, i32) {
    %c0_i32 = arith.constant 0 : i32
    %c0_i32_0 = arith.constant 0 : i32
    return %arg0, %c0_i32 : i32, i32
  }
  func.func @transform_1(%arg0: i32) -> (i32, i32) {
    %c0_i32 = arith.constant 0 : i32
    %c0_i32_0 = arith.constant 0 : i32
    %c0_i32_1 = arith.constant 0 : i32
    return %c0_i32, %c0_i32_0 : i32, i32
  }
  func.func @transform_2(%arg0: i32) -> (i32, i32) {
    %c0_i32 = arith.constant 0 : i32
    %c0_i32_0 = arith.constant 0 : i32
    %c0_i32_1 = arith.constant 0 : i32
    return %c0_i32, %c0_i32_0 : i32, i32
  }
  func.func @transform_3(%arg0: i32) -> (i32, i32) {
    %c0_i32 = arith.constant 0 : i32
    %c0_i32_0 = arith.constant 0 : i32
    return %arg0, %c0_i32 : i32, i32
  }
}

module attributes {stable_mosaic.version = 11 : i64} {
  func.func @_gates_kernel(%arg0: i32, %arg1: memref<12x32x16xf32, #tpu.memory_space<vmem>>, %arg2: memref<16x32x16xf32, #tpu.memory_space<vmem>>, %arg3: memref<16x32x16xf32, #tpu.memory_space<vmem>>, %arg4: memref<16x32x16xf32, #tpu.memory_space<vmem>>, %arg5: memref<16x32x16xf32, #tpu.memory_space<vmem>>, %arg6: memref<4x32x16xf32, #tpu.memory_space<vmem>>, %arg7: memref<4x32x16xf32, #tpu.memory_space<vmem>>, %arg8: memref<8x16x16xbf16, #tpu.memory_space<vmem>>, %arg9: memref<4x16x16xbf16, #tpu.memory_space<vmem>>, %arg10: memref<4x32x16xf32, #tpu.memory_space<vmem>>, %arg11: memref<4x32x16xf32, #tpu.memory_space<vmem>>, %arg12: memref<4x32x16xf32, #tpu.memory_space<vmem>>) attributes {dimension_semantics = [#tpu.dimension_semantics<parallel>], iteration_bounds = array<i64: 1>, scalar_prefetch = 0 : i64, scratch_operands = 0 : i64, tpu.core_type = #tpu.core_type<tc>, window_params = [{transform_indices = @transform_0, window_bounds = array<i64: 12, 32, 16>}, {transform_indices = @transform_1, window_bounds = array<i64: 16, 32, 16>}, {transform_indices = @transform_2, window_bounds = array<i64: 16, 32, 16>}, {transform_indices = @transform_3, window_bounds = array<i64: 16, 32, 16>}, {transform_indices = @transform_4, window_bounds = array<i64: 16, 32, 16>}, {transform_indices = @transform_5, window_bounds = array<i64: 4, 32, 16>}, {transform_indices = @transform_6, window_bounds = array<i64: 4, 32, 16>}, {pipeline_mode = #tpu.pipeline_mode<synchronous>, transform_indices = @transform_7, window_bounds = array<i64: 8, 16, 16>}, {pipeline_mode = #tpu.pipeline_mode<synchronous>, transform_indices = @transform_8, window_bounds = array<i64: 4, 16, 16>}, {transform_indices = @transform_9, window_bounds = array<i64: 4, 32, 16>}, {transform_indices = @transform_10, window_bounds = array<i64: 4, 32, 16>}, {transform_indices = @transform_11, window_bounds = array<i64: 4, 32, 16>}]} {
    %c0 = arith.constant 0 : index
    %c0_0 = arith.constant 0 : index
    %c0_1 = arith.constant 0 : index
    %0 = vector.load %arg1[%c0, %c0_0, %c0_1] : memref<12x32x16xf32, #tpu.memory_space<vmem>>, vector<12x32x16xf32>
    %c0_2 = arith.constant 0 : index
    %c0_3 = arith.constant 0 : index
    %c0_4 = arith.constant 0 : index
    %1 = vector.load %arg2[%c0_2, %c0_3, %c0_4] : memref<16x32x16xf32, #tpu.memory_space<vmem>>, vector<16x32x16xf32>
    %c0_5 = arith.constant 0 : index
    %c0_6 = arith.constant 0 : index
    %c0_7 = arith.constant 0 : index
    %2 = vector.load %arg3[%c0_5, %c0_6, %c0_7] : memref<16x32x16xf32, #tpu.memory_space<vmem>>, vector<16x32x16xf32>
    %c0_8 = arith.constant 0 : index
    %c0_9 = arith.constant 0 : index
    %c0_10 = arith.constant 0 : index
    %3 = vector.load %arg4[%c0_8, %c0_9, %c0_10] : memref<16x32x16xf32, #tpu.memory_space<vmem>>, vector<16x32x16xf32>
    %c0_11 = arith.constant 0 : index
    %c0_12 = arith.constant 0 : index
    %c0_13 = arith.constant 0 : index
    %4 = vector.load %arg5[%c0_11, %c0_12, %c0_13] : memref<16x32x16xf32, #tpu.memory_space<vmem>>, vector<16x32x16xf32>
    %c0_14 = arith.constant 0 : index
    %c0_15 = arith.constant 0 : index
    %c0_16 = arith.constant 0 : index
    %5 = vector.load %arg6[%c0_14, %c0_15, %c0_16] : memref<4x32x16xf32, #tpu.memory_space<vmem>>, vector<4x32x16xf32>
    %c0_17 = arith.constant 0 : index
    %c0_18 = arith.constant 0 : index
    %c0_19 = arith.constant 0 : index
    %6 = vector.load %arg7[%c0_17, %c0_18, %c0_19] : memref<4x32x16xf32, #tpu.memory_space<vmem>>, vector<4x32x16xf32>
    %c0_20 = arith.constant 0 : index
    %c0_21 = arith.constant 0 : index
    %c0_22 = arith.constant 0 : index
    %7 = vector.load %arg8[%c0_20, %c0_21, %c0_22] : memref<8x16x16xbf16, #tpu.memory_space<vmem>>, vector<8x16x16xbf16>
    %c0_23 = arith.constant 0 : index
    %c0_24 = arith.constant 0 : index
    %c0_25 = arith.constant 0 : index
    %8 = vector.load %arg9[%c0_23, %c0_24, %c0_25] : memref<4x16x16xbf16, #tpu.memory_space<vmem>>, vector<4x16x16xbf16>
    %9 = arith.truncf %6 : vector<4x32x16xf32> to vector<4x32x16xbf16>
    %10 = vector.extract_strided_slice %7 {offsets = [0, 0, 0], sizes = [4, 16, 16], strides = [1, 1, 1]} : vector<8x16x16xbf16> to vector<4x16x16xbf16>
    "tpu.trace_start"() <{level = 10 : i32, message = "crk,ckj->crj"}> : () -> ()
    %cst = arith.constant dense<0.000000e+00> : vector<4x32x16xf32>
    %11 = tpu.matmul %9, %10, %cst {dimension_numbers = #tpu.dot_dimension_numbers<[2], [1], [1], [2], [0, 0, 0, 1, 1, 2], [0], [0]>} : vector<4x32x16xbf16>, vector<4x16x16xbf16>, vector<4x32x16xf32> -> vector<4x32x16xf32>
    "tpu.trace_stop"() : () -> ()
    %12 = vector.extract_strided_slice %7 {offsets = [4, 0, 0], sizes = [4, 16, 16], strides = [1, 1, 1]} : vector<8x16x16xbf16> to vector<4x16x16xbf16>
    "tpu.trace_start"() <{level = 10 : i32, message = "crk,ckj->crj"}> : () -> ()
    %cst_26 = arith.constant dense<0.000000e+00> : vector<4x32x16xf32>
    %13 = tpu.matmul %9, %12, %cst_26 {dimension_numbers = #tpu.dot_dimension_numbers<[2], [1], [1], [2], [0, 0, 0, 1, 1, 2], [0], [0]>} : vector<4x32x16xbf16>, vector<4x16x16xbf16>, vector<4x32x16xf32> -> vector<4x32x16xf32>
    "tpu.trace_stop"() : () -> ()
    %14 = vector.extract_strided_slice %3 {offsets = [0, 0, 0], sizes = [4, 32, 16], strides = [1, 1, 1]} : vector<16x32x16xf32> to vector<4x32x16xf32>
    %15 = arith.addf %14, %11 : vector<4x32x16xf32>
    %16 = vector.extract_strided_slice %4 {offsets = [0, 0, 0], sizes = [4, 32, 16], strides = [1, 1, 1]} : vector<16x32x16xf32> to vector<4x32x16xf32>
    %17 = arith.addf %15, %16 : vector<4x32x16xf32>
    %cst_27 = arith.constant 5.000000e-01 : f32
    %18 = vector.broadcast %cst_27 : f32 to vector<4x32x16xf32>
    %19 = arith.mulf %18, %17 : vector<4x32x16xf32>
    %20 = math.tanh %19 : vector<4x32x16xf32>
    %cst_28 = arith.constant 5.000000e-01 : f32
    %21 = vector.broadcast %cst_28 : f32 to vector<4x32x16xf32>
    %22 = arith.mulf %21, %20 : vector<4x32x16xf32>
    %cst_29 = arith.constant 5.000000e-01 : f32
    %23 = vector.broadcast %cst_29 : f32 to vector<4x32x16xf32>
    %24 = arith.addf %22, %23 : vector<4x32x16xf32>
    %25 = vector.extract_strided_slice %3 {offsets = [4, 0, 0], sizes = [4, 32, 16], strides = [1, 1, 1]} : vector<16x32x16xf32> to vector<4x32x16xf32>
    %26 = vector.extract_strided_slice %4 {offsets = [4, 0, 0], sizes = [4, 32, 16], strides = [1, 1, 1]} : vector<16x32x16xf32> to vector<4x32x16xf32>
    %27 = arith.addf %25, %26 : vector<4x32x16xf32>
    %28 = math.tanh %27 : vector<4x32x16xf32>
    %29 = vector.extract_strided_slice %3 {offsets = [8, 0, 0], sizes = [4, 32, 16], strides = [1, 1, 1]} : vector<16x32x16xf32> to vector<4x32x16xf32>
    %30 = arith.addf %29, %13 : vector<4x32x16xf32>
    %31 = vector.extract_strided_slice %4 {offsets = [8, 0, 0], sizes = [4, 32, 16], strides = [1, 1, 1]} : vector<16x32x16xf32> to vector<4x32x16xf32>
    %32 = arith.addf %30, %31 : vector<4x32x16xf32>
    %cst_30 = arith.constant 1.000000e+00 : f32
    %33 = vector.broadcast %cst_30 : f32 to vector<4x32x16xf32>
    %34 = arith.addf %32, %33 : vector<4x32x16xf32>
    %cst_31 = arith.constant 5.000000e-01 : f32
    %35 = vector.broadcast %cst_31 : f32 to vector<4x32x16xf32>
    %36 = arith.mulf %35, %34 : vector<4x32x16xf32>
    %37 = math.tanh %36 : vector<4x32x16xf32>
    %cst_32 = arith.constant 5.000000e-01 : f32
    %38 = vector.broadcast %cst_32 : f32 to vector<4x32x16xf32>
    %39 = arith.mulf %38, %37 : vector<4x32x16xf32>
    %cst_33 = arith.constant 5.000000e-01 : f32
    %40 = vector.broadcast %cst_33 : f32 to vector<4x32x16xf32>
    %41 = arith.addf %39, %40 : vector<4x32x16xf32>
    %42 = vector.extract_strided_slice %3 {offsets = [12, 0, 0], sizes = [4, 32, 16], strides = [1, 1, 1]} : vector<16x32x16xf32> to vector<4x32x16xf32>
    %43 = vector.extract_strided_slice %4 {offsets = [12, 0, 0], sizes = [4, 32, 16], strides = [1, 1, 1]} : vector<16x32x16xf32> to vector<4x32x16xf32>
    %44 = arith.addf %42, %43 : vector<4x32x16xf32>
    %45 = arith.mulf %41, %6 : vector<4x32x16xf32>
    %46 = arith.mulf %24, %28 : vector<4x32x16xf32>
    %47 = arith.addf %45, %46 : vector<4x32x16xf32>
    %48 = arith.truncf %47 : vector<4x32x16xf32> to vector<4x32x16xbf16>
    "tpu.trace_start"() <{level = 10 : i32, message = "crk,ckj->crj"}> : () -> ()
    %cst_34 = arith.constant dense<0.000000e+00> : vector<4x32x16xf32>
    %49 = tpu.matmul %48, %8, %cst_34 {dimension_numbers = #tpu.dot_dimension_numbers<[2], [1], [1], [2], [0, 0, 0, 1, 1, 2], [0], [0]>} : vector<4x32x16xbf16>, vector<4x16x16xbf16>, vector<4x32x16xf32> -> vector<4x32x16xf32>
    "tpu.trace_stop"() : () -> ()
    %50 = arith.addf %44, %49 : vector<4x32x16xf32>
    %cst_35 = arith.constant 5.000000e-01 : f32
    %51 = vector.broadcast %cst_35 : f32 to vector<4x32x16xf32>
    %52 = arith.mulf %51, %50 : vector<4x32x16xf32>
    %53 = math.tanh %52 : vector<4x32x16xf32>
    %cst_36 = arith.constant 5.000000e-01 : f32
    %54 = vector.broadcast %cst_36 : f32 to vector<4x32x16xf32>
    %55 = arith.mulf %54, %53 : vector<4x32x16xf32>
    %cst_37 = arith.constant 5.000000e-01 : f32
    %56 = vector.broadcast %cst_37 : f32 to vector<4x32x16xf32>
    %57 = arith.addf %55, %56 : vector<4x32x16xf32>
    %58 = math.tanh %47 : vector<4x32x16xf32>
    %59 = arith.mulf %57, %58 : vector<4x32x16xf32>
    %60 = vector.extract_strided_slice %2 {offsets = [0, 0, 0], sizes = [4, 32, 16], strides = [1, 1, 1]} : vector<16x32x16xf32> to vector<4x32x16xf32>
    %61 = vector.extract_strided_slice %2 {offsets = [4, 0, 0], sizes = [4, 32, 16], strides = [1, 1, 1]} : vector<16x32x16xf32> to vector<4x32x16xf32>
    %62 = vector.extract_strided_slice %2 {offsets = [8, 0, 0], sizes = [4, 32, 16], strides = [1, 1, 1]} : vector<16x32x16xf32> to vector<4x32x16xf32>
    %63 = vector.extract_strided_slice %2 {offsets = [12, 0, 0], sizes = [4, 32, 16], strides = [1, 1, 1]} : vector<16x32x16xf32> to vector<4x32x16xf32>
    %64 = vector.extract_strided_slice %0 {offsets = [0, 0, 0], sizes = [4, 32, 16], strides = [1, 1, 1]} : vector<12x32x16xf32> to vector<4x32x16xf32>
    %65 = vector.extract_strided_slice %0 {offsets = [4, 0, 0], sizes = [4, 32, 16], strides = [1, 1, 1]} : vector<12x32x16xf32> to vector<4x32x16xf32>
    %66 = vector.extract_strided_slice %0 {offsets = [8, 0, 0], sizes = [4, 32, 16], strides = [1, 1, 1]} : vector<12x32x16xf32> to vector<4x32x16xf32>
    %67 = vector.extract_strided_slice %1 {offsets = [0, 0, 0], sizes = [4, 32, 16], strides = [1, 1, 1]} : vector<16x32x16xf32> to vector<4x32x16xf32>
    %68 = vector.extract_strided_slice %1 {offsets = [4, 0, 0], sizes = [4, 32, 16], strides = [1, 1, 1]} : vector<16x32x16xf32> to vector<4x32x16xf32>
    %69 = vector.extract_strided_slice %1 {offsets = [8, 0, 0], sizes = [4, 32, 16], strides = [1, 1, 1]} : vector<16x32x16xf32> to vector<4x32x16xf32>
    %70 = vector.extract_strided_slice %1 {offsets = [12, 0, 0], sizes = [4, 32, 16], strides = [1, 1, 1]} : vector<16x32x16xf32> to vector<4x32x16xf32>
    %71 = arith.addf %60, %64 : vector<4x32x16xf32>
    %cst_38 = arith.constant 5.000000e-01 : f32
    %72 = vector.broadcast %cst_38 : f32 to vector<4x32x16xf32>
    %73 = arith.mulf %72, %71 : vector<4x32x16xf32>
    %74 = math.tanh %73 : vector<4x32x16xf32>
    %cst_39 = arith.constant 5.000000e-01 : f32
    %75 = vector.broadcast %cst_39 : f32 to vector<4x32x16xf32>
    %76 = arith.mulf %75, %74 : vector<4x32x16xf32>
    %cst_40 = arith.constant 5.000000e-01 : f32
    %77 = vector.broadcast %cst_40 : f32 to vector<4x32x16xf32>
    %78 = arith.addf %76, %77 : vector<4x32x16xf32>
    %79 = arith.addf %60, %67 : vector<4x32x16xf32>
    %cst_41 = arith.constant 5.000000e-01 : f32
    %80 = vector.broadcast %cst_41 : f32 to vector<4x32x16xf32>
    %81 = arith.mulf %80, %79 : vector<4x32x16xf32>
    %82 = math.tanh %81 : vector<4x32x16xf32>
    %cst_42 = arith.constant 5.000000e-01 : f32
    %83 = vector.broadcast %cst_42 : f32 to vector<4x32x16xf32>
    %84 = arith.mulf %83, %82 : vector<4x32x16xf32>
    %cst_43 = arith.constant 5.000000e-01 : f32
    %85 = vector.broadcast %cst_43 : f32 to vector<4x32x16xf32>
    %86 = arith.addf %84, %85 : vector<4x32x16xf32>
    %87 = arith.addf %61, %65 : vector<4x32x16xf32>
    %88 = math.tanh %87 : vector<4x32x16xf32>
    %89 = arith.addf %61, %68 : vector<4x32x16xf32>
    %90 = math.tanh %89 : vector<4x32x16xf32>
    %91 = arith.addf %62, %69 : vector<4x32x16xf32>
    %cst_44 = arith.constant 1.000000e+00 : f32
    %92 = vector.broadcast %cst_44 : f32 to vector<4x32x16xf32>
    %93 = arith.addf %91, %92 : vector<4x32x16xf32>
    %cst_45 = arith.constant 5.000000e-01 : f32
    %94 = vector.broadcast %cst_45 : f32 to vector<4x32x16xf32>
    %95 = arith.mulf %94, %93 : vector<4x32x16xf32>
    %96 = math.tanh %95 : vector<4x32x16xf32>
    %cst_46 = arith.constant 5.000000e-01 : f32
    %97 = vector.broadcast %cst_46 : f32 to vector<4x32x16xf32>
    %98 = arith.mulf %97, %96 : vector<4x32x16xf32>
    %cst_47 = arith.constant 5.000000e-01 : f32
    %99 = vector.broadcast %cst_47 : f32 to vector<4x32x16xf32>
    %100 = arith.addf %98, %99 : vector<4x32x16xf32>
    %101 = arith.addf %63, %66 : vector<4x32x16xf32>
    %102 = arith.addf %101, %70 : vector<4x32x16xf32>
    %cst_48 = arith.constant 5.000000e-01 : f32
    %103 = vector.broadcast %cst_48 : f32 to vector<4x32x16xf32>
    %104 = arith.mulf %103, %102 : vector<4x32x16xf32>
    %105 = math.tanh %104 : vector<4x32x16xf32>
    %cst_49 = arith.constant 5.000000e-01 : f32
    %106 = vector.broadcast %cst_49 : f32 to vector<4x32x16xf32>
    %107 = arith.mulf %106, %105 : vector<4x32x16xf32>
    %cst_50 = arith.constant 5.000000e-01 : f32
    %108 = vector.broadcast %cst_50 : f32 to vector<4x32x16xf32>
    %109 = arith.addf %107, %108 : vector<4x32x16xf32>
    %110 = arith.mulf %100, %5 : vector<4x32x16xf32>
    %111 = arith.mulf %86, %90 : vector<4x32x16xf32>
    %112 = arith.addf %110, %111 : vector<4x32x16xf32>
    %c0_51 = arith.constant 0 : index
    %c0_52 = arith.constant 0 : index
    %c0_53 = arith.constant 0 : index
    %113 = vector.load %arg11[%c0_51, %c0_52, %c0_53] : memref<4x32x16xf32, #tpu.memory_space<vmem>>, vector<4x32x16xf32>
    tpu.vector_store %arg11[%c0_51, %c0_52, %c0_53], %112 {strides = array<i32>} : memref<4x32x16xf32, #tpu.memory_space<vmem>>, vector<4x32x16xf32>,
    %114 = arith.mulf %78, %88 : vector<4x32x16xf32>
    %115 = arith.addf %59, %114 : vector<4x32x16xf32>
    %c0_54 = arith.constant 0 : index
    %c0_55 = arith.constant 0 : index
    %c0_56 = arith.constant 0 : index
    %116 = vector.load %arg10[%c0_54, %c0_55, %c0_56] : memref<4x32x16xf32, #tpu.memory_space<vmem>>, vector<4x32x16xf32>
    tpu.vector_store %arg10[%c0_54, %c0_55, %c0_56], %115 {strides = array<i32>} : memref<4x32x16xf32, #tpu.memory_space<vmem>>, vector<4x32x16xf32>,
    %c0_57 = arith.constant 0 : index
    %c0_58 = arith.constant 0 : index
    %c0_59 = arith.constant 0 : index
    %117 = vector.load %arg12[%c0_57, %c0_58, %c0_59] : memref<4x32x16xf32, #tpu.memory_space<vmem>>, vector<4x32x16xf32>
    tpu.vector_store %arg12[%c0_57, %c0_58, %c0_59], %109 {strides = array<i32>} : memref<4x32x16xf32, #tpu.memory_space<vmem>>, vector<4x32x16xf32>,
    return
  }
  func.func @transform_0(%arg0: i32) -> (i32, i32, i32) {
    %c0_i32 = arith.constant 0 : i32
    %c0_i32_0 = arith.constant 0 : i32
    %c0_i32_1 = arith.constant 0 : i32
    return %c0_i32, %arg0, %c0_i32_0 : i32, i32, i32
  }
  func.func @transform_1(%arg0: i32) -> (i32, i32, i32) {
    %c0_i32 = arith.constant 0 : i32
    %c0_i32_0 = arith.constant 0 : i32
    %c0_i32_1 = arith.constant 0 : i32
    return %c0_i32, %arg0, %c0_i32_0 : i32, i32, i32
  }
  func.func @transform_2(%arg0: i32) -> (i32, i32, i32) {
    %c0_i32 = arith.constant 0 : i32
    %c0_i32_0 = arith.constant 0 : i32
    %c0_i32_1 = arith.constant 0 : i32
    return %c0_i32, %arg0, %c0_i32_0 : i32, i32, i32
  }
  func.func @transform_3(%arg0: i32) -> (i32, i32, i32) {
    %c0_i32 = arith.constant 0 : i32
    %c0_i32_0 = arith.constant 0 : i32
    %c0_i32_1 = arith.constant 0 : i32
    return %c0_i32, %arg0, %c0_i32_0 : i32, i32, i32
  }
  func.func @transform_4(%arg0: i32) -> (i32, i32, i32) {
    %c0_i32 = arith.constant 0 : i32
    %c0_i32_0 = arith.constant 0 : i32
    %c0_i32_1 = arith.constant 0 : i32
    return %c0_i32, %arg0, %c0_i32_0 : i32, i32, i32
  }
  func.func @transform_5(%arg0: i32) -> (i32, i32, i32) {
    %c0_i32 = arith.constant 0 : i32
    %c0_i32_0 = arith.constant 0 : i32
    %c0_i32_1 = arith.constant 0 : i32
    return %c0_i32, %arg0, %c0_i32_0 : i32, i32, i32
  }
  func.func @transform_6(%arg0: i32) -> (i32, i32, i32) {
    %c0_i32 = arith.constant 0 : i32
    %c0_i32_0 = arith.constant 0 : i32
    %c0_i32_1 = arith.constant 0 : i32
    return %c0_i32, %arg0, %c0_i32_0 : i32, i32, i32
  }
  func.func @transform_7(%arg0: i32) -> (i32, i32, i32) {
    %c0_i32 = arith.constant 0 : i32
    %c0_i32_0 = arith.constant 0 : i32
    %c0_i32_1 = arith.constant 0 : i32
    %c0_i32_2 = arith.constant 0 : i32
    return %c0_i32, %c0_i32_0, %c0_i32_1 : i32, i32, i32
  }
  func.func @transform_8(%arg0: i32) -> (i32, i32, i32) {
    %c0_i32 = arith.constant 0 : i32
    %c0_i32_0 = arith.constant 0 : i32
    %c0_i32_1 = arith.constant 0 : i32
    %c0_i32_2 = arith.constant 0 : i32
    return %c0_i32, %c0_i32_0, %c0_i32_1 : i32, i32, i32
  }
  func.func @transform_9(%arg0: i32) -> (i32, i32, i32) {
    %c0_i32 = arith.constant 0 : i32
    %c0_i32_0 = arith.constant 0 : i32
    %c0_i32_1 = arith.constant 0 : i32
    return %c0_i32, %arg0, %c0_i32_0 : i32, i32, i32
  }
  func.func @transform_10(%arg0: i32) -> (i32, i32, i32) {
    %c0_i32 = arith.constant 0 : i32
    %c0_i32_0 = arith.constant 0 : i32
    %c0_i32_1 = arith.constant 0 : i32
    return %c0_i32, %arg0, %c0_i32_0 : i32, i32, i32
  }
  func.func @transform_11(%arg0: i32) -> (i32, i32, i32) {
    %c0_i32 = arith.constant 0 : i32
    %c0_i32_0 = arith.constant 0 : i32
    %c0_i32_1 = arith.constant 0 : i32
    return %c0_i32, %arg0, %c0_i32_0 : i32, i32, i32
  }
}

module attributes {stable_mosaic.version = 11 : i64} {
  func.func @_last_kernel(%arg0: i32, %arg1: memref<4x256xf32, #tpu.memory_space<vmem>>, %arg2: memref<4x256xf32, #tpu.memory_space<vmem>>, %arg3: memref<4x256xf32, #tpu.memory_space<vmem>>, %arg4: memref<4x4xbf16, #tpu.memory_space<vmem>>, %arg5: memref<4x4xbf16, #tpu.memory_space<vmem>>, %arg6: memref<4x1xf32, #tpu.memory_space<vmem>>, %arg7: memref<4x256xf32, #tpu.memory_space<vmem>>) attributes {dimension_semantics = [#tpu.dimension_semantics<parallel>], iteration_bounds = array<i64: 2>, scalar_prefetch = 0 : i64, scratch_operands = 0 : i64, tpu.core_type = #tpu.core_type<tc>, window_params = [{transform_indices = @transform_0, window_bounds = array<i64: 4, 256>}, {transform_indices = @transform_1, window_bounds = array<i64: 4, 256>}, {transform_indices = @transform_2, window_bounds = array<i64: 4, 256>}, {pipeline_mode = #tpu.pipeline_mode<synchronous>, transform_indices = @transform_3, window_bounds = array<i64: 4, 4>}, {pipeline_mode = #tpu.pipeline_mode<synchronous>, transform_indices = @transform_4, window_bounds = array<i64: 4, 4>}, {pipeline_mode = #tpu.pipeline_mode<synchronous>, transform_indices = @transform_5, window_bounds = array<i64: 4, 1>}, {transform_indices = @transform_6, window_bounds = array<i64: 4, 256>}]} {
    %c0 = arith.constant 0 : index
    %c0_0 = arith.constant 0 : index
    %0 = vector.load %arg4[%c0, %c0_0] : memref<4x4xbf16, #tpu.memory_space<vmem>>, vector<4x4xbf16>
    %c0_1 = arith.constant 0 : index
    %c0_2 = arith.constant 0 : index
    %1 = vector.load %arg1[%c0_1, %c0_2] : memref<4x256xf32, #tpu.memory_space<vmem>>, vector<4x256xf32>
    %2 = arith.truncf %1 : vector<4x256xf32> to vector<4x256xbf16>
    %cst = arith.constant dense<0.000000e+00> : vector<4x256xf32>
    %3 = tpu.matmul %0, %2, %cst {dimension_numbers = #tpu.dot_dimension_numbers<[1], [0], [0], [1], [0, 0, 1, 1], [], []>} : vector<4x4xbf16>, vector<4x256xbf16>, vector<4x256xf32> -> vector<4x256xf32>
    %c0_3 = arith.constant 0 : index
    %c0_4 = arith.constant 0 : index
    %4 = vector.load %arg5[%c0_3, %c0_4] : memref<4x4xbf16, #tpu.memory_space<vmem>>, vector<4x4xbf16>
    %c0_5 = arith.constant 0 : index
    %c0_6 = arith.constant 0 : index
    %5 = vector.load %arg2[%c0_5, %c0_6] : memref<4x256xf32, #tpu.memory_space<vmem>>, vector<4x256xf32>
    %6 = arith.truncf %5 : vector<4x256xf32> to vector<4x256xbf16>
    %cst_7 = arith.constant dense<0.000000e+00> : vector<4x256xf32>
    %7 = tpu.matmul %4, %6, %cst_7 {dimension_numbers = #tpu.dot_dimension_numbers<[1], [0], [0], [1], [0, 0, 1, 1], [], []>} : vector<4x4xbf16>, vector<4x256xbf16>, vector<4x256xf32> -> vector<4x256xf32>
    %8 = arith.addf %3, %7 : vector<4x256xf32>
    %c0_8 = arith.constant 0 : index
    %c0_9 = arith.constant 0 : index
    %9 = vector.load %arg6[%c0_8, %c0_9] : memref<4x1xf32, #tpu.memory_space<vmem>>, vector<4x1xf32>
    %10 = vector.broadcast %9 : vector<4x1xf32> to vector<4x256xf32>
    %11 = arith.addf %8, %10 : vector<4x256xf32>
    %c0_10 = arith.constant 0 : index
    %c0_11 = arith.constant 0 : index
    %12 = vector.load %arg3[%c0_10, %c0_11] : memref<4x256xf32, #tpu.memory_space<vmem>>, vector<4x256xf32>
    %13 = math.tanh %11 : vector<4x256xf32>
    %14 = arith.mulf %12, %13 : vector<4x256xf32>
    %c0_12 = arith.constant 0 : index
    %c0_13 = arith.constant 0 : index
    %15 = vector.load %arg7[%c0_12, %c0_13] : memref<4x256xf32, #tpu.memory_space<vmem>>, vector<4x256xf32>
    tpu.vector_store %arg7[%c0_12, %c0_13], %14 {strides = array<i32>} : memref<4x256xf32, #tpu.memory_space<vmem>>, vector<4x256xf32>,
    return
  }
  func.func @transform_0(%arg0: i32) -> (i32, i32) {
    %c0_i32 = arith.constant 0 : i32
    %c0_i32_0 = arith.constant 0 : i32
    return %c0_i32, %arg0 : i32, i32
  }
  func.func @transform_1(%arg0: i32) -> (i32, i32) {
    %c0_i32 = arith.constant 0 : i32
    %c0_i32_0 = arith.constant 0 : i32
    return %c0_i32, %arg0 : i32, i32
  }
  func.func @transform_2(%arg0: i32) -> (i32, i32) {
    %c0_i32 = arith.constant 0 : i32
    %c0_i32_0 = arith.constant 0 : i32
    return %c0_i32, %arg0 : i32, i32
  }
  func.func @transform_3(%arg0: i32) -> (i32, i32) {
    %c0_i32 = arith.constant 0 : i32
    %c0_i32_0 = arith.constant 0 : i32
    %c0_i32_1 = arith.constant 0 : i32
    return %c0_i32, %c0_i32_0 : i32, i32
  }
  func.func @transform_4(%arg0: i32) -> (i32, i32) {
    %c0_i32 = arith.constant 0 : i32
    %c0_i32_0 = arith.constant 0 : i32
    %c0_i32_1 = arith.constant 0 : i32
    return %c0_i32, %c0_i32_0 : i32, i32
  }
  func.func @transform_5(%arg0: i32) -> (i32, i32) {
    %c0_i32 = arith.constant 0 : i32
    %c0_i32_0 = arith.constant 0 : i32
    %c0_i32_1 = arith.constant 0 : i32
    return %c0_i32, %c0_i32_0 : i32, i32
  }
  func.func @transform_6(%arg0: i32) -> (i32, i32) {
    %c0_i32 = arith.constant 0 : i32
    %c0_i32_0 = arith.constant 0 : i32
    return %c0_i32, %arg0 : i32, i32
  }
}

</mosaic_0001>

<llo_original>
// kernel: mimblock_forward.7
$region0: #{mimblock_forward.7}
  #allocation0 [shape = 'u32[]', space=smem, size = 0x4, offset = 0x4, fixed_abs, tag = 'smem constant byte address 0x4 - core index']
  #allocation1 [shape = 'u32[144,128]{1,0:T(1,128)}', space=vmem, size = 0x12000, scoped, tag = 'internal scratch']
  %s0 = inlined_call_operand.vmem [shape: bf16[512,36], index: 0, kind: input, shape index: {}]
  %s1 = inlined_call_operand.vmem [shape: bf16[36,12], index: 1, kind: input, shape index: {}]
  %s2 = inlined_call_operand.vmem [shape: f32[1,12], index: 2, kind: input, shape index: {}]
  %s3 = inlined_call_operand.vmem [shape: f32[512,12], index: 3, kind: output, shape index: {}]
  %s4 = sld [smem:[#allocation0]]
  $region45: #{mimblock_forward.7} parent=0
    _
  %s6 = ssub.s32 1, %s4
  %s7 = scalar_select 0, %s6, %s4
  loop: start=0, step=1, limit=4
  $region2: #{mimblock_forward.7} parent=0 // loop_pre_header
    _
  $region3: #{mimblock_forward.7} parent=0 // loop_header
    %s9 = sphi 0, %s13
    %p10 = scmp.ge.s32.totalorder %s9, 4
    %s19 = sphi 0, %s21
    %s22 = sphi 0, %s19
    %s23 = sphi 0, %s22
    %s39 = sphi 0, %s23
    %s43 = sphi 0, %s43
    %s45 = sphi 0, %s43
    %s46 = sphi 0, %s45
    %s60 = sphi 0, %s46
    %s64 = sphi 0, %s64
    %s66 = sphi 0, %s64
    %s67 = sphi 0, %s66
    %s81 = sphi 0, %s67
    %s87 = sphi 0, %s89
    %s90 = sphi 0, %s87
    %s91 = sphi 0, %s90
    %s107 = sphi 0, %s91
  $region4: #{mimblock_forward.7} parent=0 // loop_header_branch
    %12 = sbr.rel (%p10) target = $region8
  $region5: #{mimblock_forward.7} parent=0 // loop_body
    %s14 = ssub.s32 %s9, 1
    %s15 = ssub.s32 %s9, 2
    %s16 = sadd.s32 %s9, 1
    %s17 = ssub.s32 %s9, %s16
    %p18 = scmp.eq.s32.totalorder %s17, 0
    %s20 = sadd.s32 %s19, 1
    %s21 = scalar_select %p18, %s19, %s20
    %p24 = pneg %p18
    %p25 = scmp.eq.s32.totalorder %s9, 1
    %p26 = por %p24, %p25
    %p27 = scmp.ne.s32.totalorder %s19, %s22
    %p28 = scmp.eq.s32.totalorder %s9, 0
    %p29 = por %p27, %p28
    %p30 = scmp.ne.s32.totalorder %s19, %s22
    %p31 = scmp.eq.s32.totalorder %s14, 1
    %p32 = por %p30, %p31
    %p33 = scmp.ne.s32.totalorder %s22, %s23
    %p34 = scmp.eq.s32.totalorder %s14, 0
    %p35 = por %p33, %p34
    %p36 = scmp.ne.s32.totalorder %s22, %s23
    %p37 = scmp.eq.s32.totalorder %s15, 1
    %p38 = por %p36, %p37
    %p40 = scmp.ne.s32.totalorder %s23, %s39
    %p41 = scmp.eq.s32.totalorder %s15, 0
    %p42 = por %p40, %p41
    %s44 = sadd.s32 %s43, 1
    %p47 = scmp.eq.s32.totalorder %s9, 1
    %p48 = scmp.ne.s32.totalorder %s43, %s45
    %p49 = scmp.eq.s32.totalorder %s9, 0
    %p50 = por %p48, %p49
    %p51 = scmp.ne.s32.totalorder %s43, %s45
    %p52 = scmp.eq.s32.totalorder %s14, 1
    %p53 = por %p51, %p52
    %p54 = scmp.ne.s32.totalorder %s45, %s46
    %p55 = scmp.eq.s32.totalorder %s14, 0
    %p56 = por %p54, %p55
    %p57 = scmp.ne.s32.totalorder %s45, %s46
    %p58 = scmp.eq.s32.totalorder %s15, 1
    %p59 = por %p57, %p58
    %p61 = scmp.ne.s32.totalorder %s46, %s60
    %p62 = scmp.eq.s32.totalorder %s15, 0
    %p63 = por %p61, %p62
    %s65 = sadd.s32 %s64, 1
    %p68 = scmp.eq.s32.totalorder %s9, 1
    %p69 = scmp.ne.s32.totalorder %s64, %s66
    %p70 = scmp.eq.s32.totalorder %s9, 0
    %p71 = por %p69, %p70
    %p72 = scmp.ne.s32.totalorder %s64, %s66
    %p73 = scmp.eq.s32.totalorder %s14, 1
    %p74 = por %p72, %p73
    %p75 = scmp.ne.s32.totalorder %s66, %s67
    %p76 = scmp.eq.s32.totalorder %s14, 0
    %p77 = por %p75, %p76
    %p78 = scmp.ne.s32.totalorder %s66, %s67
    %p79 = scmp.eq.s32.totalorder %s15, 1
    %p80 = por %p78, %p79
    %p82 = scmp.ne.s32.totalorder %s67, %s81
    %p83 = scmp.eq.s32.totalorder %s15, 0
    %p84 = por %p82, %p83
    %s85 = ssub.s32 %s9, %s16
    %p86 = scmp.eq.s32.totalorder %s85, 0
    %s88 = sadd.s32 %s87, 1
    %s89 = scalar_select %p86, %s87, %s88
    %p92 = pneg %p86
    %p93 = scmp.eq.s32.totalorder %s9, 1
    %p94 = por %p92, %p93
    %p95 = scmp.ne.s32.totalorder %s87, %s90
    %p96 = scmp.eq.s32.totalorder %s9, 0
    %p97 = por %p95, %p96
    %p98 = scmp.ne.s32.totalorder %s87, %s90
    %p99 = scmp.eq.s32.totalorder %s14, 1
    %p100 = por %p98, %p99
    %p101 = scmp.ne.s32.totalorder %s90, %s91
    %p102 = scmp.eq.s32.totalorder %s14, 0
    %p103 = por %p101, %p102
    %p104 = scmp.ne.s32.totalorder %s90, %s91
    %p105 = scmp.eq.s32.totalorder %s15, 1
    %p106 = por %p104, %p105
    %p108 = scmp.ne.s32.totalorder %s91, %s107
    %p109 = scmp.eq.s32.totalorder %s15, 0
    %p110 = por %p108, %p109
    %p111 = scmp.le.s32.totalorder 1, %s9
    %p112 = scmp.lt.s32.totalorder %s9, 3
    %p113 = pnand %p111, %p112
    %p114 = pneg %p113
    // Predicated region
    $region9: #{mimblock_forward.7} parent=5 // pred_check
      _
    $region10: #{mimblock_forward.7} parent=5 // pred_check_branch
      %116 = sbr.rel (%p113) target = $region12
    $region11: #{mimblock_forward.7} parent=5 // pred_region
      %s117 = ssub.s32 %s9, 1
      // Predicated region
      $region13: #{mimblock_forward.7} parent=11 // pred_check
        %p118 = pneg %p56
      $region14: #{mimblock_forward.7} parent=11 // pred_check_branch
        %120 = sbr.rel (%p118) target = $region16
      $region15: #{mimblock_forward.7} parent=11 // pred_region
        _
      $region16: #{mimblock_forward.7} parent=11 // pred_fallthru
        _
      // Predicated region
      $region17: #{mimblock_forward.7} parent=11 // pred_check
        %p121 = pneg %p77
      $region18: #{mimblock_forward.7} parent=11 // pred_check_branch
        %123 = sbr.rel (%p121) target = $region20
      $region19: #{mimblock_forward.7} parent=11 // pred_region
        _
      $region20: #{mimblock_forward.7} parent=11 // pred_fallthru
        _
    $region12: #{mimblock_forward.7} parent=5 // pred_fallthru
      _
    %p124 = scmp.lt.s32.totalorder %s9, 2
    // Predicated region
    $region21: #{mimblock_forward.7} parent=5 // pred_check
      %p125 = pneg %p124
    $region22: #{mimblock_forward.7} parent=5 // pred_check_branch
      %127 = sbr.rel (%p125) target = $region24
    $region23: #{mimblock_forward.7} parent=5 // pred_region
      // Predicated region
      $region25: #{mimblock_forward.7} parent=23 // pred_check
        %p128 = pneg %p29
      $region26: #{mimblock_forward.7} parent=23 // pred_check_branch
        %130 = sbr.rel (%p128) target = $region28
      $region27: #{mimblock_forward.7} parent=23 // pred_region
        %s131 = smul.u32 32, %s9
        %p132 = scmp.lt.s32.totalorder %s131, 63
        %s133 = scalar_select %p132, %s131, 63
        %s134 = smul.addr %s133, 4
        %s135 = scalar_lea.vmem %s0, %s134
        %s136 = smul.u32 32, %s9
      $region28: #{mimblock_forward.7} parent=23 // pred_fallthru
        _
    $region24: #{mimblock_forward.7} parent=5 // pred_fallthru
      _
    %p137 = scmp.le.s32.totalorder 1, %s9
    %p138 = scmp.lt.s32.totalorder %s9, 3
    %p139 = pnand %p137, %p138
    %p140 = pneg %p139
    // Predicated region
    $region29: #{mimblock_forward.7} parent=5 // pred_check
      _
    $region30: #{mimblock_forward.7} parent=5 // pred_check_branch
      %142 = sbr.rel (%p139) target = $region32
    $region31: #{mimblock_forward.7} parent=5 // pred_region
      %s143 = ssub.s32 %s9, 1
      %s144 = smul.u32 32, %s14
      %p145 = scmp.lt.s32.totalorder %s144, 63
      %s146 = scalar_select %p145, %s144, 63
      %s147 = smul.addr %s146, 4
      %s148 = scalar_lea.vmem %s0, %s147
      %p149 = pneg %p35
      %p150 = pneg %p32
      %p151 = pneg %p56
      %p152 = pneg %p53
      %p153 = pneg %p77
      %p154 = pneg %p74
      %p155 = pneg %p103
      %p156 = pneg %p100
      %s157 = smul.u32 32, %s14
      %p158 = scmp.lt.s32.totalorder %s157, 63
      %s159 = scalar_select %p158, %s157, 63
      %s160 = smul.addr %s159, 8
      %s161 = scalar_lea.vmem %s3, %s160
      %s162 = smul.u32 32, %s14
      %p163 = scmp.lt.s32.totalorder %s162, 63
      %s164 = scalar_select %p163, %s162, 63
      %s165 = smul.addr %s164, 4
      %s166 = scalar_lea.vmem %s0, %s165
      %s167 = smul.u32 32, %s14
      %s168 = smul.u32 32, %s14
      %p169 = scmp.lt.s32.totalorder %s168, 63
      %s170 = scalar_select %p169, %s168, 63
      %s171 = smul.addr %s170, 8
      %s172 = scalar_lea.vmem %s3, %s171
      %s173 = smul.u32 32, %s14
      %v175 = vld [vmem:[%s166] sm:$0xf]
      %v176 = vld [vmem:[%s166 + $0x4] sm:$0xf]
      %v177 = vld [vmem:[%s166 + $0x8] sm:$0xf]
      %v178 = vld [vmem:[%s166 + $0xc] sm:$0xf]
      %v179 = vld [vmem:[%s166 + $0x10] sm:$0xf]
      %v180 = vld [vmem:[%s166 + $0x14] sm:$0xf]
      %v181 = vld [vmem:[%s166 + $0x18] sm:$0xf]
      %v182 = vld [vmem:[%s166 + $0x1c] sm:$0xf]
      %v183 = vld [vmem:[%s166 + $0x20] sm:$0xf]
      %v184 = vld [vmem:[%s166 + $0x24] sm:$0xf]
      %v185 = vld [vmem:[%s166 + $0x28] sm:$0xf]
      %v186 = vld [vmem:[%s166 + $0x2c] sm:$0xf]
      %v187 = vld [vmem:[%s166 + $0x30] sm:$0xf]
      %v188 = vld [vmem:[%s166 + $0x34] sm:$0xf]
      %v189 = vld [vmem:[%s166 + $0x38] sm:$0xf]
      %v190 = vld [vmem:[%s166 + $0x3c] sm:$0xf]
      %v191 = vld [vmem:[%s166 + $0x40] sm:$0xf]
      %v192 = vld [vmem:[%s166 + $0x44] sm:$0xf]
      %v193 = vld [vmem:[%s166 + $0x48] sm:$0xf]
      %v194 = vld [vmem:[%s166 + $0x4c] sm:$0xf]
      %v195 = vld [vmem:[%s166 + $0x50] sm:$0xf]
      %v196 = vld [vmem:[%s166 + $0x54] sm:$0xf]
      %v197 = vld [vmem:[%s166 + $0x58] sm:$0xf]
      %v198 = vld [vmem:[%s166 + $0x5c] sm:$0xf]
      %v199 = vld [vmem:[%s166 + $0x60] sm:$0xf]
      %v200 = vld [vmem:[%s166 + $0x64] sm:$0xf]
      %v201 = vld [vmem:[%s166 + $0x68] sm:$0xf]
      %v202 = vld [vmem:[%s166 + $0x6c] sm:$0xf]
      %v203 = vld [vmem:[%s166 + $0x70] sm:$0xf]
      %v204 = vld [vmem:[%s166 + $0x74] sm:$0xf]
      %v205 = vld [vmem:[%s166 + $0x78] sm:$0xf]
      %v206 = vld [vmem:[%s166 + $0x7c] sm:$0xf]
      %v207 = vld [vmem:[%s1] sm:$0xf]
      %v208 = vld [vmem:[%s1 + $0x4] sm:$0xf]
      %v209 = vld [vmem:[%s1 + $0x8] sm:$0xf]
      %v210 = vld [vmem:[%s1 + $0xc] sm:$0xf]
      %v211 = vld [vmem:[%s1 + $0x10] sm:$0x3]
      %v212 = vld [vmem:[%s2] sm:$0x1]
      %v214 = vlaneseq
      %v215 = vshrl.u32 %v214, 7
      %v216 = vsub.s32 0, %v215
      %v217 = vrot.slane %v212, %v216
      %v251 = vunpack.c.l.b16 %v175
      %v252 = vunpack.c.l.b16 %v176
      %v253 = vunpack.c.l.b16 %v177
      %v254 = vunpack.c.l.b16 %v178
      %v255 = vunpack.c.l.b16 %v179
      %v256 = vunpack.c.l.b16 %v180
      %v257 = vunpack.c.l.b16 %v181
      %v258 = vunpack.c.l.b16 %v182
      %v259 = vunpack.c.l.b16 %v183
      %v260 = vunpack.c.l.b16 %v184
      %v261 = vunpack.c.l.b16 %v185
      %v262 = vunpack.c.l.b16 %v186
      %v263 = vunpack.c.l.b16 %v187
      %v264 = vunpack.c.l.b16 %v188
      %v265 = vunpack.c.l.b16 %v189
      %v266 = vunpack.c.l.b16 %v190
      %v267 = vunpack.c.l.b16 %v191
      %v268 = vunpack.c.l.b16 %v192
      %v269 = vunpack.c.l.b16 %v193
      %v270 = vunpack.c.l.b16 %v194
      %v271 = vunpack.c.l.b16 %v195
      %v272 = vunpack.c.l.b16 %v196
      %v273 = vunpack.c.l.b16 %v197
      %v274 = vunpack.c.l.b16 %v198
      %v275 = vunpack.c.l.b16 %v199
      %v276 = vunpack.c.l.b16 %v200
      %v277 = vunpack.c.l.b16 %v201
      %v278 = vunpack.c.l.b16 %v202
      %v279 = vunpack.c.l.b16 %v203
      %v280 = vunpack.c.l.b16 %v204
      %v281 = vunpack.c.l.b16 %v205
      %v282 = vunpack.c.l.b16 %v206
      %v283 = vpack.c.b16 %v252, %v251
      %v284 = vpack.c.b16 %v254, %v253
      %v285 = vpack.c.b16 %v256, %v255
      %v286 = vpack.c.b16 %v258, %v257
      %v287 = vpack.c.b16 %v260, %v259
      %v288 = vpack.c.b16 %v262, %v261
      %v289 = vpack.c.b16 %v264, %v263
      %v290 = vpack.c.b16 %v266, %v265
      %v291 = vpack.c.b16 %v268, %v267
      %v292 = vpack.c.b16 %v270, %v269
      %v293 = vpack.c.b16 %v272, %v271
      %v294 = vpack.c.b16 %v274, %v273
      %v295 = vpack.c.b16 %v276, %v275
      %v296 = vpack.c.b16 %v278, %v277
      %v297 = vpack.c.b16 %v280, %v279
      %v298 = vpack.c.b16 %v282, %v281
      %v304 = vunpack.c.l.b16 %v207
      %v305 = vunpack.c.l.b16 %v208
      %v306 = vunpack.c.l.b16 %v209
      %v307 = vunpack.c.l.b16 %v210
      %v308 = vunpack.c.l.b16 %v211
      %v309 = vpack.c.b16 %v305, %v304
      %v310 = vpack.c.b16 %v307, %v306
      %v311 = vpack.c.b16 %v308, %v308
      %vm314 = vcmask 293888
      %v316 = vsel %vm314, %v283, 0
      %v319 = vsel %vm314, %v284, 0
      %v322 = vsel %vm314, %v285, 0
      %v325 = vsel %vm314, %v286, 0
      %v328 = vsel %vm314, %v287, 0
      %v331 = vsel %vm314, %v288, 0
      %v334 = vsel %vm314, %v289, 0
      %v337 = vsel %vm314, %v290, 0
      %v340 = vsel %vm314, %v291, 0
      %v343 = vsel %vm314, %v292, 0
      %v346 = vsel %vm314, %v293, 0
      %v349 = vsel %vm314, %v294, 0
      %v352 = vsel %vm314, %v295, 0
      %v355 = vsel %vm314, %v296, 0
      %v358 = vsel %vm314, %v297, 0
      %v361 = vsel %vm314, %v298, 0
      %vm363 = vcmask 1041408
      %v365 = vsel %vm363, %v311, 0
      %367 = vmatprep.subr.bf16.mxu0 0
      %368 = vmatpush1.bf16.msra.mxu0 %v309
      %369 = vmatprep.subr.bf16.mxu0 0
      %370 = vmatpush1.bf16.msra.mxu0 %v310
      %371 = vmatprep.subr.bf16.mxu0 0
      %372 = vmatpush1.bf16.msra.mxu0 %v365
      %373 = vmatprep.subr.bf16.mxu0 0
      %374 = vmatpush1.bf16.msra.mxu0 0
      %375 = vmatprep.subr.bf16.mxu0 0
      %376 = vmatpush1.bf16.msra.mxu0 0
      %377 = vmatprep.subr.bf16.mxu0 0
      %378 = vmatpush1.bf16.msra.mxu0 0
      %379 = vmatprep.subr.bf16.mxu0 0
      %380 = vmatpush1.bf16.msra.mxu0 0
      %381 = vmatprep.subr.bf16.mxu0 0
      %382 = vmatpush1.bf16.msra.mxu0 0
      %383 = vmatprep.subr.bf16.mxu0 0
      %384 = vmatpush1.bf16.msra.mxu0 0
      %385 = vmatprep.subr.bf16.mxu0 0
      %386 = vmatpush1.bf16.msra.mxu0 0
      %387 = vmatprep.subr.bf16.mxu0 0
      %388 = vmatpush1.bf16.msra.mxu0 0
      %389 = vmatprep.subr.bf16.mxu0 0
      %390 = vmatpush1.bf16.msra.mxu0 0
      %391 = vmatprep.subr.bf16.mxu0 0
      %392 = vmatpush1.bf16.msra.mxu0 0
      %393 = vmatprep.subr.bf16.mxu0 0
      %394 = vmatpush1.bf16.msra.mxu0 0
      %395 = vmatprep.subr.bf16.mxu0 0
      %396 = vmatpush1.bf16.msra.mxu0 0
      %397 = vmatprep.subr.bf16.mxu0 0
      %398 = vmatpush1.bf16.msra.mxu0 0
      %399 = vmatprep.mubr.bf16.mxu0 0
      %400 = vmatmul.mubr.bf16.gmra.mrb[0].mxu0 %v316
      %v401 = vpop.f32.mrb[0].mxu0
      %v402 = vadd.f32 %v217, %v401
      %v403 = vpop.f32.mrb[0].mxu0
      %v404 = vpop.f32.mrb[0].mxu0
      %v405 = vadd.f32 %v217, %v404
      %v406 = vpop.f32.mrb[0].mxu0
      %407 = vmatprep.mubr.bf16.mxu0 0
      %408 = vmatmul.mubr.bf16.gmra.mrb[0].mxu0 %v319
      %v409 = vpop.f32.mrb[0].mxu0
      %v410 = vadd.f32 %v217, %v409
      %v411 = vpop.f32.mrb[0].mxu0
      %v412 = vpop.f32.mrb[0].mxu0
      %v413 = vadd.f32 %v217, %v412
      %v414 = vpop.f32.mrb[0].mxu0
      %415 = vmatprep.mubr.bf16.mxu0 0
      %416 = vmatmul.mubr.bf16.gmra.mrb[0].mxu0 %v322
      %v417 = vpop.f32.mrb[0].mxu0
      %v418 = vadd.f32 %v217, %v417
      %v419 = vpop.f32.mrb[0].mxu0
      %v420 = vpop.f32.mrb[0].mxu0
      %v421 = vadd.f32 %v217, %v420
      %v422 = vpop.f32.mrb[0].mxu0
      %423 = vmatprep.mubr.bf16.mxu0 0
      %424 = vmatmul.mubr.bf16.gmra.mrb[0].mxu0 %v325
      %v425 = vpop.f32.mrb[0].mxu0
      %v426 = vadd.f32 %v217, %v425
      %v427 = vpop.f32.mrb[0].mxu0
      %v428 = vpop.f32.mrb[0].mxu0
      %v429 = vadd.f32 %v217, %v428
      %v430 = vpop.f32.mrb[0].mxu0
      %431 = vmatprep.mubr.bf16.mxu0 0
      %432 = vmatmul.mubr.bf16.gmra.mrb[0].mxu0 %v328
      %v433 = vpop.f32.mrb[0].mxu0
      %v434 = vadd.f32 %v217, %v433
      %v435 = vpop.f32.mrb[0].mxu0
      %v436 = vpop.f32.mrb[0].mxu0
      %v437 = vadd.f32 %v217, %v436
      %v438 = vpop.f32.mrb[0].mxu0
      %439 = vmatprep.mubr.bf16.mxu0 0
      %440 = vmatmul.mubr.bf16.gmra.mrb[0].mxu0 %v331
      %v441 = vpop.f32.mrb[0].mxu0
      %v442 = vadd.f32 %v217, %v441
      %v443 = vpop.f32.mrb[0].mxu0
      %v444 = vpop.f32.mrb[0].mxu0
      %v445 = vadd.f32 %v217, %v444
      %v446 = vpop.f32.mrb[0].mxu0
      %447 = vmatprep.mubr.bf16.mxu0 0
      %448 = vmatmul.mubr.bf16.gmra.mrb[0].mxu0 %v334
      %v449 = vpop.f32.mrb[0].mxu0
      %v450 = vadd.f32 %v217, %v449
      %v451 = vpop.f32.mrb[0].mxu0
      %v452 = vpop.f32.mrb[0].mxu0
      %v453 = vadd.f32 %v217, %v452
      %v454 = vpop.f32.mrb[0].mxu0
      %455 = vmatprep.mubr.bf16.mxu0 0
      %456 = vmatmul.mubr.bf16.gmra.mrb[0].mxu0 %v337
      %v457 = vpop.f32.mrb[0].mxu0
      %v458 = vadd.f32 %v217, %v457
      %v459 = vpop.f32.mrb[0].mxu0
      %v460 = vpop.f32.mrb[0].mxu0
      %v461 = vadd.f32 %v217, %v460
      %v462 = vpop.f32.mrb[0].mxu0
      %463 = vmatprep.mubr.bf16.mxu0 0
      %464 = vmatmul.mubr.bf16.gmra.mrb[0].mxu0 %v340
      %v465 = vpop.f32.mrb[0].mxu0
      %v466 = vadd.f32 %v217, %v465
      %v467 = vpop.f32.mrb[0].mxu0
      %v468 = vpop.f32.mrb[0].mxu0
      %v469 = vadd.f32 %v217, %v468
      %v470 = vpop.f32.mrb[0].mxu0
      %471 = vmatprep.mubr.bf16.mxu0 0
      %472 = vmatmul.mubr.bf16.gmra.mrb[0].mxu0 %v343
      %v473 = vpop.f32.mrb[0].mxu0
      %v474 = vadd.f32 %v217, %v473
      %v475 = vpop.f32.mrb[0].mxu0
      %v476 = vpop.f32.mrb[0].mxu0
      %v477 = vadd.f32 %v217, %v476
      %v478 = vpop.f32.mrb[0].mxu0
      %479 = vmatprep.mubr.bf16.mxu0 0
      %480 = vmatmul.mubr.bf16.gmra.mrb[0].mxu0 %v346
      %v481 = vpop.f32.mrb[0].mxu0
      %v482 = vadd.f32 %v217, %v481
      %v483 = vpop.f32.mrb[0].mxu0
      %v484 = vpop.f32.mrb[0].mxu0
      %v485 = vadd.f32 %v217, %v484
      %v486 = vpop.f32.mrb[0].mxu0
      %487 = vmatprep.mubr.bf16.mxu0 0
      %488 = vmatmul.mubr.bf16.gmra.mrb[0].mxu0 %v349
      %v489 = vpop.f32.mrb[0].mxu0
      %v490 = vadd.f32 %v217, %v489
      %v491 = vpop.f32.mrb[0].mxu0
      %v492 = vpop.f32.mrb[0].mxu0
      %v493 = vadd.f32 %v217, %v492
      %v494 = vpop.f32.mrb[0].mxu0
      %495 = vmatprep.mubr.bf16.mxu0 0
      %496 = vmatmul.mubr.bf16.gmra.mrb[0].mxu0 %v352
      %v497 = vpop.f32.mrb[0].mxu0
      %v498 = vadd.f32 %v217, %v497
      %v499 = vpop.f32.mrb[0].mxu0
      %v500 = vpop.f32.mrb[0].mxu0
      %v501 = vadd.f32 %v217, %v500
      %v502 = vpop.f32.mrb[0].mxu0
      %503 = vmatprep.mubr.bf16.mxu0 0
      %504 = vmatmul.mubr.bf16.gmra.mrb[0].mxu0 %v355
      %v505 = vpop.f32.mrb[0].mxu0
      %v506 = vadd.f32 %v217, %v505
      %v507 = vpop.f32.mrb[0].mxu0
      %v508 = vpop.f32.mrb[0].mxu0
      %v509 = vadd.f32 %v217, %v508
      %v510 = vpop.f32.mrb[0].mxu0
      %511 = vmatprep.mubr.bf16.mxu0 0
      %512 = vmatmul.mubr.bf16.gmra.mrb[0].mxu0 %v358
      %v513 = vpop.f32.mrb[0].mxu0
      %v514 = vadd.f32 %v217, %v513
      %v515 = vpop.f32.mrb[0].mxu0
      %v516 = vpop.f32.mrb[0].mxu0
      %v517 = vadd.f32 %v217, %v516
      %v518 = vpop.f32.mrb[0].mxu0
      %519 = vmatprep.mubr.bf16.mxu0 0
      %520 = vmatmul.mubr.bf16.gmra.mrb[0].mxu0 %v361
      %v521 = vpop.f32.mrb[0].mxu0
      %v522 = vadd.f32 %v217, %v521
      %v523 = vpop.f32.mrb[0].mxu0
      %v524 = vpop.f32.mrb[0].mxu0
      %v525 = vadd.f32 %v217, %v524
      %v526 = vpop.f32.mrb[0].mxu0
      %527 = vdwg.mxu0
      %vm528 = vcmask 97280
      %529 = vst.msk [vmem:[%s172] sm:$0xff] %vm528, %v402
      %530 = vst.msk [vmem:[%s172 + $0x8] sm:$0xff] %vm528, %v405
      %531 = vst.msk [vmem:[%s172 + $0x10] sm:$0xff] %vm528, %v410
      %532 = vst.msk [vmem:[%s172 + $0x18] sm:$0xff] %vm528, %v413
      %533 = vst.msk [vmem:[%s172 + $0x20] sm:$0xff] %vm528, %v418
      %534 = vst.msk [vmem:[%s172 + $0x28] sm:$0xff] %vm528, %v421
      %535 = vst.msk [vmem:[%s172 + $0x30] sm:$0xff] %vm528, %v426
      %536 = vst.msk [vmem:[%s172 + $0x38] sm:$0xff] %vm528, %v429
      %537 = vst.msk [vmem:[%s172 + $0x40] sm:$0xff] %vm528, %v434
      %538 = vst.msk [vmem:[%s172 + $0x48] sm:$0xff] %vm528, %v437
      %539 = vst.msk [vmem:[%s172 + $0x50] sm:$0xff] %vm528, %v442
      %540 = vst.msk [vmem:[%s172 + $0x58] sm:$0xff] %vm528, %v445
      %541 = vst.msk [vmem:[%s172 + $0x60] sm:$0xff] %vm528, %v450
      %542 = vst.msk [vmem:[%s172 + $0x68] sm:$0xff] %vm528, %v453
      %543 = vst.msk [vmem:[%s172 + $0x70] sm:$0xff] %vm528, %v458
      %544 = vst.msk [vmem:[%s172 + $0x78] sm:$0xff] %vm528, %v461
      %545 = vst.msk [vmem:[%s172 + $0x80] sm:$0xff] %vm528, %v466
      %546 = vst.msk [vmem:[%s172 + $0x88] sm:$0xff] %vm528, %v469
      %547 = vst.msk [vmem:[%s172 + $0x90] sm:$0xff] %vm528, %v474
      %548 = vst.msk [vmem:[%s172 + $0x98] sm:$0xff] %vm528, %v477
      %549 = vst.msk [vmem:[%s172 + $0xa0] sm:$0xff] %vm528, %v482
      %550 = vst.msk [vmem:[%s172 + $0xa8] sm:$0xff] %vm528, %v485
      %551 = vst.msk [vmem:[%s172 + $0xb0] sm:$0xff] %vm528, %v490
      %552 = vst.msk [vmem:[%s172 + $0xb8] sm:$0xff] %vm528, %v493
      %553 = vst.msk [vmem:[%s172 + $0xc0] sm:$0xff] %vm528, %v498
      %554 = vst.msk [vmem:[%s172 + $0xc8] sm:$0xff] %vm528, %v501
      %555 = vst.msk [vmem:[%s172 + $0xd0] sm:$0xff] %vm528, %v506
      %556 = vst.msk [vmem:[%s172 + $0xd8] sm:$0xff] %vm528, %v509
      %557 = vst.msk [vmem:[%s172 + $0xe0] sm:$0xff] %vm528, %v514
      %558 = vst.msk [vmem:[%s172 + $0xe8] sm:$0xff] %vm528, %v517
      %559 = vst.msk [vmem:[%s172 + $0xf0] sm:$0xff] %vm528, %v522
      %560 = vst.msk [vmem:[%s172 + $0xf8] sm:$0xff] %vm528, %v525
      %s561 = smul.u32 32, %s14
      %p562 = scmp.lt.s32.totalorder %s561, 63
      %s563 = scalar_select %p562, %s561, 63
      %s564 = smul.addr %s563, 8
      %s565 = scalar_lea.vmem %s3, %s564
      // Predicated region
      $region33: #{mimblock_forward.7} parent=31 // pred_check
        %p566 = pneg %p100
      $region34: #{mimblock_forward.7} parent=31 // pred_check_branch
        %568 = sbr.rel (%p566) target = $region36
      $region35: #{mimblock_forward.7} parent=31 // pred_region
        %s569 = smul.u32 32, %s14
      $region36: #{mimblock_forward.7} parent=31 // pred_fallthru
        _
    $region32: #{mimblock_forward.7} parent=5 // pred_fallthru
      _
    %p570 = scmp.le.s32.totalorder 2, %s9
    // Predicated region
    $region37: #{mimblock_forward.7} parent=5 // pred_check
      %p571 = pneg %p570
    $region38: #{mimblock_forward.7} parent=5 // pred_check_branch
      %573 = sbr.rel (%p571) target = $region40
    $region39: #{mimblock_forward.7} parent=5 // pred_region
      %s574 = ssub.s32 %s9, 2
      // Predicated region
      $region41: #{mimblock_forward.7} parent=39 // pred_check
        %p575 = pneg %p106
      $region42: #{mimblock_forward.7} parent=39 // pred_check_branch
        %577 = sbr.rel (%p575) target = $region44
      $region43: #{mimblock_forward.7} parent=39 // pred_region
        %s578 = smul.u32 32, %s15
        %p579 = scmp.lt.s32.totalorder %s578, 63
        %s580 = scalar_select %p579, %s578, 63
        %s581 = smul.addr %s580, 8
        %s582 = scalar_lea.vmem %s3, %s581
      $region44: #{mimblock_forward.7} parent=39 // pred_fallthru
        _
    $region40: #{mimblock_forward.7} parent=5 // pred_fallthru
      _
  $region6: #{mimblock_forward.7} parent=0 // loop_footer
    %s13 = sadd.s32 1, %s9
  $region7: #{mimblock_forward.7} parent=0 // loop_footer_branch
    %8 = sbr.rel target = $region3
  $region8: #{mimblock_forward.7} parent=0 // loop_exit
    _

// kernel: mimblock_forward.8
$region0: #{mimblock_forward.8}
  #allocation0 [shape = 'u32[]', space=smem, size = 0x4, offset = 0x4, fixed_abs, tag = 'smem constant byte address 0x4 - core index']
  #allocation1 [shape = 'u32[144,128]{1,0:T(1,128)}', space=vmem, size = 0x12000, scoped, tag = 'internal scratch']
  %s0 = inlined_call_operand.vmem [shape: bf16[512,36], index: 0, kind: input, shape index: {}]
  %s1 = inlined_call_operand.vmem [shape: bf16[36,16], index: 1, kind: input, shape index: {}]
  %s2 = inlined_call_operand.vmem [shape: f32[1,16], index: 2, kind: input, shape index: {}]
  %s3 = inlined_call_operand.vmem [shape: f32[512,16], index: 3, kind: output, shape index: {}]
  %s4 = sld [smem:[#allocation0]]
  $region45: #{mimblock_forward.8} parent=0
    _
  %s6 = ssub.s32 1, %s4
  %s7 = scalar_select 0, %s6, %s4
  loop: start=0, step=1, limit=4
  $region2: #{mimblock_forward.8} parent=0 // loop_pre_header
    _
  $region3: #{mimblock_forward.8} parent=0 // loop_header
    %s9 = sphi 0, %s13
    %p10 = scmp.ge.s32.totalorder %s9, 4
    %s19 = sphi 0, %s21
    %s22 = sphi 0, %s19
    %s23 = sphi 0, %s22
    %s39 = sphi 0, %s23
    %s43 = sphi 0, %s43
    %s45 = sphi 0, %s43
    %s46 = sphi 0, %s45
    %s60 = sphi 0, %s46
    %s64 = sphi 0, %s64
    %s66 = sphi 0, %s64
    %s67 = sphi 0, %s66
    %s81 = sphi 0, %s67
    %s87 = sphi 0, %s89
    %s90 = sphi 0, %s87
    %s91 = sphi 0, %s90
    %s107 = sphi 0, %s91
  $region4: #{mimblock_forward.8} parent=0 // loop_header_branch
    %12 = sbr.rel (%p10) target = $region8
  $region5: #{mimblock_forward.8} parent=0 // loop_body
    %s14 = ssub.s32 %s9, 1
    %s15 = ssub.s32 %s9, 2
    %s16 = sadd.s32 %s9, 1
    %s17 = ssub.s32 %s9, %s16
    %p18 = scmp.eq.s32.totalorder %s17, 0
    %s20 = sadd.s32 %s19, 1
    %s21 = scalar_select %p18, %s19, %s20
    %p24 = pneg %p18
    %p25 = scmp.eq.s32.totalorder %s9, 1
    %p26 = por %p24, %p25
    %p27 = scmp.ne.s32.totalorder %s19, %s22
    %p28 = scmp.eq.s32.totalorder %s9, 0
    %p29 = por %p27, %p28
    %p30 = scmp.ne.s32.totalorder %s19, %s22
    %p31 = scmp.eq.s32.totalorder %s14, 1
    %p32 = por %p30, %p31
    %p33 = scmp.ne.s32.totalorder %s22, %s23
    %p34 = scmp.eq.s32.totalorder %s14, 0
    %p35 = por %p33, %p34
    %p36 = scmp.ne.s32.totalorder %s22, %s23
    %p37 = scmp.eq.s32.totalorder %s15, 1
    %p38 = por %p36, %p37
    %p40 = scmp.ne.s32.totalorder %s23, %s39
    %p41 = scmp.eq.s32.totalorder %s15, 0
    %p42 = por %p40, %p41
    %s44 = sadd.s32 %s43, 1
    %p47 = scmp.eq.s32.totalorder %s9, 1
    %p48 = scmp.ne.s32.totalorder %s43, %s45
    %p49 = scmp.eq.s32.totalorder %s9, 0
    %p50 = por %p48, %p49
    %p51 = scmp.ne.s32.totalorder %s43, %s45
    %p52 = scmp.eq.s32.totalorder %s14, 1
    %p53 = por %p51, %p52
    %p54 = scmp.ne.s32.totalorder %s45, %s46
    %p55 = scmp.eq.s32.totalorder %s14, 0
    %p56 = por %p54, %p55
    %p57 = scmp.ne.s32.totalorder %s45, %s46
    %p58 = scmp.eq.s32.totalorder %s15, 1
    %p59 = por %p57, %p58
    %p61 = scmp.ne.s32.totalorder %s46, %s60
    %p62 = scmp.eq.s32.totalorder %s15, 0
    %p63 = por %p61, %p62
    %s65 = sadd.s32 %s64, 1
    %p68 = scmp.eq.s32.totalorder %s9, 1
    %p69 = scmp.ne.s32.totalorder %s64, %s66
    %p70 = scmp.eq.s32.totalorder %s9, 0
    %p71 = por %p69, %p70
    %p72 = scmp.ne.s32.totalorder %s64, %s66
    %p73 = scmp.eq.s32.totalorder %s14, 1
    %p74 = por %p72, %p73
    %p75 = scmp.ne.s32.totalorder %s66, %s67
    %p76 = scmp.eq.s32.totalorder %s14, 0
    %p77 = por %p75, %p76
    %p78 = scmp.ne.s32.totalorder %s66, %s67
    %p79 = scmp.eq.s32.totalorder %s15, 1
    %p80 = por %p78, %p79
    %p82 = scmp.ne.s32.totalorder %s67, %s81
    %p83 = scmp.eq.s32.totalorder %s15, 0
    %p84 = por %p82, %p83
    %s85 = ssub.s32 %s9, %s16
    %p86 = scmp.eq.s32.totalorder %s85, 0
    %s88 = sadd.s32 %s87, 1
    %s89 = scalar_select %p86, %s87, %s88
    %p92 = pneg %p86
    %p93 = scmp.eq.s32.totalorder %s9, 1
    %p94 = por %p92, %p93
    %p95 = scmp.ne.s32.totalorder %s87, %s90
    %p96 = scmp.eq.s32.totalorder %s9, 0
    %p97 = por %p95, %p96
    %p98 = scmp.ne.s32.totalorder %s87, %s90
    %p99 = scmp.eq.s32.totalorder %s14, 1
    %p100 = por %p98, %p99
    %p101 = scmp.ne.s32.totalorder %s90, %s91
    %p102 = scmp.eq.s32.totalorder %s14, 0
    %p103 = por %p101, %p102
    %p104 = scmp.ne.s32.totalorder %s90, %s91
    %p105 = scmp.eq.s32.totalorder %s15, 1
    %p106 = por %p104, %p105
    %p108 = scmp.ne.s32.totalorder %s91, %s107
    %p109 = scmp.eq.s32.totalorder %s15, 0
    %p110 = por %p108, %p109
    %p111 = scmp.le.s32.totalorder 1, %s9
    %p112 = scmp.lt.s32.totalorder %s9, 3
    %p113 = pnand %p111, %p112
    %p114 = pneg %p113
    // Predicated region
    $region9: #{mimblock_forward.8} parent=5 // pred_check
      _
    $region10: #{mimblock_forward.8} parent=5 // pred_check_branch
      %116 = sbr.rel (%p113) target = $region12
    $region11: #{mimblock_forward.8} parent=5 // pred_region
      %s117 = ssub.s32 %s9, 1
      // Predicated region
      $region13: #{mimblock_forward.8} parent=11 // pred_check
        %p118 = pneg %p56
      $region14: #{mimblock_forward.8} parent=11 // pred_check_branch
        %120 = sbr.rel (%p118) target = $region16
      $region15: #{mimblock_forward.8} parent=11 // pred_region
        _
      $region16: #{mimblock_forward.8} parent=11 // pred_fallthru
        _
      // Predicated region
      $region17: #{mimblock_forward.8} parent=11 // pred_check
        %p121 = pneg %p77
      $region18: #{mimblock_forward.8} parent=11 // pred_check_branch
        %123 = sbr.rel (%p121) target = $region20
      $region19: #{mimblock_forward.8} parent=11 // pred_region
        _
      $region20: #{mimblock_forward.8} parent=11 // pred_fallthru
        _
    $region12: #{mimblock_forward.8} parent=5 // pred_fallthru
      _
    %p124 = scmp.lt.s32.totalorder %s9, 2
    // Predicated region
    $region21: #{mimblock_forward.8} parent=5 // pred_check
      %p125 = pneg %p124
    $region22: #{mimblock_forward.8} parent=5 // pred_check_branch
      %127 = sbr.rel (%p125) target = $region24
    $region23: #{mimblock_forward.8} parent=5 // pred_region
      // Predicated region
      $region25: #{mimblock_forward.8} parent=23 // pred_check
        %p128 = pneg %p29
      $region26: #{mimblock_forward.8} parent=23 // pred_check_branch
        %130 = sbr.rel (%p128) target = $region28
      $region27: #{mimblock_forward.8} parent=23 // pred_region
        %s131 = smul.u32 32, %s9
        %p132 = scmp.lt.s32.totalorder %s131, 63
        %s133 = scalar_select %p132, %s131, 63
        %s134 = smul.addr %s133, 4
        %s135 = scalar_lea.vmem %s0, %s134
        %s136 = smul.u32 32, %s9
      $region28: #{mimblock_forward.8} parent=23 // pred_fallthru
        _
    $region24: #{mimblock_forward.8} parent=5 // pred_fallthru
      _
    %p137 = scmp.le.s32.totalorder 1, %s9
    %p138 = scmp.lt.s32.totalorder %s9, 3
    %p139 = pnand %p137, %p138
    %p140 = pneg %p139
    // Predicated region
    $region29: #{mimblock_forward.8} parent=5 // pred_check
      _
    $region30: #{mimblock_forward.8} parent=5 // pred_check_branch
      %142 = sbr.rel (%p139) target = $region32
    $region31: #{mimblock_forward.8} parent=5 // pred_region
      %s143 = ssub.s32 %s9, 1
      %s144 = smul.u32 32, %s14
      %p145 = scmp.lt.s32.totalorder %s144, 63
      %s146 = scalar_select %p145, %s144, 63
      %s147 = smul.addr %s146, 4
      %s148 = scalar_lea.vmem %s0, %s147
      %p149 = pneg %p35
      %p150 = pneg %p32
      %p151 = pneg %p56
      %p152 = pneg %p53
      %p153 = pneg %p77
      %p154 = pneg %p74
      %p155 = pneg %p103
      %p156 = pneg %p100
      %s157 = smul.u32 32, %s14
      %p158 = scmp.lt.s32.totalorder %s157, 63
      %s159 = scalar_select %p158, %s157, 63
      %s160 = smul.addr %s159, 8
      %s161 = scalar_lea.vmem %s3, %s160
      %s162 = smul.u32 32, %s14
      %p163 = scmp.lt.s32.totalorder %s162, 63
      %s164 = scalar_select %p163, %s162, 63
      %s165 = smul.addr %s164, 4
      %s166 = scalar_lea.vmem %s0, %s165
      %s167 = smul.u32 32, %s14
      %s168 = smul.u32 32, %s14
      %p169 = scmp.lt.s32.totalorder %s168, 63
      %s170 = scalar_select %p169, %s168, 63
      %s171 = smul.addr %s170, 8
      %s172 = scalar_lea.vmem %s3, %s171
      %s173 = smul.u32 32, %s14
      %v175 = vld [vmem:[%s166] sm:$0xf]
      %v176 = vld [vmem:[%s166 + $0x4] sm:$0xf]
      %v177 = vld [vmem:[%s166 + $0x8] sm:$0xf]
      %v178 = vld [vmem:[%s166 + $0xc] sm:$0xf]
      %v179 = vld [vmem:[%s166 + $0x10] sm:$0xf]
      %v180 = vld [vmem:[%s166 + $0x14] sm:$0xf]
      %v181 = vld [vmem:[%s166 + $0x18] sm:$0xf]
      %v182 = vld [vmem:[%s166 + $0x1c] sm:$0xf]
      %v183 = vld [vmem:[%s166 + $0x20] sm:$0xf]
      %v184 = vld [vmem:[%s166 + $0x24] sm:$0xf]
      %v185 = vld [vmem:[%s166 + $0x28] sm:$0xf]
      %v186 = vld [vmem:[%s166 + $0x2c] sm:$0xf]
      %v187 = vld [vmem:[%s166 + $0x30] sm:$0xf]
      %v188 = vld [vmem:[%s166 + $0x34] sm:$0xf]
      %v189 = vld [vmem:[%s166 + $0x38] sm:$0xf]
      %v190 = vld [vmem:[%s166 + $0x3c] sm:$0xf]
      %v191 = vld [vmem:[%s166 + $0x40] sm:$0xf]
      %v192 = vld [vmem:[%s166 + $0x44] sm:$0xf]
      %v193 = vld [vmem:[%s166 + $0x48] sm:$0xf]
      %v194 = vld [vmem:[%s166 + $0x4c] sm:$0xf]
      %v195 = vld [vmem:[%s166 + $0x50] sm:$0xf]
      %v196 = vld [vmem:[%s166 + $0x54] sm:$0xf]
      %v197 = vld [vmem:[%s166 + $0x58] sm:$0xf]
      %v198 = vld [vmem:[%s166 + $0x5c] sm:$0xf]
      %v199 = vld [vmem:[%s166 + $0x60] sm:$0xf]
      %v200 = vld [vmem:[%s166 + $0x64] sm:$0xf]
      %v201 = vld [vmem:[%s166 + $0x68] sm:$0xf]
      %v202 = vld [vmem:[%s166 + $0x6c] sm:$0xf]
      %v203 = vld [vmem:[%s166 + $0x70] sm:$0xf]
      %v204 = vld [vmem:[%s166 + $0x74] sm:$0xf]
      %v205 = vld [vmem:[%s166 + $0x78] sm:$0xf]
      %v206 = vld [vmem:[%s166 + $0x7c] sm:$0xf]
      %v207 = vld [vmem:[%s1] sm:$0xf]
      %v208 = vld [vmem:[%s1 + $0x4] sm:$0xf]
      %v209 = vld [vmem:[%s1 + $0x8] sm:$0xf]
      %v210 = vld [vmem:[%s1 + $0xc] sm:$0xf]
      %v211 = vld [vmem:[%s1 + $0x10] sm:$0x3]
      %v212 = vld [vmem:[%s2] sm:$0x1]
      %v214 = vlaneseq
      %v215 = vshrl.u32 %v214, 7
      %v216 = vsub.s32 0, %v215
      %v217 = vrot.slane %v212, %v216
      %v251 = vunpack.c.l.b16 %v175
      %v252 = vunpack.c.l.b16 %v176
      %v253 = vunpack.c.l.b16 %v177
      %v254 = vunpack.c.l.b16 %v178
      %v255 = vunpack.c.l.b16 %v179
      %v256 = vunpack.c.l.b16 %v180
      %v257 = vunpack.c.l.b16 %v181
      %v258 = vunpack.c.l.b16 %v182
      %v259 = vunpack.c.l.b16 %v183
      %v260 = vunpack.c.l.b16 %v184
      %v261 = vunpack.c.l.b16 %v185
      %v262 = vunpack.c.l.b16 %v186
      %v263 = vunpack.c.l.b16 %v187
      %v264 = vunpack.c.l.b16 %v188
      %v265 = vunpack.c.l.b16 %v189
      %v266 = vunpack.c.l.b16 %v190
      %v267 = vunpack.c.l.b16 %v191
      %v268 = vunpack.c.l.b16 %v192
      %v269 = vunpack.c.l.b16 %v193
      %v270 = vunpack.c.l.b16 %v194
      %v271 = vunpack.c.l.b16 %v195
      %v272 = vunpack.c.l.b16 %v196
      %v273 = vunpack.c.l.b16 %v197
      %v274 = vunpack.c.l.b16 %v198
      %v275 = vunpack.c.l.b16 %v199
      %v276 = vunpack.c.l.b16 %v200
      %v277 = vunpack.c.l.b16 %v201
      %v278 = vunpack.c.l.b16 %v202
      %v279 = vunpack.c.l.b16 %v203
      %v280 = vunpack.c.l.b16 %v204
      %v281 = vunpack.c.l.b16 %v205
      %v282 = vunpack.c.l.b16 %v206
      %v283 = vpack.c.b16 %v252, %v251
      %v284 = vpack.c.b16 %v254, %v253
      %v285 = vpack.c.b16 %v256, %v255
      %v286 = vpack.c.b16 %v258, %v257
      %v287 = vpack.c.b16 %v260, %v259
      %v288 = vpack.c.b16 %v262, %v261
      %v289 = vpack.c.b16 %v264, %v263
      %v290 = vpack.c.b16 %v266, %v265
      %v291 = vpack.c.b16 %v268, %v267
      %v292 = vpack.c.b16 %v270, %v269
      %v293 = vpack.c.b16 %v272, %v271
      %v294 = vpack.c.b16 %v274, %v273
      %v295 = vpack.c.b16 %v276, %v275
      %v296 = vpack.c.b16 %v278, %v277
      %v297 = vpack.c.b16 %v280, %v279
      %v298 = vpack.c.b16 %v282, %v281
      %v304 = vunpack.c.l.b16 %v207
      %v305 = vunpack.c.l.b16 %v208
      %v306 = vunpack.c.l.b16 %v209
      %v307 = vunpack.c.l.b16 %v210
      %v308 = vunpack.c.l.b16 %v211
      %v309 = vpack.c.b16 %v305, %v304
      %v310 = vpack.c.b16 %v307, %v306
      %v311 = vpack.c.b16 %v308, %v308
      %vm314 = vcmask 293888
      %v316 = vsel %vm314, %v283, 0
      %v319 = vsel %vm314, %v284, 0
      %v322 = vsel %vm314, %v285, 0
      %v325 = vsel %vm314, %v286, 0
      %v328 = vsel %vm314, %v287, 0
      %v331 = vsel %vm314, %v288, 0
      %v334 = vsel %vm314, %v289, 0
      %v337 = vsel %vm314, %v290, 0
      %v340 = vsel %vm314, %v291, 0
      %v343 = vsel %vm314, %v292, 0
      %v346 = vsel %vm314, %v293, 0
      %v349 = vsel %vm314, %v294, 0
      %v352 = vsel %vm314, %v295, 0
      %v355 = vsel %vm314, %v296, 0
      %v358 = vsel %vm314, %v297, 0
      %v361 = vsel %vm314, %v298, 0
      %vm363 = vcmask 1041408
      %v365 = vsel %vm363, %v311, 0
      %367 = vmatprep.subr.bf16.mxu0 0
      %368 = vmatpush1.bf16.msra.mxu0 %v309
      %369 = vmatprep.subr.bf16.mxu0 0
      %370 = vmatpush1.bf16.msra.mxu0 %v310
      %371 = vmatprep.subr.bf16.mxu0 0
      %372 = vmatpush1.bf16.msra.mxu0 %v365
      %373 = vmatprep.subr.bf16.mxu0 0
      %374 = vmatpush1.bf16.msra.mxu0 0
      %375 = vmatprep.subr.bf16.mxu0 0
      %376 = vmatpush1.bf16.msra.mxu0 0
      %377 = vmatprep.subr.bf16.mxu0 0
      %378 = vmatpush1.bf16.msra.mxu0 0
      %379 = vmatprep.subr.bf16.mxu0 0
      %380 = vmatpush1.bf16.msra.mxu0 0
      %381 = vmatprep.subr.bf16.mxu0 0
      %382 = vmatpush1.bf16.msra.mxu0 0
      %383 = vmatprep.subr.bf16.mxu0 0
      %384 = vmatpush1.bf16.msra.mxu0 0
      %385 = vmatprep.subr.bf16.mxu0 0
      %386 = vmatpush1.bf16.msra.mxu0 0
      %387 = vmatprep.subr.bf16.mxu0 0
      %388 = vmatpush1.bf16.msra.mxu0 0
      %389 = vmatprep.subr.bf16.mxu0 0
      %390 = vmatpush1.bf16.msra.mxu0 0
      %391 = vmatprep.subr.bf16.mxu0 0
      %392 = vmatpush1.bf16.msra.mxu0 0
      %393 = vmatprep.subr.bf16.mxu0 0
      %394 = vmatpush1.bf16.msra.mxu0 0
      %395 = vmatprep.subr.bf16.mxu0 0
      %396 = vmatpush1.bf16.msra.mxu0 0
      %397 = vmatprep.subr.bf16.mxu0 0
      %398 = vmatpush1.bf16.msra.mxu0 0
      %399 = vmatprep.mubr.bf16.mxu0 0
      %400 = vmatmul.mubr.bf16.gmra.mrb[0].mxu0 %v316
      %v401 = vpop.f32.mrb[0].mxu0
      %v402 = vadd.f32 %v217, %v401
      %v403 = vpop.f32.mrb[0].mxu0
      %v404 = vpop.f32.mrb[0].mxu0
      %v405 = vadd.f32 %v217, %v404
      %v406 = vpop.f32.mrb[0].mxu0
      %407 = vmatprep.mubr.bf16.mxu0 0
      %408 = vmatmul.mubr.bf16.gmra.mrb[0].mxu0 %v319
      %v409 = vpop.f32.mrb[0].mxu0
      %v410 = vadd.f32 %v217, %v409
      %v411 = vpop.f32.mrb[0].mxu0
      %v412 = vpop.f32.mrb[0].mxu0
      %v413 = vadd.f32 %v217, %v412
      %v414 = vpop.f32.mrb[0].mxu0
      %415 = vmatprep.mubr.bf16.mxu0 0
      %416 = vmatmul.mubr.bf16.gmra.mrb[0].mxu0 %v322
      %v417 = vpop.f32.mrb[0].mxu0
      %v418 = vadd.f32 %v217, %v417
      %v419 = vpop.f32.mrb[0].mxu0
      %v420 = vpop.f32.mrb[0].mxu0
      %v421 = vadd.f32 %v217, %v420
      %v422 = vpop.f32.mrb[0].mxu0
      %423 = vmatprep.mubr.bf16.mxu0 0
      %424 = vmatmul.mubr.bf16.gmra.mrb[0].mxu0 %v325
      %v425 = vpop.f32.mrb[0].mxu0
      %v426 = vadd.f32 %v217, %v425
      %v427 = vpop.f32.mrb[0].mxu0
      %v428 = vpop.f32.mrb[0].mxu0
      %v429 = vadd.f32 %v217, %v428
      %v430 = vpop.f32.mrb[0].mxu0
      %431 = vmatprep.mubr.bf16.mxu0 0
      %432 = vmatmul.mubr.bf16.gmra.mrb[0].mxu0 %v328
      %v433 = vpop.f32.mrb[0].mxu0
      %v434 = vadd.f32 %v217, %v433
      %v435 = vpop.f32.mrb[0].mxu0
      %v436 = vpop.f32.mrb[0].mxu0
      %v437 = vadd.f32 %v217, %v436
      %v438 = vpop.f32.mrb[0].mxu0
      %439 = vmatprep.mubr.bf16.mxu0 0
      %440 = vmatmul.mubr.bf16.gmra.mrb[0].mxu0 %v331
      %v441 = vpop.f32.mrb[0].mxu0
      %v442 = vadd.f32 %v217, %v441
      %v443 = vpop.f32.mrb[0].mxu0
      %v444 = vpop.f32.mrb[0].mxu0
      %v445 = vadd.f32 %v217, %v444
      %v446 = vpop.f32.mrb[0].mxu0
      %447 = vmatprep.mubr.bf16.mxu0 0
      %448 = vmatmul.mubr.bf16.gmra.mrb[0].mxu0 %v334
      %v449 = vpop.f32.mrb[0].mxu0
      %v450 = vadd.f32 %v217, %v449
      %v451 = vpop.f32.mrb[0].mxu0
      %v452 = vpop.f32.mrb[0].mxu0
      %v453 = vadd.f32 %v217, %v452
      %v454 = vpop.f32.mrb[0].mxu0
      %455 = vmatprep.mubr.bf16.mxu0 0
      %456 = vmatmul.mubr.bf16.gmra.mrb[0].mxu0 %v337
      %v457 = vpop.f32.mrb[0].mxu0
      %v458 = vadd.f32 %v217, %v457
      %v459 = vpop.f32.mrb[0].mxu0
      %v460 = vpop.f32.mrb[0].mxu0
      %v461 = vadd.f32 %v217, %v460
      %v462 = vpop.f32.mrb[0].mxu0
      %463 = vmatprep.mubr.bf16.mxu0 0
      %464 = vmatmul.mubr.bf16.gmra.mrb[0].mxu0 %v340
      %v465 = vpop.f32.mrb[0].mxu0
      %v466 = vadd.f32 %v217, %v465
      %v467 = vpop.f32.mrb[0].mxu0
      %v468 = vpop.f32.mrb[0].mxu0
      %v469 = vadd.f32 %v217, %v468
      %v470 = vpop.f32.mrb[0].mxu0
      %471 = vmatprep.mubr.bf16.mxu0 0
      %472 = vmatmul.mubr.bf16.gmra.mrb[0].mxu0 %v343
      %v473 = vpop.f32.mrb[0].mxu0
      %v474 = vadd.f32 %v217, %v473
      %v475 = vpop.f32.mrb[0].mxu0
      %v476 = vpop.f32.mrb[0].mxu0
      %v477 = vadd.f32 %v217, %v476
      %v478 = vpop.f32.mrb[0].mxu0
      %479 = vmatprep.mubr.bf16.mxu0 0
      %480 = vmatmul.mubr.bf16.gmra.mrb[0].mxu0 %v346
      %v481 = vpop.f32.mrb[0].mxu0
      %v482 = vadd.f32 %v217, %v481
      %v483 = vpop.f32.mrb[0].mxu0
      %v484 = vpop.f32.mrb[0].mxu0
      %v485 = vadd.f32 %v217, %v484
      %v486 = vpop.f32.mrb[0].mxu0
      %487 = vmatprep.mubr.bf16.mxu0 0
      %488 = vmatmul.mubr.bf16.gmra.mrb[0].mxu0 %v349
      %v489 = vpop.f32.mrb[0].mxu0
      %v490 = vadd.f32 %v217, %v489
      %v491 = vpop.f32.mrb[0].mxu0
      %v492 = vpop.f32.mrb[0].mxu0
      %v493 = vadd.f32 %v217, %v492
      %v494 = vpop.f32.mrb[0].mxu0
      %495 = vmatprep.mubr.bf16.mxu0 0
      %496 = vmatmul.mubr.bf16.gmra.mrb[0].mxu0 %v352
      %v497 = vpop.f32.mrb[0].mxu0
      %v498 = vadd.f32 %v217, %v497
      %v499 = vpop.f32.mrb[0].mxu0
      %v500 = vpop.f32.mrb[0].mxu0
      %v501 = vadd.f32 %v217, %v500
      %v502 = vpop.f32.mrb[0].mxu0
      %503 = vmatprep.mubr.bf16.mxu0 0
      %504 = vmatmul.mubr.bf16.gmra.mrb[0].mxu0 %v355
      %v505 = vpop.f32.mrb[0].mxu0
      %v506 = vadd.f32 %v217, %v505
      %v507 = vpop.f32.mrb[0].mxu0
      %v508 = vpop.f32.mrb[0].mxu0
      %v509 = vadd.f32 %v217, %v508
      %v510 = vpop.f32.mrb[0].mxu0
      %511 = vmatprep.mubr.bf16.mxu0 0
      %512 = vmatmul.mubr.bf16.gmra.mrb[0].mxu0 %v358
      %v513 = vpop.f32.mrb[0].mxu0
      %v514 = vadd.f32 %v217, %v513
      %v515 = vpop.f32.mrb[0].mxu0
      %v516 = vpop.f32.mrb[0].mxu0
      %v517 = vadd.f32 %v217, %v516
      %v518 = vpop.f32.mrb[0].mxu0
      %519 = vmatprep.mubr.bf16.mxu0 0
      %520 = vmatmul.mubr.bf16.gmra.mrb[0].mxu0 %v361
      %v521 = vpop.f32.mrb[0].mxu0
      %v522 = vadd.f32 %v217, %v521
      %v523 = vpop.f32.mrb[0].mxu0
      %v524 = vpop.f32.mrb[0].mxu0
      %v525 = vadd.f32 %v217, %v524
      %v526 = vpop.f32.mrb[0].mxu0
      %527 = vdwg.mxu0
      %vm528 = vcmask 130048
      %529 = vst.msk [vmem:[%s172] sm:$0xff] %vm528, %v402
      %530 = vst.msk [vmem:[%s172 + $0x8] sm:$0xff] %vm528, %v405
      %531 = vst.msk [vmem:[%s172 + $0x10] sm:$0xff] %vm528, %v410
      %532 = vst.msk [vmem:[%s172 + $0x18] sm:$0xff] %vm528, %v413
      %533 = vst.msk [vmem:[%s172 + $0x20] sm:$0xff] %vm528, %v418
      %534 = vst.msk [vmem:[%s172 + $0x28] sm:$0xff] %vm528, %v421
      %535 = vst.msk [vmem:[%s172 + $0x30] sm:$0xff] %vm528, %v426
      %536 = vst.msk [vmem:[%s172 + $0x38] sm:$0xff] %vm528, %v429
      %537 = vst.msk [vmem:[%s172 + $0x40] sm:$0xff] %vm528, %v434
      %538 = vst.msk [vmem:[%s172 + $0x48] sm:$0xff] %vm528, %v437
      %539 = vst.msk [vmem:[%s172 + $0x50] sm:$0xff] %vm528, %v442
      %540 = vst.msk [vmem:[%s172 + $0x58] sm:$0xff] %vm528, %v445
      %541 = vst.msk [vmem:[%s172 + $0x60] sm:$0xff] %vm528, %v450
      %542 = vst.msk [vmem:[%s172 + $0x68] sm:$0xff] %vm528, %v453
      %543 = vst.msk [vmem:[%s172 + $0x70] sm:$0xff] %vm528, %v458
      %544 = vst.msk [vmem:[%s172 + $0x78] sm:$0xff] %vm528, %v461
      %545 = vst.msk [vmem:[%s172 + $0x80] sm:$0xff] %vm528, %v466
      %546 = vst.msk [vmem:[%s172 + $0x88] sm:$0xff] %vm528, %v469
      %547 = vst.msk [vmem:[%s172 + $0x90] sm:$0xff] %vm528, %v474
      %548 = vst.msk [vmem:[%s172 + $0x98] sm:$0xff] %vm528, %v477
      %549 = vst.msk [vmem:[%s172 + $0xa0] sm:$0xff] %vm528, %v482
      %550 = vst.msk [vmem:[%s172 + $0xa8] sm:$0xff] %vm528, %v485
      %551 = vst.msk [vmem:[%s172 + $0xb0] sm:$0xff] %vm528, %v490
      %552 = vst.msk [vmem:[%s172 + $0xb8] sm:$0xff] %vm528, %v493
      %553 = vst.msk [vmem:[%s172 + $0xc0] sm:$0xff] %vm528, %v498
      %554 = vst.msk [vmem:[%s172 + $0xc8] sm:$0xff] %vm528, %v501
      %555 = vst.msk [vmem:[%s172 + $0xd0] sm:$0xff] %vm528, %v506
      %556 = vst.msk [vmem:[%s172 + $0xd8] sm:$0xff] %vm528, %v509
      %557 = vst.msk [vmem:[%s172 + $0xe0] sm:$0xff] %vm528, %v514
      %558 = vst.msk [vmem:[%s172 + $0xe8] sm:$0xff] %vm528, %v517
      %559 = vst.msk [vmem:[%s172 + $0xf0] sm:$0xff] %vm528, %v522
      %560 = vst.msk [vmem:[%s172 + $0xf8] sm:$0xff] %vm528, %v525
      %s561 = smul.u32 32, %s14
      %p562 = scmp.lt.s32.totalorder %s561, 63
      %s563 = scalar_select %p562, %s561, 63
      %s564 = smul.addr %s563, 8
      %s565 = scalar_lea.vmem %s3, %s564
      // Predicated region
      $region33: #{mimblock_forward.8} parent=31 // pred_check
        %p566 = pneg %p100
      $region34: #{mimblock_forward.8} parent=31 // pred_check_branch
        %568 = sbr.rel (%p566) target = $region36
      $region35: #{mimblock_forward.8} parent=31 // pred_region
        %s569 = smul.u32 32, %s14
      $region36: #{mimblock_forward.8} parent=31 // pred_fallthru
        _
    $region32: #{mimblock_forward.8} parent=5 // pred_fallthru
      _
    %p570 = scmp.le.s32.totalorder 2, %s9
    // Predicated region
    $region37: #{mimblock_forward.8} parent=5 // pred_check
      %p571 = pneg %p570
    $region38: #{mimblock_forward.8} parent=5 // pred_check_branch
      %573 = sbr.rel (%p571) target = $region40
    $region39: #{mimblock_forward.8} parent=5 // pred_region
      %s574 = ssub.s32 %s9, 2
      // Predicated region
      $region41: #{mimblock_forward.8} parent=39 // pred_check
        %p575 = pneg %p106
      $region42: #{mimblock_forward.8} parent=39 // pred_check_branch
        %577 = sbr.rel (%p575) target = $region44
      $region43: #{mimblock_forward.8} parent=39 // pred_region
        %s578 = smul.u32 32, %s15
        %p579 = scmp.lt.s32.totalorder %s578, 63
        %s580 = scalar_select %p579, %s578, 63
        %s581 = smul.addr %s580, 8
        %s582 = scalar_lea.vmem %s3, %s581
      $region44: #{mimblock_forward.8} parent=39 // pred_fallthru
        _
    $region40: #{mimblock_forward.8} parent=5 // pred_fallthru
      _
  $region6: #{mimblock_forward.8} parent=0 // loop_footer
    %s13 = sadd.s32 1, %s9
  $region7: #{mimblock_forward.8} parent=0 // loop_footer_branch
    %8 = sbr.rel target = $region3
  $region8: #{mimblock_forward.8} parent=0 // loop_exit
    _

// kernel: mimblock_forward.13
$region0: #{mimblock_forward.13}
  #allocation0 [shape = 'u32[]', space=smem, size = 0x4, offset = 0x4, fixed_abs, tag = 'smem constant byte address 0x4 - core index']
  #allocation1 [shape = 'u32[144,128]{1,0:T(1,128)}', space=vmem, size = 0x12000, scoped, tag = 'internal scratch']
  %s0 = inlined_call_operand.vmem [shape: f32[4,512], index: 0, kind: input, shape index: {}]
  %s1 = inlined_call_operand.vmem [shape: f32[4,512], index: 1, kind: input, shape index: {}]
  %s2 = inlined_call_operand.vmem [shape: f32[4,512], index: 2, kind: input, shape index: {}]
  %s3 = inlined_call_operand.vmem [shape: bf16[4,4], index: 3, kind: input, shape index: {}]
  %s4 = inlined_call_operand.vmem [shape: bf16[4,4], index: 4, kind: input, shape index: {}]
  %s5 = inlined_call_operand.vmem [shape: f32[4,1], index: 5, kind: input, shape index: {}]
  %s6 = inlined_call_operand.vmem [shape: f32[4,512], index: 6, kind: output, shape index: {}]
  %s7 = sld [smem:[#allocation0]]
  $region57: #{mimblock_forward.13} parent=0
    _
  %s9 = ssub.s32 1, %s7
  %s10 = scalar_select 0, %s9, %s7
  loop: start=0, step=1, limit=4
  $region2: #{mimblock_forward.13} parent=0 // loop_pre_header
    _
  $region3: #{mimblock_forward.13} parent=0 // loop_header
    %s12 = sphi 0, %s16
    %p13 = scmp.ge.s32.totalorder %s12, 4
    %s22 = sphi 0, %s24
    %s25 = sphi 0, %s22
    %s26 = sphi 0, %s25
    %s42 = sphi 0, %s26
    %s48 = sphi 0, %s50
    %s51 = sphi 0, %s48
    %s52 = sphi 0, %s51
    %s68 = sphi 0, %s52
    %s74 = sphi 0, %s76
    %s77 = sphi 0, %s74
    %s78 = sphi 0, %s77
    %s94 = sphi 0, %s78
    %s98 = sphi 0, %s98
    %s100 = sphi 0, %s98
    %s101 = sphi 0, %s100
    %s115 = sphi 0, %s101
    %s119 = sphi 0, %s119
    %s121 = sphi 0, %s119
    %s122 = sphi 0, %s121
    %s136 = sphi 0, %s122
    %s140 = sphi 0, %s140
    %s142 = sphi 0, %s140
    %s143 = sphi 0, %s142
    %s157 = sphi 0, %s143
    %s163 = sphi 0, %s165
    %s166 = sphi 0, %s163
    %s167 = sphi 0, %s166
    %s183 = sphi 0, %s167
  $region4: #{mimblock_forward.13} parent=0 // loop_header_branch
    %15 = sbr.rel (%p13) target = $region8
  $region5: #{mimblock_forward.13} parent=0 // loop_body
    %s17 = ssub.s32 %s12, 1
    %s18 = ssub.s32 %s12, 2
    %s19 = sadd.s32 %s12, 1
    %s20 = ssub.s32 %s12, %s19
    %p21 = scmp.eq.s32.totalorder %s20, 0
    %s23 = sadd.s32 %s22, 1
    %s24 = scalar_select %p21, %s22, %s23
    %p27 = pneg %p21
    %p28 = scmp.eq.s32.totalorder %s12, 1
    %p29 = por %p27, %p28
    %p30 = scmp.ne.s32.totalorder %s22, %s25
    %p31 = scmp.eq.s32.totalorder %s12, 0
    %p32 = por %p30, %p31
    %p33 = scmp.ne.s32.totalorder %s22, %s25
    %p34 = scmp.eq.s32.totalorder %s17, 1
    %p35 = por %p33, %p34
    %p36 = scmp.ne.s32.totalorder %s25, %s26
    %p37 = scmp.eq.s32.totalorder %s17, 0
    %p38 = por %p36, %p37
    %p39 = scmp.ne.s32.totalorder %s25, %s26
    %p40 = scmp.eq.s32.totalorder %s18, 1
    %p41 = por %p39, %p40
    %p43 = scmp.ne.s32.totalorder %s26, %s42
    %p44 = scmp.eq.s32.totalorder %s18, 0
    %p45 = por %p43, %p44
    %s46 = ssub.s32 %s12, %s19
    %p47 = scmp.eq.s32.totalorder %s46, 0
    %s49 = sadd.s32 %s48, 1
    %s50 = scalar_select %p47, %s48, %s49
    %p53 = pneg %p47
    %p54 = scmp.eq.s32.totalorder %s12, 1
    %p55 = por %p53, %p54
    %p56 = scmp.ne.s32.totalorder %s48, %s51
    %p57 = scmp.eq.s32.totalorder %s12, 0
    %p58 = por %p56, %p57
    %p59 = scmp.ne.s32.totalorder %s48, %s51
    %p60 = scmp.eq.s32.totalorder %s17, 1
    %p61 = por %p59, %p60
    %p62 = scmp.ne.s32.totalorder %s51, %s52
    %p63 = scmp.eq.s32.totalorder %s17, 0
    %p64 = por %p62, %p63
    %p65 = scmp.ne.s32.totalorder %s51, %s52
    %p66 = scmp.eq.s32.totalorder %s18, 1
    %p67 = por %p65, %p66
    %p69 = scmp.ne.s32.totalorder %s52, %s68
    %p70 = scmp.eq.s32.totalorder %s18, 0
    %p71 = por %p69, %p70
    %s72 = ssub.s32 %s12, %s19
    %p73 = scmp.eq.s32.totalorder %s72, 0
    %s75 = sadd.s32 %s74, 1
    %s76 = scalar_select %p73, %s74, %s75
    %p79 = pneg %p73
    %p80 = scmp.eq.s32.totalorder %s12, 1
    %p81 = por %p79, %p80
    %p82 = scmp.ne.s32.totalorder %s74, %s77
    %p83 = scmp.eq.s32.totalorder %s12, 0
    %p84 = por %p82, %p83
    %p85 = scmp.ne.s32.totalorder %s74, %s77
    %p86 = scmp.eq.s32.totalorder %s17, 1
    %p87 = por %p85, %p86
    %p88 = scmp.ne.s32.totalorder %s77, %s78
    %p89 = scmp.eq.s32.totalorder %s17, 0
    %p90 = por %p88, %p89
    %p91 = scmp.ne.s32.totalorder %s77, %s78
    %p92 = scmp.eq.s32.totalorder %s18, 1
    %p93 = por %p91, %p92
    %p95 = scmp.ne.s32.totalorder %s78, %s94
    %p96 = scmp.eq.s32.totalorder %s18, 0
    %p97 = por %p95, %p96
    %s99 = sadd.s32 %s98, 1
    %p102 = scmp.eq.s32.totalorder %s12, 1
    %p103 = scmp.ne.s32.totalorder %s98, %s100
    %p104 = scmp.eq.s32.totalorder %s12, 0
    %p105 = por %p103, %p104
    %p106 = scmp.ne.s32.totalorder %s98, %s100
    %p107 = scmp.eq.s32.totalorder %s17, 1
    %p108 = por %p106, %p107
    %p109 = scmp.ne.s32.totalorder %s100, %s101
    %p110 = scmp.eq.s32.totalorder %s17, 0
    %p111 = por %p109, %p110
    %p112 = scmp.ne.s32.totalorder %s100, %s101
    %p113 = scmp.eq.s32.totalorder %s18, 1
    %p114 = por %p112, %p113
    %p116 = scmp.ne.s32.totalorder %s101, %s115
    %p117 = scmp.eq.s32.totalorder %s18, 0
    %p118 = por %p116, %p117
    %s120 = sadd.s32 %s119, 1
    %p123 = scmp.eq.s32.totalorder %s12, 1
    %p124 = scmp.ne.s32.totalorder %s119, %s121
    %p125 = scmp.eq.s32.totalorder %s12, 0
    %p126 = por %p124, %p125
    %p127 = scmp.ne.s32.totalorder %s119, %s121
    %p128 = scmp.eq.s32.totalorder %s17, 1
    %p129 = por %p127, %p128
    %p130 = scmp.ne.s32.totalorder %s121, %s122
    %p131 = scmp.eq.s32.totalorder %s17, 0
    %p132 = por %p130, %p131
    %p133 = scmp.ne.s32.totalorder %s121, %s122
    %p134 = scmp.eq.s32.totalorder %s18, 1
    %p135 = por %p133, %p134
    %p137 = scmp.ne.s32.totalorder %s122, %s136
    %p138 = scmp.eq.s32.totalorder %s18, 0
    %p139 = por %p137, %p138
    %s141 = sadd.s32 %s140, 1
    %p144 = scmp.eq.s32.totalorder %s12, 1
    %p145 = scmp.ne.s32.totalorder %s140, %s142
    %p146 = scmp.eq.s32.totalorder %s12, 0
    %p147 = por %p145, %p146
    %p148 = scmp.ne.s32.totalorder %s140, %s142
    %p149 = scmp.eq.s32.totalorder %s17, 1
    %p150 = por %p148, %p149
    %p151 = scmp.ne.s32.totalorder %s142, %s143
    %p152 = scmp.eq.s32.totalorder %s17, 0
    %p153 = por %p151, %p152
    %p154 = scmp.ne.s32.totalorder %s142, %s143
    %p155 = scmp.eq.s32.totalorder %s18, 1
    %p156 = por %p154, %p155
    %p158 = scmp.ne.s32.totalorder %s143, %s157
    %p159 = scmp.eq.s32.totalorder %s18, 0
    %p160 = por %p158, %p159
    %s161 = ssub.s32 %s12, %s19
    %p162 = scmp.eq.s32.totalorder %s161, 0
    %s164 = sadd.s32 %s163, 1
    %s165 = scalar_select %p162, %s163, %s164
    %p168 = pneg %p162
    %p169 = scmp.eq.s32.totalorder %s12, 1
    %p170 = por %p168, %p169
    %p171 = scmp.ne.s32.totalorder %s163, %s166
    %p172 = scmp.eq.s32.totalorder %s12, 0
    %p173 = por %p171, %p172
    %p174 = scmp.ne.s32.totalorder %s163, %s166
    %p175 = scmp.eq.s32.totalorder %s17, 1
    %p176 = por %p174, %p175
    %p177 = scmp.ne.s32.totalorder %s166, %s167
    %p178 = scmp.eq.s32.totalorder %s17, 0
    %p179 = por %p177, %p178
    %p180 = scmp.ne.s32.totalorder %s166, %s167
    %p181 = scmp.eq.s32.totalorder %s18, 1
    %p182 = por %p180, %p181
    %p184 = scmp.ne.s32.totalorder %s167, %s183
    %p185 = scmp.eq.s32.totalorder %s18, 0
    %p186 = por %p184, %p185
    %p187 = scmp.le.s32.totalorder 1, %s12
    %p188 = scmp.lt.s32.totalorder %s12, 3
    %p189 = pnand %p187, %p188
    %p190 = pneg %p189
    // Predicated region
    $region9: #{mimblock_forward.13} parent=5 // pred_check
      _
    $region10: #{mimblock_forward.13} parent=5 // pred_check_branch
      %192 = sbr.rel (%p189) target = $region12
    $region11: #{mimblock_forward.13} parent=5 // pred_region
      %s193 = ssub.s32 %s12, 1
      // Predicated region
      $region13: #{mimblock_forward.13} parent=11 // pred_check
        %p194 = pneg %p111
      $region14: #{mimblock_forward.13} parent=11 // pred_check_branch
        %196 = sbr.rel (%p194) target = $region16
      $region15: #{mimblock_forward.13} parent=11 // pred_region
        _
      $region16: #{mimblock_forward.13} parent=11 // pred_fallthru
        _
      // Predicated region
      $region17: #{mimblock_forward.13} parent=11 // pred_check
        %p197 = pneg %p132
      $region18: #{mimblock_forward.13} parent=11 // pred_check_branch
        %199 = sbr.rel (%p197) target = $region20
      $region19: #{mimblock_forward.13} parent=11 // pred_region
        _
      $region20: #{mimblock_forward.13} parent=11 // pred_fallthru
        _
      // Predicated region
      $region21: #{mimblock_forward.13} parent=11 // pred_check
        %p200 = pneg %p153
      $region22: #{mimblock_forward.13} parent=11 // pred_check_branch
        %202 = sbr.rel (%p200) target = $region24
      $region23: #{mimblock_forward.13} parent=11 // pred_region
        _
      $region24: #{mimblock_forward.13} parent=11 // pred_fallthru
        _
    $region12: #{mimblock_forward.13} parent=5 // pred_fallthru
      _
    %p203 = scmp.lt.s32.totalorder %s12, 2
    // Predicated region
    $region25: #{mimblock_forward.13} parent=5 // pred_check
      %p204 = pneg %p203
    $region26: #{mimblock_forward.13} parent=5 // pred_check_branch
      %206 = sbr.rel (%p204) target = $region28
    $region27: #{mimblock_forward.13} parent=5 // pred_region
      // Predicated region
      $region29: #{mimblock_forward.13} parent=27 // pred_check
        %p207 = pneg %p32
      $region30: #{mimblock_forward.13} parent=27 // pred_check_branch
        %209 = sbr.rel (%p207) target = $region32
      $region31: #{mimblock_forward.13} parent=27 // pred_region
        %s210 = smul.u32 2, %s12
        %p211 = scmp.lt.s32.totalorder %s210, 3
        %s212 = scalar_select %p211, %s210, 3
        %s213 = smul.addr %s212, 4
        %s214 = scalar_lea.vmem %s0, %s213
        %s215 = smul.u32 2, %s12
      $region32: #{mimblock_forward.13} parent=27 // pred_fallthru
        _
      // Predicated region
      $region33: #{mimblock_forward.13} parent=27 // pred_check
        %p216 = pneg %p58
      $region34: #{mimblock_forward.13} parent=27 // pred_check_branch
        %218 = sbr.rel (%p216) target = $region36
      $region35: #{mimblock_forward.13} parent=27 // pred_region
        %s219 = smul.u32 2, %s12
        %p220 = scmp.lt.s32.totalorder %s219, 3
        %s221 = scalar_select %p220, %s219, 3
        %s222 = smul.addr %s221, 4
        %s223 = scalar_lea.vmem %s1, %s222
        %s224 = smul.u32 2, %s12
      $region36: #{mimblock_forward.13} parent=27 // pred_fallthru
        _
      // Predicated region
      $region37: #{mimblock_forward.13} parent=27 // pred_check
        %p225 = pneg %p84
      $region38: #{mimblock_forward.13} parent=27 // pred_check_branch
        %227 = sbr.rel (%p225) target = $region40
      $region39: #{mimblock_forward.13} parent=27 // pred_region
        %s228 = smul.u32 2, %s12
        %p229 = scmp.lt.s32.totalorder %s228, 3
        %s230 = scalar_select %p229, %s228, 3
        %s231 = smul.addr %s230, 4
        %s232 = scalar_lea.vmem %s2, %s231
        %s233 = smul.u32 2, %s12
      $region40: #{mimblock_forward.13} parent=27 // pred_fallthru
        _
    $region28: #{mimblock_forward.13} parent=5 // pred_fallthru
      _
    %p234 = scmp.le.s32.totalorder 1, %s12
    %p235 = scmp.lt.s32.totalorder %s12, 3
    %p236 = pnand %p234, %p235
    %p237 = pneg %p236
    // Predicated region
    $region41: #{mimblock_forward.13} parent=5 // pred_check
      _
    $region42: #{mimblock_forward.13} parent=5 // pred_check_branch
      %239 = sbr.rel (%p236) target = $region44
    $region43: #{mimblock_forward.13} parent=5 // pred_region
      %s240 = ssub.s32 %s12, 1
      %s241 = smul.u32 2, %s17
      %p242 = scmp.lt.s32.totalorder %s241, 3
      %s243 = scalar_select %p242, %s241, 3
      %s244 = smul.addr %s243, 4
      %s245 = scalar_lea.vmem %s0, %s244
      %p246 = pneg %p38
      %p247 = pneg %p35
      %s248 = smul.u32 2, %s17
      %p249 = scmp.lt.s32.totalorder %s248, 3
      %s250 = scalar_select %p249, %s248, 3
      %s251 = smul.addr %s250, 4
      %s252 = scalar_lea.vmem %s1, %s251
      %p253 = pneg %p64
      %p254 = pneg %p61
      %s255 = smul.u32 2, %s17
      %p256 = scmp.lt.s32.totalorder %s255, 3
      %s257 = scalar_select %p256, %s255, 3
      %s258 = smul.addr %s257, 4
      %s259 = scalar_lea.vmem %s2, %s258
      %p260 = pneg %p90
      %p261 = pneg %p87
      %p262 = pneg %p111
      %p263 = pneg %p108
      %p264 = pneg %p132
      %p265 = pneg %p129
      %p266 = pneg %p153
      %p267 = pneg %p150
      %p268 = pneg %p179
      %p269 = pneg %p176
      %s270 = smul.u32 2, %s17
      %p271 = scmp.lt.s32.totalorder %s270, 3
      %s272 = scalar_select %p271, %s270, 3
      %s273 = smul.addr %s272, 4
      %s274 = scalar_lea.vmem %s6, %s273
      %s275 = smul.u32 2, %s17
      %p276 = scmp.lt.s32.totalorder %s275, 3
      %s277 = scalar_select %p276, %s275, 3
      %s278 = smul.addr %s277, 4
      %s279 = scalar_lea.vmem %s0, %s278
      %s280 = smul.u32 2, %s17
      %s281 = smul.u32 2, %s17
      %p282 = scmp.lt.s32.totalorder %s281, 3
      %s283 = scalar_select %p282, %s281, 3
      %s284 = smul.addr %s283, 4
      %s285 = scalar_lea.vmem %s1, %s284
      %s286 = smul.u32 2, %s17
      %s287 = smul.u32 2, %s17
      %p288 = scmp.lt.s32.totalorder %s287, 3
      %s289 = scalar_select %p288, %s287, 3
      %s290 = smul.addr %s289, 4
      %s291 = scalar_lea.vmem %s2, %s290
      %s292 = smul.u32 2, %s17
      %s293 = smul.u32 2, %s17
      %p294 = scmp.lt.s32.totalorder %s293, 3
      %s295 = scalar_select %p294, %s293, 3
      %s296 = smul.addr %s295, 4
      %s297 = scalar_lea.vmem %s6, %s296
      %s298 = smul.u32 2, %s17
      %v300 = vld [vmem:[%s3] sm:$0x3]
      %v301 = vld [vmem:[%s279] sm:$0xff]
      %v303 = vcombine.high %v301, %v301
      %v305 = vpack.c.bf16 %v301, %v301
      %v306 = vpack.c.bf16 %v303, %v303
      %v307 = vld [vmem:[%s4] sm:$0x3]
      %v308 = vld [vmem:[%s285] sm:$0xff]
      %v310 = vcombine.high %v308, %v308
      %v312 = vpack.c.bf16 %v308, %v308
      %v313 = vpack.c.bf16 %v310, %v310
      %vm314 = vcmask 31744
      %v316 = vsel %vm314, %v307, 0
      %vm318 = vcmask 1041408
      %v320 = vsel %vm318, %v312, 0
      %v323 = vsel %vm318, %v313, 0
      %325 = vmatprep.subr.bf16.mxu0 %v323
      %326 = vmatpush1.bf16.msra.mxu0 %v320
      %327 = vmatprep.subr.bf16.mxu0 0
      %328 = vmatpush1.bf16.msra.mxu0 0
      %329 = vmatprep.subr.bf16.mxu0 0
      %330 = vmatpush1.bf16.msra.mxu0 0
      %331 = vmatprep.subr.bf16.mxu0 0
      %332 = vmatpush1.bf16.msra.mxu0 0
      %333 = vmatprep.subr.bf16.mxu0 0
      %334 = vmatpush1.bf16.msra.mxu0 0
      %335 = vmatprep.subr.bf16.mxu0 0
      %336 = vmatpush1.bf16.msra.mxu0 0
      %337 = vmatprep.subr.bf16.mxu0 0
      %338 = vmatpush1.bf16.msra.mxu0 0
      %339 = vmatprep.subr.bf16.mxu0 0
      %340 = vmatpush1.bf16.msra.mxu0 0
      %341 = vmatprep.subr.bf16.mxu0 0
      %342 = vmatpush1.bf16.msra.mxu0 0
      %343 = vmatprep.subr.bf16.mxu0 0
      %344 = vmatpush1.bf16.msra.mxu0 0
      %345 = vmatprep.subr.bf16.mxu0 0
      %346 = vmatpush1.bf16.msra.mxu0 0
      %347 = vmatprep.subr.bf16.mxu0 0
      %348 = vmatpush1.bf16.msra.mxu0 0
      %349 = vmatprep.subr.bf16.mxu0 0
      %350 = vmatpush1.bf16.msra.mxu0 0
      %351 = vmatprep.subr.bf16.mxu0 0
      %352 = vmatpush1.bf16.msra.mxu0 0
      %353 = vmatprep.subr.bf16.mxu0 0
      %354 = vmatpush1.bf16.msra.mxu0 0
      %355 = vmatprep.subr.bf16.mxu0 0
      %356 = vmatpush1.bf16.msra.mxu0 0
      %357 = vmatprep.mubr.bf16.mxu0 0
      %358 = vmatmul.mubr.bf16.gmra.mrb[0].mxu0 %v316
      %v359 = vpop.f32.mrb[0].mxu0
      %v360 = vadd.f32 0.0, %v359
      %v361 = vpop.f32.mrb[0].mxu0
      %v362 = vadd.f32 0.0, %v361
      %v363 = vpop.f32.mrb[0].mxu0
      %v364 = vpop.f32.mrb[0].mxu0
      %365 = vdwg.mxu0
      %v367 = vsel %vm314, %v300, 0
      %v370 = vsel %vm318, %v305, 0
      %v373 = vsel %vm318, %v306, 0
      %375 = vmatprep.subr.bf16.mxu0 %v373
      %376 = vmatpush1.bf16.msra.mxu0 %v370
      %377 = vmatprep.subr.bf16.mxu0 0
      %378 = vmatpush1.bf16.msra.mxu0 0
      %379 = vmatprep.subr.bf16.mxu0 0
      %380 = vmatpush1.bf16.msra.mxu0 0
      %381 = vmatprep.subr.bf16.mxu0 0
      %382 = vmatpush1.bf16.msra.mxu0 0
      %383 = vmatprep.subr.bf16.mxu0 0
      %384 = vmatpush1.bf16.msra.mxu0 0
      %385 = vmatprep.subr.bf16.mxu0 0
      %386 = vmatpush1.bf16.msra.mxu0 0
      %387 = vmatprep.subr.bf16.mxu0 0
      %388 = vmatpush1.bf16.msra.mxu0 0
      %389 = vmatprep.subr.bf16.mxu0 0
      %390 = vmatpush1.bf16.msra.mxu0 0
      %391 = vmatprep.subr.bf16.mxu0 0
      %392 = vmatpush1.bf16.msra.mxu0 0
      %393 = vmatprep.subr.bf16.mxu0 0
      %394 = vmatpush1.bf16.msra.mxu0 0
      %395 = vmatprep.subr.bf16.mxu0 0
      %396 = vmatpush1.bf16.msra.mxu0 0
      %397 = vmatprep.subr.bf16.mxu0 0
      %398 = vmatpush1.bf16.msra.mxu0 0
      %399 = vmatprep.subr.bf16.mxu0 0
      %400 = vmatpush1.bf16.msra.mxu0 0
      %401 = vmatprep.subr.bf16.mxu0 0
      %402 = vmatpush1.bf16.msra.mxu0 0
      %403 = vmatprep.subr.bf16.mxu0 0
      %404 = vmatpush1.bf16.msra.mxu0 0
      %405 = vmatprep.subr.bf16.mxu0 0
      %406 = vmatpush1.bf16.msra.mxu0 0
      %407 = vmatprep.mubr.bf16.mxu0 0
      %408 = vmatmul.mubr.bf16.gmra.mrb[0].mxu0 %v367
      %v409 = vpop.f32.mrb[0].mxu0
      %v410 = vadd.f32 %v360, %v409
      %v411 = vpop.f32.mrb[0].mxu0
      %v412 = vadd.f32 %v362, %v411
      %v413 = vpop.f32.mrb[0].mxu0
      %v414 = vpop.f32.mrb[0].mxu0
      %415 = vdwg.mxu0
      %v416 = vld [vmem:[%s5] sm:$0xf]
      %418 = vset.pattern.permute.xlu0 0
      %419 = vperm.xlu0 %418, %v416
      %v420 = vpop.permute.xlu0 %419
      %v422 = vadd.f32 %v410, %v420
      %v423 = vadd.f32 %v412, %v420
      %v424 = vld [vmem:[%s291] sm:$0xff]
      %v425 = vtanh.pop %v422
      %v426 = vtanh.pop %v423
      %v429 = vcombine.low %v425, %v426
      %v431 = vmul.f32 %v424, %v429
      %432 = vst [vmem:[%s297] sm:$0xff] %v431
      %s433 = smul.u32 2, %s17
      %p434 = scmp.lt.s32.totalorder %s433, 3
      %s435 = scalar_select %p434, %s433, 3
      %s436 = smul.addr %s435, 4
      %s437 = scalar_lea.vmem %s6, %s436
      // Predicated region
      $region45: #{mimblock_forward.13} parent=43 // pred_check
        %p438 = pneg %p176
      $region46: #{mimblock_forward.13} parent=43 // pred_check_branch
        %440 = sbr.rel (%p438) target = $region48
      $region47: #{mimblock_forward.13} parent=43 // pred_region
        %s441 = smul.u32 2, %s17
      $region48: #{mimblock_forward.13} parent=43 // pred_fallthru
        _
    $region44: #{mimblock_forward.13} parent=5 // pred_fallthru
      _
    %p442 = scmp.le.s32.totalorder 2, %s12
    // Predicated region
    $region49: #{mimblock_forward.13} parent=5 // pred_check
      %p443 = pneg %p442
    $region50: #{mimblock_forward.13} parent=5 // pred_check_branch
      %445 = sbr.rel (%p443) target = $region52
    $region51: #{mimblock_forward.13} parent=5 // pred_region
      %s446 = ssub.s32 %s12, 2
      // Predicated region
      $region53: #{mimblock_forward.13} parent=51 // pred_check
        %p447 = pneg %p182
      $region54: #{mimblock_forward.13} parent=51 // pred_check_branch
        %449 = sbr.rel (%p447) target = $region56
      $region55: #{mimblock_forward.13} parent=51 // pred_region
        %s450 = smul.u32 2, %s18
        %p451 = scmp.lt.s32.totalorder %s450, 3
        %s452 = scalar_select %p451, %s450, 3
        %s453 = smul.addr %s452, 4
        %s454 = scalar_lea.vmem %s6, %s453
      $region56: #{mimblock_forward.13} parent=51 // pred_fallthru
        _
    $region52: #{mimblock_forward.13} parent=5 // pred_fallthru
      _
  $region6: #{mimblock_forward.13} parent=0 // loop_footer
    %s16 = sadd.s32 1, %s12
  $region7: #{mimblock_forward.13} parent=0 // loop_footer_branch
    %11 = sbr.rel target = $region3
  $region8: #{mimblock_forward.13} parent=0 // loop_exit
    _

// kernel: mimblock_forward.12
$region0: #{mimblock_forward.12}
  #allocation0 [shape = 'u32[]', space=smem, size = 0x4, offset = 0x4, fixed_abs, tag = 'smem constant byte address 0x4 - core index']
  #allocation1 [shape = 'u32[144,128]{1,0:T(1,128)}', space=vmem, size = 0x12000, scoped, tag = 'internal scratch']
  %s0 = inlined_call_operand.vmem [shape: f32[12,32,16], index: 0, kind: input, shape index: {}]
  %s1 = inlined_call_operand.vmem [shape: f32[16,32,16], index: 1, kind: input, shape index: {}]
  %s2 = inlined_call_operand.vmem [shape: f32[16,32,16], index: 2, kind: input, shape index: {}]
  %s3 = inlined_call_operand.vmem [shape: f32[16,32,16], index: 3, kind: input, shape index: {}]
  %s4 = inlined_call_operand.vmem [shape: f32[16,32,16], index: 4, kind: input, shape index: {}]
  %s5 = inlined_call_operand.vmem [shape: f32[4,32,16], index: 5, kind: input, shape index: {}]
  %s6 = inlined_call_operand.vmem [shape: f32[4,32,16], index: 6, kind: input, shape index: {}]
  %s7 = inlined_call_operand.vmem [shape: bf16[8,16,16], index: 7, kind: input, shape index: {}]
  %s8 = inlined_call_operand.vmem [shape: bf16[4,16,16], index: 8, kind: input, shape index: {}]
  %s9 = inlined_call_operand.vmem [shape: f32[4,32,16], index: 9, kind: output, shape index: {0}]
  %s10 = inlined_call_operand.vmem [shape: f32[4,32,16], index: 10, kind: output, shape index: {1}]
  %s11 = inlined_call_operand.vmem [shape: f32[4,32,16], index: 11, kind: output, shape index: {2}]
  %12 = xla_tuple %s9, %s10, %s11
  %s13 = sld [smem:[#allocation0]]
  $region62: #{mimblock_forward.12} parent=0
    _
  %s15 = ssub.s32 1, %s13
  %s16 = scalar_select 0, %s15, %s13
  // Predicated region
  $region2: #{mimblock_forward.12} parent=0 // pred_check
    _
  $region3: #{mimblock_forward.12} parent=0 // pred_check_branch
    %18 = sbr.rel (0) target = $region5
  $region4: #{mimblock_forward.12} parent=0 // pred_region
    _
  $region5: #{mimblock_forward.12} parent=0 // pred_fallthru
    _
  // Predicated region
  $region6: #{mimblock_forward.12} parent=0 // pred_check
    _
  $region7: #{mimblock_forward.12} parent=0 // pred_check_branch
    %20 = sbr.rel (0) target = $region9
  $region8: #{mimblock_forward.12} parent=0 // pred_region
    _
  $region9: #{mimblock_forward.12} parent=0 // pred_fallthru
    _
  // Predicated region
  $region10: #{mimblock_forward.12} parent=0 // pred_check
    _
  $region11: #{mimblock_forward.12} parent=0 // pred_check_branch
    %22 = sbr.rel (0) target = $region13
  $region12: #{mimblock_forward.12} parent=0 // pred_region
    _
  $region13: #{mimblock_forward.12} parent=0 // pred_fallthru
    _
  // Predicated region
  $region14: #{mimblock_forward.12} parent=0 // pred_check
    _
  $region15: #{mimblock_forward.12} parent=0 // pred_check_branch
    %24 = sbr.rel (0) target = $region17
  $region16: #{mimblock_forward.12} parent=0 // pred_region
    _
  $region17: #{mimblock_forward.12} parent=0 // pred_fallthru
    _
  // Predicated region
  $region18: #{mimblock_forward.12} parent=0 // pred_check
    _
  $region19: #{mimblock_forward.12} parent=0 // pred_check_branch
    %26 = sbr.rel (0) target = $region21
  $region20: #{mimblock_forward.12} parent=0 // pred_region
    _
  $region21: #{mimblock_forward.12} parent=0 // pred_fallthru
    _
  // Predicated region
  $region22: #{mimblock_forward.12} parent=0 // pred_check
    _
  $region23: #{mimblock_forward.12} parent=0 // pred_check_branch
    %28 = sbr.rel (0) target = $region25
  $region24: #{mimblock_forward.12} parent=0 // pred_region
    _
  $region25: #{mimblock_forward.12} parent=0 // pred_fallthru
    _
  // Predicated region
  $region26: #{mimblock_forward.12} parent=0 // pred_check
    _
  $region27: #{mimblock_forward.12} parent=0 // pred_check_branch
    %30 = sbr.rel (0) target = $region29
  $region28: #{mimblock_forward.12} parent=0 // pred_region
    _
  $region29: #{mimblock_forward.12} parent=0 // pred_fallthru
    _
  // Predicated region
  $region30: #{mimblock_forward.12} parent=0 // pred_check
    _
  $region31: #{mimblock_forward.12} parent=0 // pred_check_branch
    %32 = sbr.rel (0) target = $region33
  $region32: #{mimblock_forward.12} parent=0 // pred_region
    _
  $region33: #{mimblock_forward.12} parent=0 // pred_fallthru
    _
  // Predicated region
  $region34: #{mimblock_forward.12} parent=0 // pred_check
    _
  $region35: #{mimblock_forward.12} parent=0 // pred_check_branch
    %34 = sbr.rel (0) target = $region37
  $region36: #{mimblock_forward.12} parent=0 // pred_region
    _
  $region37: #{mimblock_forward.12} parent=0 // pred_fallthru
    _
  %v36 = vld [vmem:[%s0] sm:$0xff]
  %v37 = vld [vmem:[%s0 + $0x8] sm:$0xff]
  %v38 = vld [vmem:[%s0 + $0x10] sm:$0xff]
  %v39 = vld [vmem:[%s0 + $0x18] sm:$0xff]
  %v40 = vld [vmem:[%s0 + $0x20] sm:$0xff]
  %v41 = vld [vmem:[%s0 + $0x28] sm:$0xff]
  %v42 = vld [vmem:[%s0 + $0x30] sm:$0xff]
  %v43 = vld [vmem:[%s0 + $0x38] sm:$0xff]
  %v44 = vld [vmem:[%s0 + $0x40] sm:$0xff]
  %v45 = vld [vmem:[%s0 + $0x48] sm:$0xff]
  %v46 = vld [vmem:[%s0 + $0x50] sm:$0xff]
  %v47 = vld [vmem:[%s0 + $0x58] sm:$0xff]
  %v48 = vld [vmem:[%s0 + $0x60] sm:$0xff]
  %v49 = vld [vmem:[%s0 + $0x68] sm:$0xff]
  %v50 = vld [vmem:[%s0 + $0x70] sm:$0xff]
  %v51 = vld [vmem:[%s0 + $0x78] sm:$0xff]
  %v52 = vld [vmem:[%s0 + $0x80] sm:$0xff]
  %v53 = vld [vmem:[%s0 + $0x88] sm:$0xff]
  %v54 = vld [vmem:[%s0 + $0x90] sm:$0xff]
  %v55 = vld [vmem:[%s0 + $0x98] sm:$0xff]
  %v56 = vld [vmem:[%s0 + $0xa0] sm:$0xff]
  %v57 = vld [vmem:[%s0 + $0xa8] sm:$0xff]
  %v58 = vld [vmem:[%s0 + $0xb0] sm:$0xff]
  %v59 = vld [vmem:[%s0 + $0xb8] sm:$0xff]
  %v60 = vld [vmem:[%s0 + $0xc0] sm:$0xff]
  %v61 = vld [vmem:[%s0 + $0xc8] sm:$0xff]
  %v62 = vld [vmem:[%s0 + $0xd0] sm:$0xff]
  %v63 = vld [vmem:[%s0 + $0xd8] sm:$0xff]
  %v64 = vld [vmem:[%s0 + $0xe0] sm:$0xff]
  %v65 = vld [vmem:[%s0 + $0xe8] sm:$0xff]
  %v66 = vld [vmem:[%s0 + $0xf0] sm:$0xff]
  %v67 = vld [vmem:[%s0 + $0xf8] sm:$0xff]
  %v68 = vld [vmem:[%s0 + $0x100] sm:$0xff]
  %v69 = vld [vmem:[%s0 + $0x108] sm:$0xff]
  %v70 = vld [vmem:[%s0 + $0x110] sm:$0xff]
  %v71 = vld [vmem:[%s0 + $0x118] sm:$0xff]
  %v72 = vld [vmem:[%s0 + $0x120] sm:$0xff]
  %v73 = vld [vmem:[%s0 + $0x128] sm:$0xff]
  %v74 = vld [vmem:[%s0 + $0x130] sm:$0xff]
  %v75 = vld [vmem:[%s0 + $0x138] sm:$0xff]
  %v76 = vld [vmem:[%s0 + $0x140] sm:$0xff]
  %v77 = vld [vmem:[%s0 + $0x148] sm:$0xff]
  %v78 = vld [vmem:[%s0 + $0x150] sm:$0xff]
  %v79 = vld [vmem:[%s0 + $0x158] sm:$0xff]
  %v80 = vld [vmem:[%s0 + $0x160] sm:$0xff]
  %v81 = vld [vmem:[%s0 + $0x168] sm:$0xff]
  %v82 = vld [vmem:[%s0 + $0x170] sm:$0xff]
  %v83 = vld [vmem:[%s0 + $0x178] sm:$0xff]
  %v84 = vld [vmem:[%s1] sm:$0xff]
  %v85 = vld [vmem:[%s1 + $0x8] sm:$0xff]
  %v86 = vld [vmem:[%s1 + $0x10] sm:$0xff]
  %v87 = vld [vmem:[%s1 + $0x18] sm:$0xff]
  %v88 = vld [vmem:[%s1 + $0x20] sm:$0xff]
  %v89 = vld [vmem:[%s1 + $0x28] sm:$0xff]
  %v90 = vld [vmem:[%s1 + $0x30] sm:$0xff]
  %v91 = vld [vmem:[%s1 + $0x38] sm:$0xff]
  %v92 = vld [vmem:[%s1 + $0x40] sm:$0xff]
  %v93 = vld [vmem:[%s1 + $0x48] sm:$0xff]
  %v94 = vld [vmem:[%s1 + $0x50] sm:$0xff]
  %v95 = vld [vmem:[%s1 + $0x58] sm:$0xff]
  %v96 = vld [vmem:[%s1 + $0x60] sm:$0xff]
  %v97 = vld [vmem:[%s1 + $0x68] sm:$0xff]
  %v98 = vld [vmem:[%s1 + $0x70] sm:$0xff]
  %v99 = vld [vmem:[%s1 + $0x78] sm:$0xff]
  %v100 = vld [vmem:[%s1 + $0x80] sm:$0xff]
  %v101 = vld [vmem:[%s1 + $0x88] sm:$0xff]
  %v102 = vld [vmem:[%s1 + $0x90] sm:$0xff]
  %v103 = vld [vmem:[%s1 + $0x98] sm:$0xff]
  %v104 = vld [vmem:[%s1 + $0xa0] sm:$0xff]
  %v105 = vld [vmem:[%s1 + $0xa8] sm:$0xff]
  %v106 = vld [vmem:[%s1 + $0xb0] sm:$0xff]
  %v107 = vld [vmem:[%s1 + $0xb8] sm:$0xff]
  %v108 = vld [vmem:[%s1 + $0xc0] sm:$0xff]
  %v109 = vld [vmem:[%s1 + $0xc8] sm:$0xff]
  %v110 = vld [vmem:[%s1 + $0xd0] sm:$0xff]
  %v111 = vld [vmem:[%s1 + $0xd8] sm:$0xff]
  %v112 = vld [vmem:[%s1 + $0xe0] sm:$0xff]
  %v113 = vld [vmem:[%s1 + $0xe8] sm:$0xff]
  %v114 = vld [vmem:[%s1 + $0xf0] sm:$0xff]
  %v115 = vld [vmem:[%s1 + $0xf8] sm:$0xff]
  %v116 = vld [vmem:[%s1 + $0x100] sm:$0xff]
  %v117 = vld [vmem:[%s1 + $0x108] sm:$0xff]
  %v118 = vld [vmem:[%s1 + $0x110] sm:$0xff]
  %v119 = vld [vmem:[%s1 + $0x118] sm:$0xff]
  %v120 = vld [vmem:[%s1 + $0x120] sm:$0xff]
  %v121 = vld [vmem:[%s1 + $0x128] sm:$0xff]
  %v122 = vld [vmem:[%s1 + $0x130] sm:$0xff]
  %v123 = vld [vmem:[%s1 + $0x138] sm:$0xff]
  %v124 = vld [vmem:[%s1 + $0x140] sm:$0xff]
  %v125 = vld [vmem:[%s1 + $0x148] sm:$0xff]
  %v126 = vld [vmem:[%s1 + $0x150] sm:$0xff]
  %v127 = vld [vmem:[%s1 + $0x158] sm:$0xff]
  %v128 = vld [vmem:[%s1 + $0x160] sm:$0xff]
  %v129 = vld [vmem:[%s1 + $0x168] sm:$0xff]
  %v130 = vld [vmem:[%s1 + $0x170] sm:$0xff]
  %v131 = vld [vmem:[%s1 + $0x178] sm:$0xff]
  %v132 = vld [vmem:[%s1 + $0x180] sm:$0xff]
  %v133 = vld [vmem:[%s1 + $0x188] sm:$0xff]
  %v134 = vld [vmem:[%s1 + $0x190] sm:$0xff]
  %v135 = vld [vmem:[%s1 + $0x198] sm:$0xff]
  %v136 = vld [vmem:[%s1 + $0x1a0] sm:$0xff]
  %v137 = vld [vmem:[%s1 + $0x1a8] sm:$0xff]
  %v138 = vld [vmem:[%s1 + $0x1b0] sm:$0xff]
  %v139 = vld [vmem:[%s1 + $0x1b8] sm:$0xff]
  %v140 = vld [vmem:[%s1 + $0x1c0] sm:$0xff]
  %v141 = vld [vmem:[%s1 + $0x1c8] sm:$0xff]
  %v142 = vld [vmem:[%s1 + $0x1d0] sm:$0xff]
  %v143 = vld [vmem:[%s1 + $0x1d8] sm:$0xff]
  %v144 = vld [vmem:[%s1 + $0x1e0] sm:$0xff]
  %v145 = vld [vmem:[%s1 + $0x1e8] sm:$0xff]
  %v146 = vld [vmem:[%s1 + $0x1f0] sm:$0xff]
  %v147 = vld [vmem:[%s1 + $0x1f8] sm:$0xff]
  %v148 = vld [vmem:[%s2] sm:$0xff]
  %v149 = vld [vmem:[%s2 + $0x8] sm:$0xff]
  %v150 = vld [vmem:[%s2 + $0x10] sm:$0xff]
  %v151 = vld [vmem:[%s2 + $0x18] sm:$0xff]
  %v152 = vld [vmem:[%s2 + $0x20] sm:$0xff]
  %v153 = vld [vmem:[%s2 + $0x28] sm:$0xff]
  %v154 = vld [vmem:[%s2 + $0x30] sm:$0xff]
  %v155 = vld [vmem:[%s2 + $0x38] sm:$0xff]
  %v156 = vld [vmem:[%s2 + $0x40] sm:$0xff]
  %v157 = vld [vmem:[%s2 + $0x48] sm:$0xff]
  %v158 = vld [vmem:[%s2 + $0x50] sm:$0xff]
  %v159 = vld [vmem:[%s2 + $0x58] sm:$0xff]
  %v160 = vld [vmem:[%s2 + $0x60] sm:$0xff]
  %v161 = vld [vmem:[%s2 + $0x68] sm:$0xff]
  %v162 = vld [vmem:[%s2 + $0x70] sm:$0xff]
  %v163 = vld [vmem:[%s2 + $0x78] sm:$0xff]
  %v164 = vld [vmem:[%s2 + $0x80] sm:$0xff]
  %v165 = vld [vmem:[%s2 + $0x88] sm:$0xff]
  %v166 = vld [vmem:[%s2 + $0x90] sm:$0xff]
  %v167 = vld [vmem:[%s2 + $0x98] sm:$0xff]
  %v168 = vld [vmem:[%s2 + $0xa0] sm:$0xff]
  %v169 = vld [vmem:[%s2 + $0xa8] sm:$0xff]
  %v170 = vld [vmem:[%s2 + $0xb0] sm:$0xff]
  %v171 = vld [vmem:[%s2 + $0xb8] sm:$0xff]
  %v172 = vld [vmem:[%s2 + $0xc0] sm:$0xff]
  %v173 = vld [vmem:[%s2 + $0xc8] sm:$0xff]
  %v174 = vld [vmem:[%s2 + $0xd0] sm:$0xff]
  %v175 = vld [vmem:[%s2 + $0xd8] sm:$0xff]
  %v176 = vld [vmem:[%s2 + $0xe0] sm:$0xff]
  %v177 = vld [vmem:[%s2 + $0xe8] sm:$0xff]
  %v178 = vld [vmem:[%s2 + $0xf0] sm:$0xff]
  %v179 = vld [vmem:[%s2 + $0xf8] sm:$0xff]
  %v180 = vld [vmem:[%s2 + $0x100] sm:$0xff]
  %v181 = vld [vmem:[%s2 + $0x108] sm:$0xff]
  %v182 = vld [vmem:[%s2 + $0x110] sm:$0xff]
  %v183 = vld [vmem:[%s2 + $0x118] sm:$0xff]
  %v184 = vld [vmem:[%s2 + $0x120] sm:$0xff]
  %v185 = vld [vmem:[%s2 + $0x128] sm:$0xff]
  %v186 = vld [vmem:[%s2 + $0x130] sm:$0xff]
  %v187 = vld [vmem:[%s2 + $0x138] sm:$0xff]
  %v188 = vld [vmem:[%s2 + $0x140] sm:$0xff]
  %v189 = vld [vmem:[%s2 + $0x148] sm:$0xff]
  %v190 = vld [vmem:[%s2 + $0x150] sm:$0xff]
  %v191 = vld [vmem:[%s2 + $0x158] sm:$0xff]
  %v192 = vld [vmem:[%s2 + $0x160] sm:$0xff]
  %v193 = vld [vmem:[%s2 + $0x168] sm:$0xff]
  %v194 = vld [vmem:[%s2 + $0x170] sm:$0xff]
  %v195 = vld [vmem:[%s2 + $0x178] sm:$0xff]
  %v196 = vld [vmem:[%s2 + $0x180] sm:$0xff]
  %v197 = vld [vmem:[%s2 + $0x188] sm:$0xff]
  %v198 = vld [vmem:[%s2 + $0x190] sm:$0xff]
  %v199 = vld [vmem:[%s2 + $0x198] sm:$0xff]
  %v200 = vld [vmem:[%s2 + $0x1a0] sm:$0xff]
  %v201 = vld [vmem:[%s2 + $0x1a8] sm:$0xff]
  %v202 = vld [vmem:[%s2 + $0x1b0] sm:$0xff]
  %v203 = vld [vmem:[%s2 + $0x1b8] sm:$0xff]
  %v204 = vld [vmem:[%s2 + $0x1c0] sm:$0xff]
  %v205 = vld [vmem:[%s2 + $0x1c8] sm:$0xff]
  %v206 = vld [vmem:[%s2 + $0x1d0] sm:$0xff]
  %v207 = vld [vmem:[%s2 + $0x1d8] sm:$0xff]
  %v208 = vld [vmem:[%s2 + $0x1e0] sm:$0xff]
  %v209 = vld [vmem:[%s2 + $0x1e8] sm:$0xff]
  %v210 = vld [vmem:[%s2 + $0x1f0] sm:$0xff]
  %v211 = vld [vmem:[%s2 + $0x1f8] sm:$0xff]
  %v212 = vld [vmem:[%s3] sm:$0xff]
  %v213 = vld [vmem:[%s3 + $0x8] sm:$0xff]
  %v214 = vld [vmem:[%s3 + $0x10] sm:$0xff]
  %v215 = vld [vmem:[%s3 + $0x18] sm:$0xff]
  %v216 = vld [vmem:[%s3 + $0x20] sm:$0xff]
  %v217 = vld [vmem:[%s3 + $0x28] sm:$0xff]
  %v218 = vld [vmem:[%s3 + $0x30] sm:$0xff]
  %v219 = vld [vmem:[%s3 + $0x38] sm:$0xff]
  %v220 = vld [vmem:[%s3 + $0x40] sm:$0xff]
  %v221 = vld [vmem:[%s3 + $0x48] sm:$0xff]
  %v222 = vld [vmem:[%s3 + $0x50] sm:$0xff]
  %v223 = vld [vmem:[%s3 + $0x58] sm:$0xff]
  %v224 = vld [vmem:[%s3 + $0x60] sm:$0xff]
  %v225 = vld [vmem:[%s3 + $0x68] sm:$0xff]
  %v226 = vld [vmem:[%s3 + $0x70] sm:$0xff]
  %v227 = vld [vmem:[%s3 + $0x78] sm:$0xff]
  %v228 = vld [vmem:[%s3 + $0x80] sm:$0xff]
  %v229 = vld [vmem:[%s3 + $0x88] sm:$0xff]
  %v230 = vld [vmem:[%s3 + $0x90] sm:$0xff]
  %v231 = vld [vmem:[%s3 + $0x98] sm:$0xff]
  %v232 = vld [vmem:[%s3 + $0xa0] sm:$0xff]
  %v233 = vld [vmem:[%s3 + $0xa8] sm:$0xff]
  %v234 = vld [vmem:[%s3 + $0xb0] sm:$0xff]
  %v235 = vld [vmem:[%s3 + $0xb8] sm:$0xff]
  %v236 = vld [vmem:[%s3 + $0xc0] sm:$0xff]
  %v237 = vld [vmem:[%s3 + $0xc8] sm:$0xff]
  %v238 = vld [vmem:[%s3 + $0xd0] sm:$0xff]
  %v239 = vld [vmem:[%s3 + $0xd8] sm:$0xff]
  %v240 = vld [vmem:[%s3 + $0xe0] sm:$0xff]
  %v241 = vld [vmem:[%s3 + $0xe8] sm:$0xff]
  %v242 = vld [vmem:[%s3 + $0xf0] sm:$0xff]
  %v243 = vld [vmem:[%s3 + $0xf8] sm:$0xff]
  %v244 = vld [vmem:[%s3 + $0x100] sm:$0xff]
  %v245 = vld [vmem:[%s3 + $0x108] sm:$0xff]
  %v246 = vld [vmem:[%s3 + $0x110] sm:$0xff]
  %v247 = vld [vmem:[%s3 + $0x118] sm:$0xff]
  %v248 = vld [vmem:[%s3 + $0x120] sm:$0xff]
  %v249 = vld [vmem:[%s3 + $0x128] sm:$0xff]
  %v250 = vld [vmem:[%s3 + $0x130] sm:$0xff]
  %v251 = vld [vmem:[%s3 + $0x138] sm:$0xff]
  %v252 = vld [vmem:[%s3 + $0x140] sm:$0xff]
  %v253 = vld [vmem:[%s3 + $0x148] sm:$0xff]
  %v254 = vld [vmem:[%s3 + $0x150] sm:$0xff]
  %v255 = vld [vmem:[%s3 + $0x158] sm:$0xff]
  %v256 = vld [vmem:[%s3 + $0x160] sm:$0xff]
  %v257 = vld [vmem:[%s3 + $0x168] sm:$0xff]
  %v258 = vld [vmem:[%s3 + $0x170] sm:$0xff]
  %v259 = vld [vmem:[%s3 + $0x178] sm:$0xff]
  %v260 = vld [vmem:[%s3 + $0x180] sm:$0xff]
  %v261 = vld [vmem:[%s3 + $0x188] sm:$0xff]
  %v262 = vld [vmem:[%s3 + $0x190] sm:$0xff]
  %v263 = vld [vmem:[%s3 + $0x198] sm:$0xff]
  %v264 = vld [vmem:[%s3 + $0x1a0] sm:$0xff]
  %v265 = vld [vmem:[%s3 + $0x1a8] sm:$0xff]
  %v266 = vld [vmem:[%s3 + $0x1b0] sm:$0xff]
  %v267 = vld [vmem:[%s3 + $0x1b8] sm:$0xff]
  %v268 = vld [vmem:[%s3 + $0x1c0] sm:$0xff]
  %v269 = vld [vmem:[%s3 + $0x1c8] sm:$0xff]
  %v270 = vld [vmem:[%s3 + $0x1d0] sm:$0xff]
  %v271 = vld [vmem:[%s3 + $0x1d8] sm:$0xff]
  %v272 = vld [vmem:[%s3 + $0x1e0] sm:$0xff]
  %v273 = vld [vmem:[%s3 + $0x1e8] sm:$0xff]
  %v274 = vld [vmem:[%s3 + $0x1f0] sm:$0xff]
  %v275 = vld [vmem:[%s3 + $0x1f8] sm:$0xff]
  %v276 = vld [vmem:[%s4] sm:$0xff]
  %v277 = vld [vmem:[%s4 + $0x8] sm:$0xff]
  %v278 = vld [vmem:[%s4 + $0x10] sm:$0xff]
  %v279 = vld [vmem:[%s4 + $0x18] sm:$0xff]
  %v280 = vld [vmem:[%s4 + $0x20] sm:$0xff]
  %v281 = vld [vmem:[%s4 + $0x28] sm:$0xff]
  %v282 = vld [vmem:[%s4 + $0x30] sm:$0xff]
  %v283 = vld [vmem:[%s4 + $0x38] sm:$0xff]
  %v284 = vld [vmem:[%s4 + $0x40] sm:$0xff]
  %v285 = vld [vmem:[%s4 + $0x48] sm:$0xff]
  %v286 = vld [vmem:[%s4 + $0x50] sm:$0xff]
  %v287 = vld [vmem:[%s4 + $0x58] sm:$0xff]
  %v288 = vld [vmem:[%s4 + $0x60] sm:$0xff]
  %v289 = vld [vmem:[%s4 + $0x68] sm:$0xff]
  %v290 = vld [vmem:[%s4 + $0x70] sm:$0xff]
  %v291 = vld [vmem:[%s4 + $0x78] sm:$0xff]
  %v292 = vld [vmem:[%s4 + $0x80] sm:$0xff]
  %v293 = vld [vmem:[%s4 + $0x88] sm:$0xff]
  %v294 = vld [vmem:[%s4 + $0x90] sm:$0xff]
  %v295 = vld [vmem:[%s4 + $0x98] sm:$0xff]
  %v296 = vld [vmem:[%s4 + $0xa0] sm:$0xff]
  %v297 = vld [vmem:[%s4 + $0xa8] sm:$0xff]
  %v298 = vld [vmem:[%s4 + $0xb0] sm:$0xff]
  %v299 = vld [vmem:[%s4 + $0xb8] sm:$0xff]
  %v300 = vld [vmem:[%s4 + $0xc0] sm:$0xff]
  %v301 = vld [vmem:[%s4 + $0xc8] sm:$0xff]
  %v302 = vld [vmem:[%s4 + $0xd0] sm:$0xff]
  %v303 = vld [vmem:[%s4 + $0xd8] sm:$0xff]
  %v304 = vld [vmem:[%s4 + $0xe0] sm:$0xff]
  %v305 = vld [vmem:[%s4 + $0xe8] sm:$0xff]
  %v306 = vld [vmem:[%s4 + $0xf0] sm:$0xff]
  %v307 = vld [vmem:[%s4 + $0xf8] sm:$0xff]
  %v308 = vld [vmem:[%s4 + $0x100] sm:$0xff]
  %v309 = vld [vmem:[%s4 + $0x108] sm:$0xff]
  %v310 = vld [vmem:[%s4 + $0x110] sm:$0xff]
  %v311 = vld [vmem:[%s4 + $0x118] sm:$0xff]
  %v312 = vld [vmem:[%s4 + $0x120] sm:$0xff]
  %v313 = vld [vmem:[%s4 + $0x128] sm:$0xff]
  %v314 = vld [vmem:[%s4 + $0x130] sm:$0xff]
  %v315 = vld [vmem:[%s4 + $0x138] sm:$0xff]
  %v316 = vld [vmem:[%s4 + $0x140] sm:$0xff]
  %v317 = vld [vmem:[%s4 + $0x148] sm:$0xff]
  %v318 = vld [vmem:[%s4 + $0x150] sm:$0xff]
  %v319 = vld [vmem:[%s4 + $0x158] sm:$0xff]
  %v320 = vld [vmem:[%s4 + $0x160] sm:$0xff]
  %v321 = vld [vmem:[%s4 + $0x168] sm:$0xff]
  %v322 = vld [vmem:[%s4 + $0x170] sm:$0xff]
  %v323 = vld [vmem:[%s4 + $0x178] sm:$0xff]
  %v324 = vld [vmem:[%s4 + $0x180] sm:$0xff]
  %v325 = vld [vmem:[%s4 + $0x188] sm:$0xff]
  %v326 = vld [vmem:[%s4 + $0x190] sm:$0xff]
  %v327 = vld [vmem:[%s4 + $0x198] sm:$0xff]
  %v328 = vld [vmem:[%s4 + $0x1a0] sm:$0xff]
  %v329 = vld [vmem:[%s4 + $0x1a8] sm:$0xff]
  %v330 = vld [vmem:[%s4 + $0x1b0] sm:$0xff]
  %v331 = vld [vmem:[%s4 + $0x1b8] sm:$0xff]
  %v332 = vld [vmem:[%s4 + $0x1c0] sm:$0xff]
  %v333 = vld [vmem:[%s4 + $0x1c8] sm:$0xff]
  %v334 = vld [vmem:[%s4 + $0x1d0] sm:$0xff]
  %v335 = vld [vmem:[%s4 + $0x1d8] sm:$0xff]
  %v336 = vld [vmem:[%s4 + $0x1e0] sm:$0xff]
  %v337 = vld [vmem:[%s4 + $0x1e8] sm:$0xff]
  %v338 = vld [vmem:[%s4 + $0x1f0] sm:$0xff]
  %v339 = vld [vmem:[%s4 + $0x1f8] sm:$0xff]
  %v340 = vld [vmem:[%s5] sm:$0xff]
  %v341 = vld [vmem:[%s5 + $0x8] sm:$0xff]
  %v342 = vld [vmem:[%s5 + $0x10] sm:$0xff]
  %v343 = vld [vmem:[%s5 + $0x18] sm:$0xff]
  %v344 = vld [vmem:[%s5 + $0x20] sm:$0xff]
  %v345 = vld [vmem:[%s5 + $0x28] sm:$0xff]
  %v346 = vld [vmem:[%s5 + $0x30] sm:$0xff]
  %v347 = vld [vmem:[%s5 + $0x38] sm:$0xff]
  %v348 = vld [vmem:[%s5 + $0x40] sm:$0xff]
  %v349 = vld [vmem:[%s5 + $0x48] sm:$0xff]
  %v350 = vld [vmem:[%s5 + $0x50] sm:$0xff]
  %v351 = vld [vmem:[%s5 + $0x58] sm:$0xff]
  %v352 = vld [vmem:[%s5 + $0x60] sm:$0xff]
  %v353 = vld [vmem:[%s5 + $0x68] sm:$0xff]
  %v354 = vld [vmem:[%s5 + $0x70] sm:$0xff]
  %v355 = vld [vmem:[%s5 + $0x78] sm:$0xff]
  %v356 = vld [vmem:[%s6] sm:$0xff]
  %v357 = vld [vmem:[%s6 + $0x8] sm:$0xff]
  %v358 = vld [vmem:[%s6 + $0x10] sm:$0xff]
  %v359 = vld [vmem:[%s6 + $0x18] sm:$0xff]
  %v360 = vld [vmem:[%s6 + $0x20] sm:$0xff]
  %v361 = vld [vmem:[%s6 + $0x28] sm:$0xff]
  %v362 = vld [vmem:[%s6 + $0x30] sm:$0xff]
  %v363 = vld [vmem:[%s6 + $0x38] sm:$0xff]
  %v364 = vld [vmem:[%s6 + $0x40] sm:$0xff]
  %v365 = vld [vmem:[%s6 + $0x48] sm:$0xff]
  %v366 = vld [vmem:[%s6 + $0x50] sm:$0xff]
  %v367 = vld [vmem:[%s6 + $0x58] sm:$0xff]
  %v368 = vld [vmem:[%s6 + $0x60] sm:$0xff]
  %v369 = vld [vmem:[%s6 + $0x68] sm:$0xff]
  %v370 = vld [vmem:[%s6 + $0x70] sm:$0xff]
  %v371 = vld [vmem:[%s6 + $0x78] sm:$0xff]
  %v372 = vld [vmem:[%s7] sm:$0xf]
  %v373 = vld [vmem:[%s7 + $0x4] sm:$0xf]
  %v374 = vld [vmem:[%s7 + $0x8] sm:$0xf]
  %v375 = vld [vmem:[%s7 + $0xc] sm:$0xf]
  %v376 = vld [vmem:[%s7 + $0x10] sm:$0xf]
  %v377 = vld [vmem:[%s7 + $0x14] sm:$0xf]
  %v378 = vld [vmem:[%s7 + $0x18] sm:$0xf]
  %v379 = vld [vmem:[%s7 + $0x1c] sm:$0xf]
  %v380 = vld [vmem:[%s7 + $0x20] sm:$0xf]
  %v381 = vld [vmem:[%s7 + $0x24] sm:$0xf]
  %v382 = vld [vmem:[%s7 + $0x28] sm:$0xf]
  %v383 = vld [vmem:[%s7 + $0x2c] sm:$0xf]
  %v384 = vld [vmem:[%s7 + $0x30] sm:$0xf]
  %v385 = vld [vmem:[%s7 + $0x34] sm:$0xf]
  %v386 = vld [vmem:[%s7 + $0x38] sm:$0xf]
  %v387 = vld [vmem:[%s7 + $0x3c] sm:$0xf]
  %v388 = vld [vmem:[%s8] sm:$0xf]
  %v389 = vld [vmem:[%s8 + $0x4] sm:$0xf]
  %v390 = vld [vmem:[%s8 + $0x8] sm:$0xf]
  %v391 = vld [vmem:[%s8 + $0xc] sm:$0xf]
  %v392 = vld [vmem:[%s8 + $0x10] sm:$0xf]
  %v393 = vld [vmem:[%s8 + $0x14] sm:$0xf]
  %v394 = vld [vmem:[%s8 + $0x18] sm:$0xf]
  %v395 = vld [vmem:[%s8 + $0x1c] sm:$0xf]
  %v396 = vpack.c.bf16 %v357, %v356
  %v397 = vpack.c.bf16 %v359, %v358
  %v398 = vpack.c.bf16 %v361, %v360
  %v399 = vpack.c.bf16 %v363, %v362
  %v400 = vpack.c.bf16 %v365, %v364
  %v401 = vpack.c.bf16 %v367, %v366
  %v402 = vpack.c.bf16 %v369, %v368
  %v403 = vpack.c.bf16 %v371, %v370
  %v406 = vunpack.c.l.b16 %v372
  %v407 = vunpack.c.l.b16 %v373
  %v408 = vpack.c.b16 %v407, %v406
  %vm410 = vcmask 130048
  %v412 = vsel %vm410, %v396, 0
  %v415 = vsel %vm410, %v397, 0
  %417 = vmatprep.subr.bf16.mxu0 0
  %418 = vmatpush1.bf16.msra.mxu0 %v408
  %419 = vmatprep.subr.bf16.mxu0 0
  %420 = vmatpush1.bf16.msra.mxu0 0
  %421 = vmatprep.subr.bf16.mxu0 0
  %422 = vmatpush1.bf16.msra.mxu0 0
  %423 = vmatprep.subr.bf16.mxu0 0
  %424 = vmatpush1.bf16.msra.mxu0 0
  %425 = vmatprep.subr.bf16.mxu0 0
  %426 = vmatpush1.bf16.msra.mxu0 0
  %427 = vmatprep.subr.bf16.mxu0 0
  %428 = vmatpush1.bf16.msra.mxu0 0
  %429 = vmatprep.subr.bf16.mxu0 0
  %430 = vmatpush1.bf16.msra.mxu0 0
  %431 = vmatprep.subr.bf16.mxu0 0
  %432 = vmatpush1.bf16.msra.mxu0 0
  %433 = vmatprep.subr.bf16.mxu0 0
  %434 = vmatpush1.bf16.msra.mxu0 0
  %435 = vmatprep.subr.bf16.mxu0 0
  %436 = vmatpush1.bf16.msra.mxu0 0
  %437 = vmatprep.subr.bf16.mxu0 0
  %438 = vmatpush1.bf16.msra.mxu0 0
  %439 = vmatprep.subr.bf16.mxu0 0
  %440 = vmatpush1.bf16.msra.mxu0 0
  %441 = vmatprep.subr.bf16.mxu0 0
  %442 = vmatpush1.bf16.msra.mxu0 0
  %443 = vmatprep.subr.bf16.mxu0 0
  %444 = vmatpush1.bf16.msra.mxu0 0
  %445 = vmatprep.subr.bf16.mxu0 0
  %446 = vmatpush1.bf16.msra.mxu0 0
  %447 = vmatprep.subr.bf16.mxu0 0
  %448 = vmatpush1.bf16.msra.mxu0 0
  %449 = vmatprep.mubr.bf16.mxu0 0
  %450 = vmatmul.mubr.bf16.gmra.mrb[0].mxu0 %v412
  %v451 = vpop.f32.mrb[0].mxu0
  %v452 = vadd.f32 0.0, %v451
  %v453 = vpop.f32.mrb[0].mxu0
  %v454 = vpop.f32.mrb[0].mxu0
  %v455 = vadd.f32 0.0, %v454
  %v456 = vpop.f32.mrb[0].mxu0
  %457 = vmatprep.mubr.bf16.mxu0 0
  %458 = vmatmul.mubr.bf16.gmra.mrb[0].mxu0 %v415
  %v459 = vpop.f32.mrb[0].mxu0
  %v460 = vadd.f32 0.0, %v459
  %v461 = vpop.f32.mrb[0].mxu0
  %v462 = vpop.f32.mrb[0].mxu0
  %v463 = vadd.f32 0.0, %v462
  %v464 = vpop.f32.mrb[0].mxu0
  %465 = vdwg.mxu0
  %v468 = vunpack.c.l.b16 %v374
  %v469 = vunpack.c.l.b16 %v375
  %v470 = vpack.c.b16 %v469, %v468
  %v473 = vsel %vm410, %v398, 0
  %v476 = vsel %vm410, %v399, 0
  %478 = vmatprep.subr.bf16.mxu0 0
  %479 = vmatpush1.bf16.msra.mxu0 %v470
  %480 = vmatprep.subr.bf16.mxu0 0
  %481 = vmatpush1.bf16.msra.mxu0 0
  %482 = vmatprep.subr.bf16.mxu0 0
  %483 = vmatpush1.bf16.msra.mxu0 0
  %484 = vmatprep.subr.bf16.mxu0 0
  %485 = vmatpush1.bf16.msra.mxu0 0
  %486 = vmatprep.subr.bf16.mxu0 0
  %487 = vmatpush1.bf16.msra.mxu0 0
  %488 = vmatprep.subr.bf16.mxu0 0
  %489 = vmatpush1.bf16.msra.mxu0 0
  %490 = vmatprep.subr.bf16.mxu0 0
  %491 = vmatpush1.bf16.msra.mxu0 0
  %492 = vmatprep.subr.bf16.mxu0 0
  %493 = vmatpush1.bf16.msra.mxu0 0
  %494 = vmatprep.subr.bf16.mxu0 0
  %495 = vmatpush1.bf16.msra.mxu0 0
  %496 = vmatprep.subr.bf16.mxu0 0
  %497 = vmatpush1.bf16.msra.mxu0 0
  %498 = vmatprep.subr.bf16.mxu0 0
  %499 = vmatpush1.bf16.msra.mxu0 0
  %500 = vmatprep.subr.bf16.mxu0 0
  %501 = vmatpush1.bf16.msra.mxu0 0
  %502 = vmatprep.subr.bf16.mxu0 0
  %503 = vmatpush1.bf16.msra.mxu0 0
  %504 = vmatprep.subr.bf16.mxu0 0
  %505 = vmatpush1.bf16.msra.mxu0 0
  %506 = vmatprep.subr.bf16.mxu0 0
  %507 = vmatpush1.bf16.msra.mxu0 0
  %508 = vmatprep.subr.bf16.mxu0 0
  %509 = vmatpush1.bf16.msra.mxu0 0
  %510 = vmatprep.mubr.bf16.mxu0 0
  %511 = vmatmul.mubr.bf16.gmra.mrb[0].mxu0 %v473
  %v512 = vpop.f32.mrb[0].mxu0
  %v513 = vadd.f32 0.0, %v512
  %v514 = vpop.f32.mrb[0].mxu0
  %v515 = vpop.f32.mrb[0].mxu0
  %v516 = vadd.f32 0.0, %v515
  %v517 = vpop.f32.mrb[0].mxu0
  %518 = vmatprep.mubr.bf16.mxu0 0
  %519 = vmatmul.mubr.bf16.gmra.mrb[0].mxu0 %v476
  %v520 = vpop.f32.mrb[0].mxu0
  %v521 = vadd.f32 0.0, %v520
  %v522 = vpop.f32.mrb[0].mxu0
  %v523 = vpop.f32.mrb[0].mxu0
  %v524 = vadd.f32 0.0, %v523
  %v525 = vpop.f32.mrb[0].mxu0
  %526 = vdwg.mxu0
  %v529 = vunpack.c.l.b16 %v376
  %v530 = vunpack.c.l.b16 %v377
  %v531 = vpack.c.b16 %v530, %v529
  %v534 = vsel %vm410, %v400, 0
  %v537 = vsel %vm410, %v401, 0
  %539 = vmatprep.subr.bf16.mxu0 0
  %540 = vmatpush1.bf16.msra.mxu0 %v531
  %541 = vmatprep.subr.bf16.mxu0 0
  %542 = vmatpush1.bf16.msra.mxu0 0
  %543 = vmatprep.subr.bf16.mxu0 0
  %544 = vmatpush1.bf16.msra.mxu0 0
  %545 = vmatprep.subr.bf16.mxu0 0
  %546 = vmatpush1.bf16.msra.mxu0 0
  %547 = vmatprep.subr.bf16.mxu0 0
  %548 = vmatpush1.bf16.msra.mxu0 0
  %549 = vmatprep.subr.bf16.mxu0 0
  %550 = vmatpush1.bf16.msra.mxu0 0
  %551 = vmatprep.subr.bf16.mxu0 0
  %552 = vmatpush1.bf16.msra.mxu0 0
  %553 = vmatprep.subr.bf16.mxu0 0
  %554 = vmatpush1.bf16.msra.mxu0 0
  %555 = vmatprep.subr.bf16.mxu0 0
  %556 = vmatpush1.bf16.msra.mxu0 0
  %557 = vmatprep.subr.bf16.mxu0 0
  %558 = vmatpush1.bf16.msra.mxu0 0
  %559 = vmatprep.subr.bf16.mxu0 0
  %560 = vmatpush1.bf16.msra.mxu0 0
  %561 = vmatprep.subr.bf16.mxu0 0
  %562 = vmatpush1.bf16.msra.mxu0 0
  %563 = vmatprep.subr.bf16.mxu0 0
  %564 = vmatpush1.bf16.msra.mxu0 0
  %565 = vmatprep.subr.bf16.mxu0 0
  %566 = vmatpush1.bf16.msra.mxu0 0
  %567 = vmatprep.subr.bf16.mxu0 0
  %568 = vmatpush1.bf16.msra.mxu0 0
  %569 = vmatprep.subr.bf16.mxu0 0
  %570 = vmatpush1.bf16.msra.mxu0 0
  %571 = vmatprep.mubr.bf16.mxu0 0
  %572 = vmatmul.mubr.bf16.gmra.mrb[0].mxu0 %v534
  %v573 = vpop.f32.mrb[0].mxu0
  %v574 = vadd.f32 0.0, %v573
  %v575 = vpop.f32.mrb[0].mxu0
  %v576 = vpop.f32.mrb[0].mxu0
  %v577 = vadd.f32 0.0, %v576
  %v578 = vpop.f32.mrb[0].mxu0
  %579 = vmatprep.mubr.bf16.mxu0 0
  %580 = vmatmul.mubr.bf16.gmra.mrb[0].mxu0 %v537
  %v581 = vpop.f32.mrb[0].mxu0
  %v582 = vadd.f32 0.0, %v581
  %v583 = vpop.f32.mrb[0].mxu0
  %v584 = vpop.f32.mrb[0].mxu0
  %v585 = vadd.f32 0.0, %v584
  %v586 = vpop.f32.mrb[0].mxu0
  %587 = vdwg.mxu0
  %v590 = vunpack.c.l.b16 %v378
  %v591 = vunpack.c.l.b16 %v379
  %v592 = vpack.c.b16 %v591, %v590
  %v595 = vsel %vm410, %v402, 0
  %v598 = vsel %vm410, %v403, 0
  %600 = vmatprep.subr.bf16.mxu0 0
  %601 = vmatpush1.bf16.msra.mxu0 %v592
  %602 = vmatprep.subr.bf16.mxu0 0
  %603 = vmatpush1.bf16.msra.mxu0 0
  %604 = vmatprep.subr.bf16.mxu0 0
  %605 = vmatpush1.bf16.msra.mxu0 0
  %606 = vmatprep.subr.bf16.mxu0 0
  %607 = vmatpush1.bf16.msra.mxu0 0
  %608 = vmatprep.subr.bf16.mxu0 0
  %609 = vmatpush1.bf16.msra.mxu0 0
  %610 = vmatprep.subr.bf16.mxu0 0
  %611 = vmatpush1.bf16.msra.mxu0 0
  %612 = vmatprep.subr.bf16.mxu0 0
  %613 = vmatpush1.bf16.msra.mxu0 0
  %614 = vmatprep.subr.bf16.mxu0 0
  %615 = vmatpush1.bf16.msra.mxu0 0
  %616 = vmatprep.subr.bf16.mxu0 0
  %617 = vmatpush1.bf16.msra.mxu0 0
  %618 = vmatprep.subr.bf16.mxu0 0
  %619 = vmatpush1.bf16.msra.mxu0 0
  %620 = vmatprep.subr.bf16.mxu0 0
  %621 = vmatpush1.bf16.msra.mxu0 0
  %622 = vmatprep.subr.bf16.mxu0 0
  %623 = vmatpush1.bf16.msra.mxu0 0
  %624 = vmatprep.subr.bf16.mxu0 0
  %625 = vmatpush1.bf16.msra.mxu0 0
  %626 = vmatprep.subr.bf16.mxu0 0
  %627 = vmatpush1.bf16.msra.mxu0 0
  %628 = vmatprep.subr.bf16.mxu0 0
  %629 = vmatpush1.bf16.msra.mxu0 0
  %630 = vmatprep.subr.bf16.mxu0 0
  %631 = vmatpush1.bf16.msra.mxu0 0
  %632 = vmatprep.mubr.bf16.mxu0 0
  %633 = vmatmul.mubr.bf16.gmra.mrb[0].mxu0 %v595
  %v634 = vpop.f32.mrb[0].mxu0
  %v635 = vadd.f32 0.0, %v634
  %v636 = vpop.f32.mrb[0].mxu0
  %v637 = vpop.f32.mrb[0].mxu0
  %v638 = vadd.f32 0.0, %v637
  %v639 = vpop.f32.mrb[0].mxu0
  %640 = vmatprep.mubr.bf16.mxu0 0
  %641 = vmatmul.mubr.bf16.gmra.mrb[0].mxu0 %v598
  %v642 = vpop.f32.mrb[0].mxu0
  %v643 = vadd.f32 0.0, %v642
  %v644 = vpop.f32.mrb[0].mxu0
  %v645 = vpop.f32.mrb[0].mxu0
  %v646 = vadd.f32 0.0, %v645
  %v647 = vpop.f32.mrb[0].mxu0
  %648 = vdwg.mxu0
  %v651 = vunpack.c.l.b16 %v380
  %v652 = vunpack.c.l.b16 %v381
  %v653 = vpack.c.b16 %v652, %v651
  %655 = vmatprep.subr.bf16.mxu0 0
  %656 = vmatpush1.bf16.msra.mxu0 %v653
  %657 = vmatprep.subr.bf16.mxu0 0
  %658 = vmatpush1.bf16.msra.mxu0 0
  %659 = vmatprep.subr.bf16.mxu0 0
  %660 = vmatpush1.bf16.msra.mxu0 0
  %661 = vmatprep.subr.bf16.mxu0 0
  %662 = vmatpush1.bf16.msra.mxu0 0
  %663 = vmatprep.subr.bf16.mxu0 0
  %664 = vmatpush1.bf16.msra.mxu0 0
  %665 = vmatprep.subr.bf16.mxu0 0
  %666 = vmatpush1.bf16.msra.mxu0 0
  %667 = vmatprep.subr.bf16.mxu0 0
  %668 = vmatpush1.bf16.msra.mxu0 0
  %669 = vmatprep.subr.bf16.mxu0 0
  %670 = vmatpush1.bf16.msra.mxu0 0
  %671 = vmatprep.subr.bf16.mxu0 0
  %672 = vmatpush1.bf16.msra.mxu0 0
  %673 = vmatprep.subr.bf16.mxu0 0
  %674 = vmatpush1.bf16.msra.mxu0 0
  %675 = vmatprep.subr.bf16.mxu0 0
  %676 = vmatpush1.bf16.msra.mxu0 0
  %677 = vmatprep.subr.bf16.mxu0 0
  %678 = vmatpush1.bf16.msra.mxu0 0
  %679 = vmatprep.subr.bf16.mxu0 0
  %680 = vmatpush1.bf16.msra.mxu0 0
  %681 = vmatprep.subr.bf16.mxu0 0
  %682 = vmatpush1.bf16.msra.mxu0 0
  %683 = vmatprep.subr.bf16.mxu0 0
  %684 = vmatpush1.bf16.msra.mxu0 0
  %685 = vmatprep.subr.bf16.mxu0 0
  %686 = vmatpush1.bf16.msra.mxu0 0
  %687 = vmatprep.mubr.bf16.mxu0 0
  %688 = vmatmul.mubr.bf16.gmra.mrb[0].mxu0 %v412
  %v689 = vpop.f32.mrb[0].mxu0
  %v690 = vadd.f32 0.0, %v689
  %v691 = vpop.f32.mrb[0].mxu0
  %v692 = vpop.f32.mrb[0].mxu0
  %v693 = vadd.f32 0.0, %v692
  %v694 = vpop.f32.mrb[0].mxu0
  %695 = vmatprep.mubr.bf16.mxu0 0
  %696 = vmatmul.mubr.bf16.gmra.mrb[0].mxu0 %v415
  %v697 = vpop.f32.mrb[0].mxu0
  %v698 = vadd.f32 0.0, %v697
  %v699 = vpop.f32.mrb[0].mxu0
  %v700 = vpop.f32.mrb[0].mxu0
  %v701 = vadd.f32 0.0, %v700
  %v702 = vpop.f32.mrb[0].mxu0
  %703 = vdwg.mxu0
  %v706 = vunpack.c.l.b16 %v382
  %v707 = vunpack.c.l.b16 %v383
  %v708 = vpack.c.b16 %v707, %v706
  %710 = vmatprep.subr.bf16.mxu0 0
  %711 = vmatpush1.bf16.msra.mxu0 %v708
  %712 = vmatprep.subr.bf16.mxu0 0
  %713 = vmatpush1.bf16.msra.mxu0 0
  %714 = vmatprep.subr.bf16.mxu0 0
  %715 = vmatpush1.bf16.msra.mxu0 0
  %716 = vmatprep.subr.bf16.mxu0 0
  %717 = vmatpush1.bf16.msra.mxu0 0
  %718 = vmatprep.subr.bf16.mxu0 0
  %719 = vmatpush1.bf16.msra.mxu0 0
  %720 = vmatprep.subr.bf16.mxu0 0
  %721 = vmatpush1.bf16.msra.mxu0 0
  %722 = vmatprep.subr.bf16.mxu0 0
  %723 = vmatpush1.bf16.msra.mxu0 0
  %724 = vmatprep.subr.bf16.mxu0 0
  %725 = vmatpush1.bf16.msra.mxu0 0
  %726 = vmatprep.subr.bf16.mxu0 0
  %727 = vmatpush1.bf16.msra.mxu0 0
  %728 = vmatprep.subr.bf16.mxu0 0
  %729 = vmatpush1.bf16.msra.mxu0 0
  %730 = vmatprep.subr.bf16.mxu0 0
  %731 = vmatpush1.bf16.msra.mxu0 0
  %732 = vmatprep.subr.bf16.mxu0 0
  %733 = vmatpush1.bf16.msra.mxu0 0
  %734 = vmatprep.subr.bf16.mxu0 0
  %735 = vmatpush1.bf16.msra.mxu0 0
  %736 = vmatprep.subr.bf16.mxu0 0
  %737 = vmatpush1.bf16.msra.mxu0 0
  %738 = vmatprep.subr.bf16.mxu0 0
  %739 = vmatpush1.bf16.msra.mxu0 0
  %740 = vmatprep.subr.bf16.mxu0 0
  %741 = vmatpush1.bf16.msra.mxu0 0
  %742 = vmatprep.mubr.bf16.mxu0 0
  %743 = vmatmul.mubr.bf16.gmra.mrb[0].mxu0 %v473
  %v744 = vpop.f32.mrb[0].mxu0
  %v745 = vadd.f32 0.0, %v744
  %v746 = vpop.f32.mrb[0].mxu0
  %v747 = vpop.f32.mrb[0].mxu0
  %v748 = vadd.f32 0.0, %v747
  %v749 = vpop.f32.mrb[0].mxu0
  %750 = vmatprep.mubr.bf16.mxu0 0
  %751 = vmatmul.mubr.bf16.gmra.mrb[0].mxu0 %v476
  %v752 = vpop.f32.mrb[0].mxu0
  %v753 = vadd.f32 0.0, %v752
  %v754 = vpop.f32.mrb[0].mxu0
  %v755 = vpop.f32.mrb[0].mxu0
  %v756 = vadd.f32 0.0, %v755
  %v757 = vpop.f32.mrb[0].mxu0
  %758 = vdwg.mxu0
  %v761 = vunpack.c.l.b16 %v384
  %v762 = vunpack.c.l.b16 %v385
  %v763 = vpack.c.b16 %v762, %v761
  %765 = vmatprep.subr.bf16.mxu0 0
  %766 = vmatpush1.bf16.msra.mxu0 %v763
  %767 = vmatprep.subr.bf16.mxu0 0
  %768 = vmatpush1.bf16.msra.mxu0 0
  %769 = vmatprep.subr.bf16.mxu0 0
  %770 = vmatpush1.bf16.msra.mxu0 0
  %771 = vmatprep.subr.bf16.mxu0 0
  %772 = vmatpush1.bf16.msra.mxu0 0
  %773 = vmatprep.subr.bf16.mxu0 0
  %774 = vmatpush1.bf16.msra.mxu0 0
  %775 = vmatprep.subr.bf16.mxu0 0
  %776 = vmatpush1.bf16.msra.mxu0 0
  %777 = vmatprep.subr.bf16.mxu0 0
  %778 = vmatpush1.bf16.msra.mxu0 0
  %779 = vmatprep.subr.bf16.mxu0 0
  %780 = vmatpush1.bf16.msra.mxu0 0
  %781 = vmatprep.subr.bf16.mxu0 0
  %782 = vmatpush1.bf16.msra.mxu0 0
  %783 = vmatprep.subr.bf16.mxu0 0
  %784 = vmatpush1.bf16.msra.mxu0 0
  %785 = vmatprep.subr.bf16.mxu0 0
  %786 = vmatpush1.bf16.msra.mxu0 0
  %787 = vmatprep.subr.bf16.mxu0 0
  %788 = vmatpush1.bf16.msra.mxu0 0
  %789 = vmatprep.subr.bf16.mxu0 0
  %790 = vmatpush1.bf16.msra.mxu0 0
  %791 = vmatprep.subr.bf16.mxu0 0
  %792 = vmatpush1.bf16.msra.mxu0 0
  %793 = vmatprep.subr.bf16.mxu0 0
  %794 = vmatpush1.bf16.msra.mxu0 0
  %795 = vmatprep.subr.bf16.mxu0 0
  %796 = vmatpush1.bf16.msra.mxu0 0
  %797 = vmatprep.mubr.bf16.mxu0 0
  %798 = vmatmul.mubr.bf16.gmra.mrb[0].mxu0 %v534
  %v799 = vpop.f32.mrb[0].mxu0
  %v800 = vadd.f32 0.0, %v799
  %v801 = vpop.f32.mrb[0].mxu0
  %v802 = vpop.f32.mrb[0].mxu0
  %v803 = vadd.f32 0.0, %v802
  %v804 = vpop.f32.mrb[0].mxu0
  %805 = vmatprep.mubr.bf16.mxu0 0
  %806 = vmatmul.mubr.bf16.gmra.mrb[0].mxu0 %v537
  %v807 = vpop.f32.mrb[0].mxu0
  %v808 = vadd.f32 0.0, %v807
  %v809 = vpop.f32.mrb[0].mxu0
  %v810 = vpop.f32.mrb[0].mxu0
  %v811 = vadd.f32 0.0, %v810
  %v812 = vpop.f32.mrb[0].mxu0
  %813 = vdwg.mxu0
  %v816 = vunpack.c.l.b16 %v386
  %v817 = vunpack.c.l.b16 %v387
  %v818 = vpack.c.b16 %v817, %v816
  %820 = vmatprep.subr.bf16.mxu0 0
  %821 = vmatpush1.bf16.msra.mxu0 %v818
  %822 = vmatprep.subr.bf16.mxu0 0
  %823 = vmatpush1.bf16.msra.mxu0 0
  %824 = vmatprep.subr.bf16.mxu0 0
  %825 = vmatpush1.bf16.msra.mxu0 0
  %826 = vmatprep.subr.bf16.mxu0 0
  %827 = vmatpush1.bf16.msra.mxu0 0
  %828 = vmatprep.subr.bf16.mxu0 0
  %829 = vmatpush1.bf16.msra.mxu0 0
  %830 = vmatprep.subr.bf16.mxu0 0
  %831 = vmatpush1.bf16.msra.mxu0 0
  %832 = vmatprep.subr.bf16.mxu0 0
  %833 = vmatpush1.bf16.msra.mxu0 0
  %834 = vmatprep.subr.bf16.mxu0 0
  %835 = vmatpush1.bf16.msra.mxu0 0
  %836 = vmatprep.subr.bf16.mxu0 0
  %837 = vmatpush1.bf16.msra.mxu0 0
  %838 = vmatprep.subr.bf16.mxu0 0
  %839 = vmatpush1.bf16.msra.mxu0 0
  %840 = vmatprep.subr.bf16.mxu0 0
  %841 = vmatpush1.bf16.msra.mxu0 0
  %842 = vmatprep.subr.bf16.mxu0 0
  %843 = vmatpush1.bf16.msra.mxu0 0
  %844 = vmatprep.subr.bf16.mxu0 0
  %845 = vmatpush1.bf16.msra.mxu0 0
  %846 = vmatprep.subr.bf16.mxu0 0
  %847 = vmatpush1.bf16.msra.mxu0 0
  %848 = vmatprep.subr.bf16.mxu0 0
  %849 = vmatpush1.bf16.msra.mxu0 0
  %850 = vmatprep.subr.bf16.mxu0 0
  %851 = vmatpush1.bf16.msra.mxu0 0
  %852 = vmatprep.mubr.bf16.mxu0 0
  %853 = vmatmul.mubr.bf16.gmra.mrb[0].mxu0 %v595
  %v854 = vpop.f32.mrb[0].mxu0
  %v855 = vadd.f32 0.0, %v854
  %v856 = vpop.f32.mrb[0].mxu0
  %v857 = vpop.f32.mrb[0].mxu0
  %v858 = vadd.f32 0.0, %v857
  %v859 = vpop.f32.mrb[0].mxu0
  %860 = vmatprep.mubr.bf16.mxu0 0
  %861 = vmatmul.mubr.bf16.gmra.mrb[0].mxu0 %v598
  %v862 = vpop.f32.mrb[0].mxu0
  %v863 = vadd.f32 0.0, %v862
  %v864 = vpop.f32.mrb[0].mxu0
  %v865 = vpop.f32.mrb[0].mxu0
  %v866 = vadd.f32 0.0, %v865
  %v867 = vpop.f32.mrb[0].mxu0
  %868 = vdwg.mxu0
  %v869 = vadd.f32 %v212, %v452
  %v870 = vadd.f32 %v213, %v455
  %v871 = vadd.f32 %v214, %v460
  %v872 = vadd.f32 %v215, %v463
  %v873 = vadd.f32 %v216, %v513
  %v874 = vadd.f32 %v217, %v516
  %v875 = vadd.f32 %v218, %v521
  %v876 = vadd.f32 %v219, %v524
  %v877 = vadd.f32 %v220, %v574
  %v878 = vadd.f32 %v221, %v577
  %v879 = vadd.f32 %v222, %v582
  %v880 = vadd.f32 %v223, %v585
  %v881 = vadd.f32 %v224, %v635
  %v882 = vadd.f32 %v225, %v638
  %v883 = vadd.f32 %v226, %v643
  %v884 = vadd.f32 %v227, %v646
  %v885 = vadd.f32 %v869, %v276
  %v886 = vadd.f32 %v870, %v277
  %v887 = vadd.f32 %v871, %v278
  %v888 = vadd.f32 %v872, %v279
  %v889 = vadd.f32 %v873, %v280
  %v890 = vadd.f32 %v874, %v281
  %v891 = vadd.f32 %v875, %v282
  %v892 = vadd.f32 %v876, %v283
  %v893 = vadd.f32 %v877, %v284
  %v894 = vadd.f32 %v878, %v285
  %v895 = vadd.f32 %v879, %v286
  %v896 = vadd.f32 %v880, %v287
  %v897 = vadd.f32 %v881, %v288
  %v898 = vadd.f32 %v882, %v289
  %v899 = vadd.f32 %v883, %v290
  %v900 = vadd.f32 %v884, %v291
  %v901 = vmul.f32 %v885, 0.5
  %v902 = vmul.f32 %v886, 0.5
  %v903 = vmul.f32 %v887, 0.5
  %v904 = vmul.f32 %v888, 0.5
  %v905 = vmul.f32 %v889, 0.5
  %v906 = vmul.f32 %v890, 0.5
  %v907 = vmul.f32 %v891, 0.5
  %v908 = vmul.f32 %v892, 0.5
  %v909 = vmul.f32 %v893, 0.5
  %v910 = vmul.f32 %v894, 0.5
  %v911 = vmul.f32 %v895, 0.5
  %v912 = vmul.f32 %v896, 0.5
  %v913 = vmul.f32 %v897, 0.5
  %v914 = vmul.f32 %v898, 0.5
  %v915 = vmul.f32 %v899, 0.5
  %v916 = vmul.f32 %v900, 0.5
  %v917 = vtanh.pop %v901
  %v918 = vtanh.pop %v902
  %v919 = vtanh.pop %v903
  %v920 = vtanh.pop %v904
  %v921 = vtanh.pop %v905
  %v922 = vtanh.pop %v906
  %v923 = vtanh.pop %v907
  %v924 = vtanh.pop %v908
  %v925 = vtanh.pop %v909
  %v926 = vtanh.pop %v910
  %v927 = vtanh.pop %v911
  %v928 = vtanh.pop %v912
  %v929 = vtanh.pop %v913
  %v930 = vtanh.pop %v914
  %v931 = vtanh.pop %v915
  %v932 = vtanh.pop %v916
  %v933 = vmul.f32 %v917, 0.5
  %v934 = vmul.f32 %v918, 0.5
  %v935 = vmul.f32 %v919, 0.5
  %v936 = vmul.f32 %v920, 0.5
  %v937 = vmul.f32 %v921, 0.5
  %v938 = vmul.f32 %v922, 0.5
  %v939 = vmul.f32 %v923, 0.5
  %v940 = vmul.f32 %v924, 0.5
  %v941 = vmul.f32 %v925, 0.5
  %v942 = vmul.f32 %v926, 0.5
  %v943 = vmul.f32 %v927, 0.5
  %v944 = vmul.f32 %v928, 0.5
  %v945 = vmul.f32 %v929, 0.5
  %v946 = vmul.f32 %v930, 0.5
  %v947 = vmul.f32 %v931, 0.5
  %v948 = vmul.f32 %v932, 0.5
  %v949 = vadd.f32 %v933, 0.5
  %v950 = vadd.f32 %v934, 0.5
  %v951 = vadd.f32 %v935, 0.5
  %v952 = vadd.f32 %v936, 0.5
  %v953 = vadd.f32 %v937, 0.5
  %v954 = vadd.f32 %v938, 0.5
  %v955 = vadd.f32 %v939, 0.5
  %v956 = vadd.f32 %v940, 0.5
  %v957 = vadd.f32 %v941, 0.5
  %v958 = vadd.f32 %v942, 0.5
  %v959 = vadd.f32 %v943, 0.5
  %v960 = vadd.f32 %v944, 0.5
  %v961 = vadd.f32 %v945, 0.5
  %v962 = vadd.f32 %v946, 0.5
  %v963 = vadd.f32 %v947, 0.5
  %v964 = vadd.f32 %v948, 0.5
  %v965 = vadd.f32 %v228, %v292
  %v966 = vadd.f32 %v229, %v293
  %v967 = vadd.f32 %v230, %v294
  %v968 = vadd.f32 %v231, %v295
  %v969 = vadd.f32 %v232, %v296
  %v970 = vadd.f32 %v233, %v297
  %v971 = vadd.f32 %v234, %v298
  %v972 = vadd.f32 %v235, %v299
  %v973 = vadd.f32 %v236, %v300
  %v974 = vadd.f32 %v237, %v301
  %v975 = vadd.f32 %v238, %v302
  %v976 = vadd.f32 %v239, %v303
  %v977 = vadd.f32 %v240, %v304
  %v978 = vadd.f32 %v241, %v305
  %v979 = vadd.f32 %v242, %v306
  %v980 = vadd.f32 %v243, %v307
  %v981 = vtanh.pop %v965
  %v982 = vtanh.pop %v966
  %v983 = vtanh.pop %v967
  %v984 = vtanh.pop %v968
  %v985 = vtanh.pop %v969
  %v986 = vtanh.pop %v970
  %v987 = vtanh.pop %v971
  %v988 = vtanh.pop %v972
  %v989 = vtanh.pop %v973
  %v990 = vtanh.pop %v974
  %v991 = vtanh.pop %v975
  %v992 = vtanh.pop %v976
  %v993 = vtanh.pop %v977
  %v994 = vtanh.pop %v978
  %v995 = vtanh.pop %v979
  %v996 = vtanh.pop %v980
  %v997 = vadd.f32 %v244, %v690
  %v998 = vadd.f32 %v245, %v693
  %v999 = vadd.f32 %v246, %v698
  %v1000 = vadd.f32 %v247, %v701
  %v1001 = vadd.f32 %v248, %v745
  %v1002 = vadd.f32 %v249, %v748
  %v1003 = vadd.f32 %v250, %v753
  %v1004 = vadd.f32 %v251, %v756
  %v1005 = vadd.f32 %v252, %v800
  %v1006 = vadd.f32 %v253, %v803
  %v1007 = vadd.f32 %v254, %v808
  %v1008 = vadd.f32 %v255, %v811
  %v1009 = vadd.f32 %v256, %v855
  %v1010 = vadd.f32 %v257, %v858
  %v1011 = vadd.f32 %v258, %v863
  %v1012 = vadd.f32 %v259, %v866
  %v1013 = vadd.f32 %v997, %v308
  %v1014 = vadd.f32 %v998, %v309
  %v1015 = vadd.f32 %v999, %v310
  %v1016 = vadd.f32 %v1000, %v311
  %v1017 = vadd.f32 %v1001, %v312
  %v1018 = vadd.f32 %v1002, %v313
  %v1019 = vadd.f32 %v1003, %v314
  %v1020 = vadd.f32 %v1004, %v315
  %v1021 = vadd.f32 %v1005, %v316
  %v1022 = vadd.f32 %v1006, %v317
  %v1023 = vadd.f32 %v1007, %v318
  %v1024 = vadd.f32 %v1008, %v319
  %v1025 = vadd.f32 %v1009, %v320
  %v1026 = vadd.f32 %v1010, %v321
  %v1027 = vadd.f32 %v1011, %v322
  %v1028 = vadd.f32 %v1012, %v323
  %v1029 = vadd.f32 %v1013, 1.0
  %v1030 = vadd.f32 %v1014, 1.0
  %v1031 = vadd.f32 %v1015, 1.0
  %v1032 = vadd.f32 %v1016, 1.0
  %v1033 = vadd.f32 %v1017, 1.0
  %v1034 = vadd.f32 %v1018, 1.0
  %v1035 = vadd.f32 %v1019, 1.0
  %v1036 = vadd.f32 %v1020, 1.0
  %v1037 = vadd.f32 %v1021, 1.0
  %v1038 = vadd.f32 %v1022, 1.0
  %v1039 = vadd.f32 %v1023, 1.0
  %v1040 = vadd.f32 %v1024, 1.0
  %v1041 = vadd.f32 %v1025, 1.0
  %v1042 = vadd.f32 %v1026, 1.0
  %v1043 = vadd.f32 %v1027, 1.0
  %v1044 = vadd.f32 %v1028, 1.0
  %v1045 = vmul.f32 %v1029, 0.5
  %v1046 = vmul.f32 %v1030, 0.5
  %v1047 = vmul.f32 %v1031, 0.5
  %v1048 = vmul.f32 %v1032, 0.5
  %v1049 = vmul.f32 %v1033, 0.5
  %v1050 = vmul.f32 %v1034, 0.5
  %v1051 = vmul.f32 %v1035, 0.5
  %v1052 = vmul.f32 %v1036, 0.5
  %v1053 = vmul.f32 %v1037, 0.5
  %v1054 = vmul.f32 %v1038, 0.5
  %v1055 = vmul.f32 %v1039, 0.5
  %v1056 = vmul.f32 %v1040, 0.5
  %v1057 = vmul.f32 %v1041, 0.5
  %v1058 = vmul.f32 %v1042, 0.5
  %v1059 = vmul.f32 %v1043, 0.5
  %v1060 = vmul.f32 %v1044, 0.5
  %v1061 = vtanh.pop %v1045
  %v1062 = vtanh.pop %v1046
  %v1063 = vtanh.pop %v1047
  %v1064 = vtanh.pop %v1048
  %v1065 = vtanh.pop %v1049
  %v1066 = vtanh.pop %v1050
  %v1067 = vtanh.pop %v1051
  %v1068 = vtanh.pop %v1052
  %v1069 = vtanh.pop %v1053
  %v1070 = vtanh.pop %v1054
  %v1071 = vtanh.pop %v1055
  %v1072 = vtanh.pop %v1056
  %v1073 = vtanh.pop %v1057
  %v1074 = vtanh.pop %v1058
  %v1075 = vtanh.pop %v1059
  %v1076 = vtanh.pop %v1060
  %v1077 = vmul.f32 %v1061, 0.5
  %v1078 = vmul.f32 %v1062, 0.5
  %v1079 = vmul.f32 %v1063, 0.5
  %v1080 = vmul.f32 %v1064, 0.5
  %v1081 = vmul.f32 %v1065, 0.5
  %v1082 = vmul.f32 %v1066, 0.5
  %v1083 = vmul.f32 %v1067, 0.5
  %v1084 = vmul.f32 %v1068, 0.5
  %v1085 = vmul.f32 %v1069, 0.5
  %v1086 = vmul.f32 %v1070, 0.5
  %v1087 = vmul.f32 %v1071, 0.5
  %v1088 = vmul.f32 %v1072, 0.5
  %v1089 = vmul.f32 %v1073, 0.5
  %v1090 = vmul.f32 %v1074, 0.5
  %v1091 = vmul.f32 %v1075, 0.5
  %v1092 = vmul.f32 %v1076, 0.5
  %v1093 = vadd.f32 %v1077, 0.5
  %v1094 = vadd.f32 %v1078, 0.5
  %v1095 = vadd.f32 %v1079, 0.5
  %v1096 = vadd.f32 %v1080, 0.5
  %v1097 = vadd.f32 %v1081, 0.5
  %v1098 = vadd.f32 %v1082, 0.5
  %v1099 = vadd.f32 %v1083, 0.5
  %v1100 = vadd.f32 %v1084, 0.5
  %v1101 = vadd.f32 %v1085, 0.5
  %v1102 = vadd.f32 %v1086, 0.5
  %v1103 = vadd.f32 %v1087, 0.5
  %v1104 = vadd.f32 %v1088, 0.5
  %v1105 = vadd.f32 %v1089, 0.5
  %v1106 = vadd.f32 %v1090, 0.5
  %v1107 = vadd.f32 %v1091, 0.5
  %v1108 = vadd.f32 %v1092, 0.5
  %v1109 = vadd.f32 %v260, %v324
  %v1110 = vadd.f32 %v261, %v325
  %v1111 = vadd.f32 %v262, %v326
  %v1112 = vadd.f32 %v263, %v327
  %v1113 = vadd.f32 %v264, %v328
  %v1114 = vadd.f32 %v265, %v329
  %v1115 = vadd.f32 %v266, %v330
  %v1116 = vadd.f32 %v267, %v331
  %v1117 = vadd.f32 %v268, %v332
  %v1118 = vadd.f32 %v269, %v333
  %v1119 = vadd.f32 %v270, %v334
  %v1120 = vadd.f32 %v271, %v335
  %v1121 = vadd.f32 %v272, %v336
  %v1122 = vadd.f32 %v273, %v337
  %v1123 = vadd.f32 %v274, %v338
  %v1124 = vadd.f32 %v275, %v339
  %v1125 = vmul.f32 %v1093, %v356
  %v1126 = vmul.f32 %v1094, %v357
  %v1127 = vmul.f32 %v1095, %v358
  %v1128 = vmul.f32 %v1096, %v359
  %v1129 = vmul.f32 %v1097, %v360
  %v1130 = vmul.f32 %v1098, %v361
  %v1131 = vmul.f32 %v1099, %v362
  %v1132 = vmul.f32 %v1100, %v363
  %v1133 = vmul.f32 %v1101, %v364
  %v1134 = vmul.f32 %v1102, %v365
  %v1135 = vmul.f32 %v1103, %v366
  %v1136 = vmul.f32 %v1104, %v367
  %v1137 = vmul.f32 %v1105, %v368
  %v1138 = vmul.f32 %v1106, %v369
  %v1139 = vmul.f32 %v1107, %v370
  %v1140 = vmul.f32 %v1108, %v371
  %v1141 = vmul.f32 %v949, %v981
  %v1142 = vmul.f32 %v950, %v982
  %v1143 = vmul.f32 %v951, %v983
  %v1144 = vmul.f32 %v952, %v984
  %v1145 = vmul.f32 %v953, %v985
  %v1146 = vmul.f32 %v954, %v986
  %v1147 = vmul.f32 %v955, %v987
  %v1148 = vmul.f32 %v956, %v988
  %v1149 = vmul.f32 %v957, %v989
  %v1150 = vmul.f32 %v958, %v990
  %v1151 = vmul.f32 %v959, %v991
  %v1152 = vmul.f32 %v960, %v992
  %v1153 = vmul.f32 %v961, %v993
  %v1154 = vmul.f32 %v962, %v994
  %v1155 = vmul.f32 %v963, %v995
  %v1156 = vmul.f32 %v964, %v996
  %v1157 = vadd.f32 %v1125, %v1141
  %v1158 = vadd.f32 %v1126, %v1142
  %v1159 = vadd.f32 %v1127, %v1143
  %v1160 = vadd.f32 %v1128, %v1144
  %v1161 = vadd.f32 %v1129, %v1145
  %v1162 = vadd.f32 %v1130, %v1146
  %v1163 = vadd.f32 %v1131, %v1147
  %v1164 = vadd.f32 %v1132, %v1148
  %v1165 = vadd.f32 %v1133, %v1149
  %v1166 = vadd.f32 %v1134, %v1150
  %v1167 = vadd.f32 %v1135, %v1151
  %v1168 = vadd.f32 %v1136, %v1152
  %v1169 = vadd.f32 %v1137, %v1153
  %v1170 = vadd.f32 %v1138, %v1154
  %v1171 = vadd.f32 %v1139, %v1155
  %v1172 = vadd.f32 %v1140, %v1156
  %v1173 = vpack.c.bf16 %v1158, %v1157
  %v1174 = vpack.c.bf16 %v1160, %v1159
  %v1175 = vpack.c.bf16 %v1162, %v1161
  %v1176 = vpack.c.bf16 %v1164, %v1163
  %v1177 = vpack.c.bf16 %v1166, %v1165
  %v1178 = vpack.c.bf16 %v1168, %v1167
  %v1179 = vpack.c.bf16 %v1170, %v1169
  %v1180 = vpack.c.bf16 %v1172, %v1171
  %v1183 = vunpack.c.l.b16 %v388
  %v1184 = vunpack.c.l.b16 %v389
  %v1185 = vpack.c.b16 %v1184, %v1183
  %v1188 = vsel %vm410, %v1173, 0
  %v1191 = vsel %vm410, %v1174, 0
  %1193 = vmatprep.subr.bf16.mxu0 0
  %1194 = vmatpush1.bf16.msra.mxu0 %v1185
  %1195 = vmatprep.subr.bf16.mxu0 0
  %1196 = vmatpush1.bf16.msra.mxu0 0
  %1197 = vmatprep.subr.bf16.mxu0 0
  %1198 = vmatpush1.bf16.msra.mxu0 0
  %1199 = vmatprep.subr.bf16.mxu0 0
  %1200 = vmatpush1.bf16.msra.mxu0 0
  %1201 = vmatprep.subr.bf16.mxu0 0
  %1202 = vmatpush1.bf16.msra.mxu0 0
  %1203 = vmatprep.subr.bf16.mxu0 0
  %1204 = vmatpush1.bf16.msra.mxu0 0
  %1205 = vmatprep.subr.bf16.mxu0 0
  %1206 = vmatpush1.bf16.msra.mxu0 0
  %1207 = vmatprep.subr.bf16.mxu0 0
  %1208 = vmatpush1.bf16.msra.mxu0 0
  %1209 = vmatprep.subr.bf16.mxu0 0
  %1210 = vmatpush1.bf16.msra.mxu0 0
  %1211 = vmatprep.subr.bf16.mxu0 0
  %1212 = vmatpush1.bf16.msra.mxu0 0
  %1213 = vmatprep.subr.bf16.mxu0 0
  %1214 = vmatpush1.bf16.msra.mxu0 0
  %1215 = vmatprep.subr.bf16.mxu0 0
  %1216 = vmatpush1.bf16.msra.mxu0 0
  %1217 = vmatprep.subr.bf16.mxu0 0
  %1218 = vmatpush1.bf16.msra.mxu0 0
  %1219 = vmatprep.subr.bf16.mxu0 0
  %1220 = vmatpush1.bf16.msra.mxu0 0
  %1221 = vmatprep.subr.bf16.mxu0 0
  %1222 = vmatpush1.bf16.msra.mxu0 0
  %1223 = vmatprep.subr.bf16.mxu0 0
  %1224 = vmatpush1.bf16.msra.mxu0 0
  %1225 = vmatprep.mubr.bf16.mxu0 0
  %1226 = vmatmul.mubr.bf16.gmra.mrb[0].mxu0 %v1188
  %v1227 = vpop.f32.mrb[0].mxu0
  %v1228 = vadd.f32 0.0, %v1227
  %v1229 = vpop.f32.mrb[0].mxu0
  %v1230 = vpop.f32.mrb[0].mxu0
  %v1231 = vadd.f32 0.0, %v1230
  %v1232 = vpop.f32.mrb[0].mxu0
  %1233 = vmatprep.mubr.bf16.mxu0 0
  %1234 = vmatmul.mubr.bf16.gmra.mrb[0].mxu0 %v1191
  %v1235 = vpop.f32.mrb[0].mxu0
  %v1236 = vadd.f32 0.0, %v1235
  %v1237 = vpop.f32.mrb[0].mxu0
  %v1238 = vpop.f32.mrb[0].mxu0
  %v1239 = vadd.f32 0.0, %v1238
  %v1240 = vpop.f32.mrb[0].mxu0
  %1241 = vdwg.mxu0
  %v1244 = vunpack.c.l.b16 %v390
  %v1245 = vunpack.c.l.b16 %v391
  %v1246 = vpack.c.b16 %v1245, %v1244
  %v1249 = vsel %vm410, %v1175, 0
  %v1252 = vsel %vm410, %v1176, 0
  %1254 = vmatprep.subr.bf16.mxu0 0
  %1255 = vmatpush1.bf16.msra.mxu0 %v1246
  %1256 = vmatprep.subr.bf16.mxu0 0
  %1257 = vmatpush1.bf16.msra.mxu0 0
  %1258 = vmatprep.subr.bf16.mxu0 0
  %1259 = vmatpush1.bf16.msra.mxu0 0
  %1260 = vmatprep.subr.bf16.mxu0 0
  %1261 = vmatpush1.bf16.msra.mxu0 0
  %1262 = vmatprep.subr.bf16.mxu0 0
  %1263 = vmatpush1.bf16.msra.mxu0 0
  %1264 = vmatprep.subr.bf16.mxu0 0
  %1265 = vmatpush1.bf16.msra.mxu0 0
  %1266 = vmatprep.subr.bf16.mxu0 0
  %1267 = vmatpush1.bf16.msra.mxu0 0
  %1268 = vmatprep.subr.bf16.mxu0 0
  %1269 = vmatpush1.bf16.msra.mxu0 0
  %1270 = vmatprep.subr.bf16.mxu0 0
  %1271 = vmatpush1.bf16.msra.mxu0 0
  %1272 = vmatprep.subr.bf16.mxu0 0
  %1273 = vmatpush1.bf16.msra.mxu0 0
  %1274 = vmatprep.subr.bf16.mxu0 0
  %1275 = vmatpush1.bf16.msra.mxu0 0
  %1276 = vmatprep.subr.bf16.mxu0 0
  %1277 = vmatpush1.bf16.msra.mxu0 0
  %1278 = vmatprep.subr.bf16.mxu0 0
  %1279 = vmatpush1.bf16.msra.mxu0 0
  %1280 = vmatprep.subr.bf16.mxu0 0
  %1281 = vmatpush1.bf16.msra.mxu0 0
  %1282 = vmatprep.subr.bf16.mxu0 0
  %1283 = vmatpush1.bf16.msra.mxu0 0
  %1284 = vmatprep.subr.bf16.mxu0 0
  %1285 = vmatpush1.bf16.msra.mxu0 0
  %1286 = vmatprep.mubr.bf16.mxu0 0
  %1287 = vmatmul.mubr.bf16.gmra.mrb[0].mxu0 %v1249
  %v1288 = vpop.f32.mrb[0].mxu0
  %v1289 = vadd.f32 0.0, %v1288
  %v1290 = vpop.f32.mrb[0].mxu0
  %v1291 = vpop.f32.mrb[0].mxu0
  %v1292 = vadd.f32 0.0, %v1291
  %v1293 = vpop.f32.mrb[0].mxu0
  %1294 = vmatprep.mubr.bf16.mxu0 0
  %1295 = vmatmul.mubr.bf16.gmra.mrb[0].mxu0 %v1252
  %v1296 = vpop.f32.mrb[0].mxu0
  %v1297 = vadd.f32 0.0, %v1296
  %v1298 = vpop.f32.mrb[0].mxu0
  %v1299 = vpop.f32.mrb[0].mxu0
  %v1300 = vadd.f32 0.0, %v1299
  %v1301 = vpop.f32.mrb[0].mxu0
  %1302 = vdwg.mxu0
  %v1305 = vunpack.c.l.b16 %v392
  %v1306 = vunpack.c.l.b16 %v393
  %v1307 = vpack.c.b16 %v1306, %v1305
  %v1310 = vsel %vm410, %v1177, 0
  %v1313 = vsel %vm410, %v1178, 0
  %1315 = vmatprep.subr.bf16.mxu0 0
  %1316 = vmatpush1.bf16.msra.mxu0 %v1307
  %1317 = vmatprep.subr.bf16.mxu0 0
  %1318 = vmatpush1.bf16.msra.mxu0 0
  %1319 = vmatprep.subr.bf16.mxu0 0
  %1320 = vmatpush1.bf16.msra.mxu0 0
  %1321 = vmatprep.subr.bf16.mxu0 0
  %1322 = vmatpush1.bf16.msra.mxu0 0
  %1323 = vmatprep.subr.bf16.mxu0 0
  %1324 = vmatpush1.bf16.msra.mxu0 0
  %1325 = vmatprep.subr.bf16.mxu0 0
  %1326 = vmatpush1.bf16.msra.mxu0 0
  %1327 = vmatprep.subr.bf16.mxu0 0
  %1328 = vmatpush1.bf16.msra.mxu0 0
  %1329 = vmatprep.subr.bf16.mxu0 0
  %1330 = vmatpush1.bf16.msra.mxu0 0
  %1331 = vmatprep.subr.bf16.mxu0 0
  %1332 = vmatpush1.bf16.msra.mxu0 0
  %1333 = vmatprep.subr.bf16.mxu0 0
  %1334 = vmatpush1.bf16.msra.mxu0 0
  %1335 = vmatprep.subr.bf16.mxu0 0
  %1336 = vmatpush1.bf16.msra.mxu0 0
  %1337 = vmatprep.subr.bf16.mxu0 0
  %1338 = vmatpush1.bf16.msra.mxu0 0
  %1339 = vmatprep.subr.bf16.mxu0 0
  %1340 = vmatpush1.bf16.msra.mxu0 0
  %1341 = vmatprep.subr.bf16.mxu0 0
  %1342 = vmatpush1.bf16.msra.mxu0 0
  %1343 = vmatprep.subr.bf16.mxu0 0
  %1344 = vmatpush1.bf16.msra.mxu0 0
  %1345 = vmatprep.subr.bf16.mxu0 0
  %1346 = vmatpush1.bf16.msra.mxu0 0
  %1347 = vmatprep.mubr.bf16.mxu0 0
  %1348 = vmatmul.mubr.bf16.gmra.mrb[0].mxu0 %v1310
  %v1349 = vpop.f32.mrb[0].mxu0
  %v1350 = vadd.f32 0.0, %v1349
  %v1351 = vpop.f32.mrb[0].mxu0
  %v1352 = vpop.f32.mrb[0].mxu0
  %v1353 = vadd.f32 0.0, %v1352
  %v1354 = vpop.f32.mrb[0].mxu0
  %1355 = vmatprep.mubr.bf16.mxu0 0
  %1356 = vmatmul.mubr.bf16.gmra.mrb[0].mxu0 %v1313
  %v1357 = vpop.f32.mrb[0].mxu0
  %v1358 = vadd.f32 0.0, %v1357
  %v1359 = vpop.f32.mrb[0].mxu0
  %v1360 = vpop.f32.mrb[0].mxu0
  %v1361 = vadd.f32 0.0, %v1360
  %v1362 = vpop.f32.mrb[0].mxu0
  %1363 = vdwg.mxu0
  %v1366 = vunpack.c.l.b16 %v394
  %v1367 = vunpack.c.l.b16 %v395
  %v1368 = vpack.c.b16 %v1367, %v1366
  %v1371 = vsel %vm410, %v1179, 0
  %v1374 = vsel %vm410, %v1180, 0
  %1376 = vmatprep.subr.bf16.mxu0 0
  %1377 = vmatpush1.bf16.msra.mxu0 %v1368
  %1378 = vmatprep.subr.bf16.mxu0 0
  %1379 = vmatpush1.bf16.msra.mxu0 0
  %1380 = vmatprep.subr.bf16.mxu0 0
  %1381 = vmatpush1.bf16.msra.mxu0 0
  %1382 = vmatprep.subr.bf16.mxu0 0
  %1383 = vmatpush1.bf16.msra.mxu0 0
  %1384 = vmatprep.subr.bf16.mxu0 0
  %1385 = vmatpush1.bf16.msra.mxu0 0
  %1386 = vmatprep.subr.bf16.mxu0 0
  %1387 = vmatpush1.bf16.msra.mxu0 0
  %1388 = vmatprep.subr.bf16.mxu0 0
  %1389 = vmatpush1.bf16.msra.mxu0 0
  %1390 = vmatprep.subr.bf16.mxu0 0
  %1391 = vmatpush1.bf16.msra.mxu0 0
  %1392 = vmatprep.subr.bf16.mxu0 0
  %1393 = vmatpush1.bf16.msra.mxu0 0
  %1394 = vmatprep.subr.bf16.mxu0 0
  %1395 = vmatpush1.bf16.msra.mxu0 0
  %1396 = vmatprep.subr.bf16.mxu0 0
  %1397 = vmatpush1.bf16.msra.mxu0 0
  %1398 = vmatprep.subr.bf16.mxu0 0
  %1399 = vmatpush1.bf16.msra.mxu0 0
  %1400 = vmatprep.subr.bf16.mxu0 0
  %1401 = vmatpush1.bf16.msra.mxu0 0
  %1402 = vmatprep.subr.bf16.mxu0 0
  %1403 = vmatpush1.bf16.msra.mxu0 0
  %1404 = vmatprep.subr.bf16.mxu0 0
  %1405 = vmatpush1.bf16.msra.mxu0 0
  %1406 = vmatprep.subr.bf16.mxu0 0
  %1407 = vmatpush1.bf16.msra.mxu0 0
  %1408 = vmatprep.mubr.bf16.mxu0 0
  %1409 = vmatmul.mubr.bf16.gmra.mrb[0].mxu0 %v1371
  %v1410 = vpop.f32.mrb[0].mxu0
  %v1411 = vadd.f32 0.0, %v1410
  %v1412 = vpop.f32.mrb[0].mxu0
  %v1413 = vpop.f32.mrb[0].mxu0
  %v1414 = vadd.f32 0.0, %v1413
  %v1415 = vpop.f32.mrb[0].mxu0
  %1416 = vmatprep.mubr.bf16.mxu0 0
  %1417 = vmatmul.mubr.bf16.gmra.mrb[0].mxu0 %v1374
  %v1418 = vpop.f32.mrb[0].mxu0
  %v1419 = vadd.f32 0.0, %v1418
  %v1420 = vpop.f32.mrb[0].mxu0
  %v1421 = vpop.f32.mrb[0].mxu0
  %v1422 = vadd.f32 0.0, %v1421
  %v1423 = vpop.f32.mrb[0].mxu0
  %1424 = vdwg.mxu0
  %v1425 = vadd.f32 %v1109, %v1228
  %v1426 = vadd.f32 %v1110, %v1231
  %v1427 = vadd.f32 %v1111, %v1236
  %v1428 = vadd.f32 %v1112, %v1239
  %v1429 = vadd.f32 %v1113, %v1289
  %v1430 = vadd.f32 %v1114, %v1292
  %v1431 = vadd.f32 %v1115, %v1297
  %v1432 = vadd.f32 %v1116, %v1300
  %v1433 = vadd.f32 %v1117, %v1350
  %v1434 = vadd.f32 %v1118, %v1353
  %v1435 = vadd.f32 %v1119, %v1358
  %v1436 = vadd.f32 %v1120, %v1361
  %v1437 = vadd.f32 %v1121, %v1411
  %v1438 = vadd.f32 %v1122, %v1414
  %v1439 = vadd.f32 %v1123, %v1419
  %v1440 = vadd.f32 %v1124, %v1422
  %v1441 = vmul.f32 %v1425, 0.5
  %v1442 = vmul.f32 %v1426, 0.5
  %v1443 = vmul.f32 %v1427, 0.5
  %v1444 = vmul.f32 %v1428, 0.5
  %v1445 = vmul.f32 %v1429, 0.5
  %v1446 = vmul.f32 %v1430, 0.5
  %v1447 = vmul.f32 %v1431, 0.5
  %v1448 = vmul.f32 %v1432, 0.5
  %v1449 = vmul.f32 %v1433, 0.5
  %v1450 = vmul.f32 %v1434, 0.5
  %v1451 = vmul.f32 %v1435, 0.5
  %v1452 = vmul.f32 %v1436, 0.5
  %v1453 = vmul.f32 %v1437, 0.5
  %v1454 = vmul.f32 %v1438, 0.5
  %v1455 = vmul.f32 %v1439, 0.5
  %v1456 = vmul.f32 %v1440, 0.5
  %v1457 = vtanh.pop %v1441
  %v1458 = vtanh.pop %v1442
  %v1459 = vtanh.pop %v1443
  %v1460 = vtanh.pop %v1444
  %v1461 = vtanh.pop %v1445
  %v1462 = vtanh.pop %v1446
  %v1463 = vtanh.pop %v1447
  %v1464 = vtanh.pop %v1448
  %v1465 = vtanh.pop %v1449
  %v1466 = vtanh.pop %v1450
  %v1467 = vtanh.pop %v1451
  %v1468 = vtanh.pop %v1452
  %v1469 = vtanh.pop %v1453
  %v1470 = vtanh.pop %v1454
  %v1471 = vtanh.pop %v1455
  %v1472 = vtanh.pop %v1456
  %v1473 = vmul.f32 %v1457, 0.5
  %v1474 = vmul.f32 %v1458, 0.5
  %v1475 = vmul.f32 %v1459, 0.5
  %v1476 = vmul.f32 %v1460, 0.5
  %v1477 = vmul.f32 %v1461, 0.5
  %v1478 = vmul.f32 %v1462, 0.5
  %v1479 = vmul.f32 %v1463, 0.5
  %v1480 = vmul.f32 %v1464, 0.5
  %v1481 = vmul.f32 %v1465, 0.5
  %v1482 = vmul.f32 %v1466, 0.5
  %v1483 = vmul.f32 %v1467, 0.5
  %v1484 = vmul.f32 %v1468, 0.5
  %v1485 = vmul.f32 %v1469, 0.5
  %v1486 = vmul.f32 %v1470, 0.5
  %v1487 = vmul.f32 %v1471, 0.5
  %v1488 = vmul.f32 %v1472, 0.5
  %v1489 = vadd.f32 %v1473, 0.5
  %v1490 = vadd.f32 %v1474, 0.5
  %v1491 = vadd.f32 %v1475, 0.5
  %v1492 = vadd.f32 %v1476, 0.5
  %v1493 = vadd.f32 %v1477, 0.5
  %v1494 = vadd.f32 %v1478, 0.5
  %v1495 = vadd.f32 %v1479, 0.5
  %v1496 = vadd.f32 %v1480, 0.5
  %v1497 = vadd.f32 %v1481, 0.5
  %v1498 = vadd.f32 %v1482, 0.5
  %v1499 = vadd.f32 %v1483, 0.5
  %v1500 = vadd.f32 %v1484, 0.5
  %v1501 = vadd.f32 %v1485, 0.5
  %v1502 = vadd.f32 %v1486, 0.5
  %v1503 = vadd.f32 %v1487, 0.5
  %v1504 = vadd.f32 %v1488, 0.5
  %v1505 = vtanh.pop %v1157
  %v1506 = vtanh.pop %v1158
  %v1507 = vtanh.pop %v1159
  %v1508 = vtanh.pop %v1160
  %v1509 = vtanh.pop %v1161
  %v1510 = vtanh.pop %v1162
  %v1511 = vtanh.pop %v1163
  %v1512 = vtanh.pop %v1164
  %v1513 = vtanh.pop %v1165
  %v1514 = vtanh.pop %v1166
  %v1515 = vtanh.pop %v1167
  %v1516 = vtanh.pop %v1168
  %v1517 = vtanh.pop %v1169
  %v1518 = vtanh.pop %v1170
  %v1519 = vtanh.pop %v1171
  %v1520 = vtanh.pop %v1172
  %v1521 = vmul.f32 %v1489, %v1505
  %v1522 = vmul.f32 %v1490, %v1506
  %v1523 = vmul.f32 %v1491, %v1507
  %v1524 = vmul.f32 %v1492, %v1508
  %v1525 = vmul.f32 %v1493, %v1509
  %v1526 = vmul.f32 %v1494, %v1510
  %v1527 = vmul.f32 %v1495, %v1511
  %v1528 = vmul.f32 %v1496, %v1512
  %v1529 = vmul.f32 %v1497, %v1513
  %v1530 = vmul.f32 %v1498, %v1514
  %v1531 = vmul.f32 %v1499, %v1515
  %v1532 = vmul.f32 %v1500, %v1516
  %v1533 = vmul.f32 %v1501, %v1517
  %v1534 = vmul.f32 %v1502, %v1518
  %v1535 = vmul.f32 %v1503, %v1519
  %v1536 = vmul.f32 %v1504, %v1520
  %v1537 = vadd.f32 %v148, %v36
  %v1538 = vadd.f32 %v149, %v37
  %v1539 = vadd.f32 %v150, %v38
  %v1540 = vadd.f32 %v151, %v39
  %v1541 = vadd.f32 %v152, %v40
  %v1542 = vadd.f32 %v153, %v41
  %v1543 = vadd.f32 %v154, %v42
  %v1544 = vadd.f32 %v155, %v43
  %v1545 = vadd.f32 %v156, %v44
  %v1546 = vadd.f32 %v157, %v45
  %v1547 = vadd.f32 %v158, %v46
  %v1548 = vadd.f32 %v159, %v47
  %v1549 = vadd.f32 %v160, %v48
  %v1550 = vadd.f32 %v161, %v49
  %v1551 = vadd.f32 %v162, %v50
  %v1552 = vadd.f32 %v163, %v51
  %v1553 = vmul.f32 %v1537, 0.5
  %v1554 = vmul.f32 %v1538, 0.5
  %v1555 = vmul.f32 %v1539, 0.5
  %v1556 = vmul.f32 %v1540, 0.5
  %v1557 = vmul.f32 %v1541, 0.5
  %v1558 = vmul.f32 %v1542, 0.5
  %v1559 = vmul.f32 %v1543, 0.5
  %v1560 = vmul.f32 %v1544, 0.5
  %v1561 = vmul.f32 %v1545, 0.5
  %v1562 = vmul.f32 %v1546, 0.5
  %v1563 = vmul.f32 %v1547, 0.5
  %v1564 = vmul.f32 %v1548, 0.5
  %v1565 = vmul.f32 %v1549, 0.5
  %v1566 = vmul.f32 %v1550, 0.5
  %v1567 = vmul.f32 %v1551, 0.5
  %v1568 = vmul.f32 %v1552, 0.5
  %v1569 = vtanh.pop %v1553
  %v1570 = vtanh.pop %v1554
  %v1571 = vtanh.pop %v1555
  %v1572 = vtanh.pop %v1556
  %v1573 = vtanh.pop %v1557
  %v1574 = vtanh.pop %v1558
  %v1575 = vtanh.pop %v1559
  %v1576 = vtanh.pop %v1560
  %v1577 = vtanh.pop %v1561
  %v1578 = vtanh.pop %v1562
  %v1579 = vtanh.pop %v1563
  %v1580 = vtanh.pop %v1564
  %v1581 = vtanh.pop %v1565
  %v1582 = vtanh.pop %v1566
  %v1583 = vtanh.pop %v1567
  %v1584 = vtanh.pop %v1568
  %v1585 = vmul.f32 %v1569, 0.5
  %v1586 = vmul.f32 %v1570, 0.5
  %v1587 = vmul.f32 %v1571, 0.5
  %v1588 = vmul.f32 %v1572, 0.5
  %v1589 = vmul.f32 %v1573, 0.5
  %v1590 = vmul.f32 %v1574, 0.5
  %v1591 = vmul.f32 %v1575, 0.5
  %v1592 = vmul.f32 %v1576, 0.5
  %v1593 = vmul.f32 %v1577, 0.5
  %v1594 = vmul.f32 %v1578, 0.5
  %v1595 = vmul.f32 %v1579, 0.5
  %v1596 = vmul.f32 %v1580, 0.5
  %v1597 = vmul.f32 %v1581, 0.5
  %v1598 = vmul.f32 %v1582, 0.5
  %v1599 = vmul.f32 %v1583, 0.5
  %v1600 = vmul.f32 %v1584, 0.5
  %v1601 = vadd.f32 %v1585, 0.5
  %v1602 = vadd.f32 %v1586, 0.5
  %v1603 = vadd.f32 %v1587, 0.5
  %v1604 = vadd.f32 %v1588, 0.5
  %v1605 = vadd.f32 %v1589, 0.5
  %v1606 = vadd.f32 %v1590, 0.5
  %v1607 = vadd.f32 %v1591, 0.5
  %v1608 = vadd.f32 %v1592, 0.5
  %v1609 = vadd.f32 %v1593, 0.5
  %v1610 = vadd.f32 %v1594, 0.5
  %v1611 = vadd.f32 %v1595, 0.5
  %v1612 = vadd.f32 %v1596, 0.5
  %v1613 = vadd.f32 %v1597, 0.5
  %v1614 = vadd.f32 %v1598, 0.5
  %v1615 = vadd.f32 %v1599, 0.5
  %v1616 = vadd.f32 %v1600, 0.5
  %v1617 = vadd.f32 %v148, %v84
  %v1618 = vadd.f32 %v149, %v85
  %v1619 = vadd.f32 %v150, %v86
  %v1620 = vadd.f32 %v151, %v87
  %v1621 = vadd.f32 %v152, %v88
  %v1622 = vadd.f32 %v153, %v89
  %v1623 = vadd.f32 %v154, %v90
  %v1624 = vadd.f32 %v155, %v91
  %v1625 = vadd.f32 %v156, %v92
  %v1626 = vadd.f32 %v157, %v93
  %v1627 = vadd.f32 %v158, %v94
  %v1628 = vadd.f32 %v159, %v95
  %v1629 = vadd.f32 %v160, %v96
  %v1630 = vadd.f32 %v161, %v97
  %v1631 = vadd.f32 %v162, %v98
  %v1632 = vadd.f32 %v163, %v99
  %v1633 = vmul.f32 %v1617, 0.5
  %v1634 = vmul.f32 %v1618, 0.5
  %v1635 = vmul.f32 %v1619, 0.5
  %v1636 = vmul.f32 %v1620, 0.5
  %v1637 = vmul.f32 %v1621, 0.5
  %v1638 = vmul.f32 %v1622, 0.5
  %v1639 = vmul.f32 %v1623, 0.5
  %v1640 = vmul.f32 %v1624, 0.5
  %v1641 = vmul.f32 %v1625, 0.5
  %v1642 = vmul.f32 %v1626, 0.5
  %v1643 = vmul.f32 %v1627, 0.5
  %v1644 = vmul.f32 %v1628, 0.5
  %v1645 = vmul.f32 %v1629, 0.5
  %v1646 = vmul.f32 %v1630, 0.5
  %v1647 = vmul.f32 %v1631, 0.5
  %v1648 = vmul.f32 %v1632, 0.5
  %v1649 = vtanh.pop %v1633
  %v1650 = vtanh.pop %v1634
  %v1651 = vtanh.pop %v1635
  %v1652 = vtanh.pop %v1636
  %v1653 = vtanh.pop %v1637
  %v1654 = vtanh.pop %v1638
  %v1655 = vtanh.pop %v1639
  %v1656 = vtanh.pop %v1640
  %v1657 = vtanh.pop %v1641
  %v1658 = vtanh.pop %v1642
  %v1659 = vtanh.pop %v1643
  %v1660 = vtanh.pop %v1644
  %v1661 = vtanh.pop %v1645
  %v1662 = vtanh.pop %v1646
  %v1663 = vtanh.pop %v1647
  %v1664 = vtanh.pop %v1648
  %v1665 = vmul.f32 %v1649, 0.5
  %v1666 = vmul.f32 %v1650, 0.5
  %v1667 = vmul.f32 %v1651, 0.5
  %v1668 = vmul.f32 %v1652, 0.5
  %v1669 = vmul.f32 %v1653, 0.5
  %v1670 = vmul.f32 %v1654, 0.5
  %v1671 = vmul.f32 %v1655, 0.5
  %v1672 = vmul.f32 %v1656, 0.5
  %v1673 = vmul.f32 %v1657, 0.5
  %v1674 = vmul.f32 %v1658, 0.5
  %v1675 = vmul.f32 %v1659, 0.5
  %v1676 = vmul.f32 %v1660, 0.5
  %v1677 = vmul.f32 %v1661, 0.5
  %v1678 = vmul.f32 %v1662, 0.5
  %v1679 = vmul.f32 %v1663, 0.5
  %v1680 = vmul.f32 %v1664, 0.5
  %v1681 = vadd.f32 %v1665, 0.5
  %v1682 = vadd.f32 %v1666, 0.5
  %v1683 = vadd.f32 %v1667, 0.5
  %v1684 = vadd.f32 %v1668, 0.5
  %v1685 = vadd.f32 %v1669, 0.5
  %v1686 = vadd.f32 %v1670, 0.5
  %v1687 = vadd.f32 %v1671, 0.5
  %v1688 = vadd.f32 %v1672, 0.5
  %v1689 = vadd.f32 %v1673, 0.5
  %v1690 = vadd.f32 %v1674, 0.5
  %v1691 = vadd.f32 %v1675, 0.5
  %v1692 = vadd.f32 %v1676, 0.5
  %v1693 = vadd.f32 %v1677, 0.5
  %v1694 = vadd.f32 %v1678, 0.5
  %v1695 = vadd.f32 %v1679, 0.5
  %v1696 = vadd.f32 %v1680, 0.5
  %v1697 = vadd.f32 %v164, %v52
  %v1698 = vadd.f32 %v165, %v53
  %v1699 = vadd.f32 %v166, %v54
  %v1700 = vadd.f32 %v167, %v55
  %v1701 = vadd.f32 %v168, %v56
  %v1702 = vadd.f32 %v169, %v57
  %v1703 = vadd.f32 %v170, %v58
  %v1704 = vadd.f32 %v171, %v59
  %v1705 = vadd.f32 %v172, %v60
  %v1706 = vadd.f32 %v173, %v61
  %v1707 = vadd.f32 %v174, %v62
  %v1708 = vadd.f32 %v175, %v63
  %v1709 = vadd.f32 %v176, %v64
  %v1710 = vadd.f32 %v177, %v65
  %v1711 = vadd.f32 %v178, %v66
  %v1712 = vadd.f32 %v179, %v67
  %v1713 = vtanh.pop %v1697
  %v1714 = vtanh.pop %v1698
  %v1715 = vtanh.pop %v1699
  %v1716 = vtanh.pop %v1700
  %v1717 = vtanh.pop %v1701
  %v1718 = vtanh.pop %v1702
  %v1719 = vtanh.pop %v1703
  %v1720 = vtanh.pop %v1704
  %v1721 = vtanh.pop %v1705
  %v1722 = vtanh.pop %v1706
  %v1723 = vtanh.pop %v1707
  %v1724 = vtanh.pop %v1708
  %v1725 = vtanh.pop %v1709
  %v1726 = vtanh.pop %v1710
  %v1727 = vtanh.pop %v1711
  %v1728 = vtanh.pop %v1712
  %v1729 = vadd.f32 %v164, %v100
  %v1730 = vadd.f32 %v165, %v101
  %v1731 = vadd.f32 %v166, %v102
  %v1732 = vadd.f32 %v167, %v103
  %v1733 = vadd.f32 %v168, %v104
  %v1734 = vadd.f32 %v169, %v105
  %v1735 = vadd.f32 %v170, %v106
  %v1736 = vadd.f32 %v171, %v107
  %v1737 = vadd.f32 %v172, %v108
  %v1738 = vadd.f32 %v173, %v109
  %v1739 = vadd.f32 %v174, %v110
  %v1740 = vadd.f32 %v175, %v111
  %v1741 = vadd.f32 %v176, %v112
  %v1742 = vadd.f32 %v177, %v113
  %v1743 = vadd.f32 %v178, %v114
  %v1744 = vadd.f32 %v179, %v115
  %v1745 = vtanh.pop %v1729
  %v1746 = vtanh.pop %v1730
  %v1747 = vtanh.pop %v1731
  %v1748 = vtanh.pop %v1732
  %v1749 = vtanh.pop %v1733
  %v1750 = vtanh.pop %v1734
  %v1751 = vtanh.pop %v1735
  %v1752 = vtanh.pop %v1736
  %v1753 = vtanh.pop %v1737
  %v1754 = vtanh.pop %v1738
  %v1755 = vtanh.pop %v1739
  %v1756 = vtanh.pop %v1740
  %v1757 = vtanh.pop %v1741
  %v1758 = vtanh.pop %v1742
  %v1759 = vtanh.pop %v1743
  %v1760 = vtanh.pop %v1744
  %v1761 = vadd.f32 %v180, %v116
  %v1762 = vadd.f32 %v181, %v117
  %v1763 = vadd.f32 %v182, %v118
  %v1764 = vadd.f32 %v183, %v119
  %v1765 = vadd.f32 %v184, %v120
  %v1766 = vadd.f32 %v185, %v121
  %v1767 = vadd.f32 %v186, %v122
  %v1768 = vadd.f32 %v187, %v123
  %v1769 = vadd.f32 %v188, %v124
  %v1770 = vadd.f32 %v189, %v125
  %v1771 = vadd.f32 %v190, %v126
  %v1772 = vadd.f32 %v191, %v127
  %v1773 = vadd.f32 %v192, %v128
  %v1774 = vadd.f32 %v193, %v129
  %v1775 = vadd.f32 %v194, %v130
  %v1776 = vadd.f32 %v195, %v131
  %v1777 = vadd.f32 %v1761, 1.0
  %v1778 = vadd.f32 %v1762, 1.0
  %v1779 = vadd.f32 %v1763, 1.0
  %v1780 = vadd.f32 %v1764, 1.0
  %v1781 = vadd.f32 %v1765, 1.0
  %v1782 = vadd.f32 %v1766, 1.0
  %v1783 = vadd.f32 %v1767, 1.0
  %v1784 = vadd.f32 %v1768, 1.0
  %v1785 = vadd.f32 %v1769, 1.0
  %v1786 = vadd.f32 %v1770, 1.0
  %v1787 = vadd.f32 %v1771, 1.0
  %v1788 = vadd.f32 %v1772, 1.0
  %v1789 = vadd.f32 %v1773, 1.0
  %v1790 = vadd.f32 %v1774, 1.0
  %v1791 = vadd.f32 %v1775, 1.0
  %v1792 = vadd.f32 %v1776, 1.0
  %v1793 = vmul.f32 %v1777, 0.5
  %v1794 = vmul.f32 %v1778, 0.5
  %v1795 = vmul.f32 %v1779, 0.5
  %v1796 = vmul.f32 %v1780, 0.5
  %v1797 = vmul.f32 %v1781, 0.5
  %v1798 = vmul.f32 %v1782, 0.5
  %v1799 = vmul.f32 %v1783, 0.5
  %v1800 = vmul.f32 %v1784, 0.5
  %v1801 = vmul.f32 %v1785, 0.5
  %v1802 = vmul.f32 %v1786, 0.5
  %v1803 = vmul.f32 %v1787, 0.5
  %v1804 = vmul.f32 %v1788, 0.5
  %v1805 = vmul.f32 %v1789, 0.5
  %v1806 = vmul.f32 %v1790, 0.5
  %v1807 = vmul.f32 %v1791, 0.5
  %v1808 = vmul.f32 %v1792, 0.5
  %v1809 = vtanh.pop %v1793
  %v1810 = vtanh.pop %v1794
  %v1811 = vtanh.pop %v1795
  %v1812 = vtanh.pop %v1796
  %v1813 = vtanh.pop %v1797
  %v1814 = vtanh.pop %v1798
  %v1815 = vtanh.pop %v1799
  %v1816 = vtanh.pop %v1800
  %v1817 = vtanh.pop %v1801
  %v1818 = vtanh.pop %v1802
  %v1819 = vtanh.pop %v1803
  %v1820 = vtanh.pop %v1804
  %v1821 = vtanh.pop %v1805
  %v1822 = vtanh.pop %v1806
  %v1823 = vtanh.pop %v1807
  %v1824 = vtanh.pop %v1808
  %v1825 = vmul.f32 %v1809, 0.5
  %v1826 = vmul.f32 %v1810, 0.5
  %v1827 = vmul.f32 %v1811, 0.5
  %v1828 = vmul.f32 %v1812, 0.5
  %v1829 = vmul.f32 %v1813, 0.5
  %v1830 = vmul.f32 %v1814, 0.5
  %v1831 = vmul.f32 %v1815, 0.5
  %v1832 = vmul.f32 %v1816, 0.5
  %v1833 = vmul.f32 %v1817, 0.5
  %v1834 = vmul.f32 %v1818, 0.5
  %v1835 = vmul.f32 %v1819, 0.5
  %v1836 = vmul.f32 %v1820, 0.5
  %v1837 = vmul.f32 %v1821, 0.5
  %v1838 = vmul.f32 %v1822, 0.5
  %v1839 = vmul.f32 %v1823, 0.5
  %v1840 = vmul.f32 %v1824, 0.5
  %v1841 = vadd.f32 %v1825, 0.5
  %v1842 = vadd.f32 %v1826, 0.5
  %v1843 = vadd.f32 %v1827, 0.5
  %v1844 = vadd.f32 %v1828, 0.5
  %v1845 = vadd.f32 %v1829, 0.5
  %v1846 = vadd.f32 %v1830, 0.5
  %v1847 = vadd.f32 %v1831, 0.5
  %v1848 = vadd.f32 %v1832, 0.5
  %v1849 = vadd.f32 %v1833, 0.5
  %v1850 = vadd.f32 %v1834, 0.5
  %v1851 = vadd.f32 %v1835, 0.5
  %v1852 = vadd.f32 %v1836, 0.5
  %v1853 = vadd.f32 %v1837, 0.5
  %v1854 = vadd.f32 %v1838, 0.5
  %v1855 = vadd.f32 %v1839, 0.5
  %v1856 = vadd.f32 %v1840, 0.5
  %v1857 = vadd.f32 %v196, %v68
  %v1858 = vadd.f32 %v197, %v69
  %v1859 = vadd.f32 %v198, %v70
  %v1860 = vadd.f32 %v199, %v71
  %v1861 = vadd.f32 %v200, %v72
  %v1862 = vadd.f32 %v201, %v73
  %v1863 = vadd.f32 %v202, %v74
  %v1864 = vadd.f32 %v203, %v75
  %v1865 = vadd.f32 %v204, %v76
  %v1866 = vadd.f32 %v205, %v77
  %v1867 = vadd.f32 %v206, %v78
  %v1868 = vadd.f32 %v207, %v79
  %v1869 = vadd.f32 %v208, %v80
  %v1870 = vadd.f32 %v209, %v81
  %v1871 = vadd.f32 %v210, %v82
  %v1872 = vadd.f32 %v211, %v83
  %v1873 = vadd.f32 %v1857, %v132
  %v1874 = vadd.f32 %v1858, %v133
  %v1875 = vadd.f32 %v1859, %v134
  %v1876 = vadd.f32 %v1860, %v135
  %v1877 = vadd.f32 %v1861, %v136
  %v1878 = vadd.f32 %v1862, %v137
  %v1879 = vadd.f32 %v1863, %v138
  %v1880 = vadd.f32 %v1864, %v139
  %v1881 = vadd.f32 %v1865, %v140
  %v1882 = vadd.f32 %v1866, %v141
  %v1883 = vadd.f32 %v1867, %v142
  %v1884 = vadd.f32 %v1868, %v143
  %v1885 = vadd.f32 %v1869, %v144
  %v1886 = vadd.f32 %v1870, %v145
  %v1887 = vadd.f32 %v1871, %v146
  %v1888 = vadd.f32 %v1872, %v147
  %v1889 = vmul.f32 %v1873, 0.5
  %v1890 = vmul.f32 %v1874, 0.5
  %v1891 = vmul.f32 %v1875, 0.5
  %v1892 = vmul.f32 %v1876, 0.5
  %v1893 = vmul.f32 %v1877, 0.5
  %v1894 = vmul.f32 %v1878, 0.5
  %v1895 = vmul.f32 %v1879, 0.5
  %v1896 = vmul.f32 %v1880, 0.5
  %v1897 = vmul.f32 %v1881, 0.5
  %v1898 = vmul.f32 %v1882, 0.5
  %v1899 = vmul.f32 %v1883, 0.5
  %v1900 = vmul.f32 %v1884, 0.5
  %v1901 = vmul.f32 %v1885, 0.5
  %v1902 = vmul.f32 %v1886, 0.5
  %v1903 = vmul.f32 %v1887, 0.5
  %v1904 = vmul.f32 %v1888, 0.5
  %v1905 = vtanh.pop %v1889
  %v1906 = vtanh.pop %v1890
  %v1907 = vtanh.pop %v1891
  %v1908 = vtanh.pop %v1892
  %v1909 = vtanh.pop %v1893
  %v1910 = vtanh.pop %v1894
  %v1911 = vtanh.pop %v1895
  %v1912 = vtanh.pop %v1896
  %v1913 = vtanh.pop %v1897
  %v1914 = vtanh.pop %v1898
  %v1915 = vtanh.pop %v1899
  %v1916 = vtanh.pop %v1900
  %v1917 = vtanh.pop %v1901
  %v1918 = vtanh.pop %v1902
  %v1919 = vtanh.pop %v1903
  %v1920 = vtanh.pop %v1904
  %v1921 = vmul.f32 %v1905, 0.5
  %v1922 = vmul.f32 %v1906, 0.5
  %v1923 = vmul.f32 %v1907, 0.5
  %v1924 = vmul.f32 %v1908, 0.5
  %v1925 = vmul.f32 %v1909, 0.5
  %v1926 = vmul.f32 %v1910, 0.5
  %v1927 = vmul.f32 %v1911, 0.5
  %v1928 = vmul.f32 %v1912, 0.5
  %v1929 = vmul.f32 %v1913, 0.5
  %v1930 = vmul.f32 %v1914, 0.5
  %v1931 = vmul.f32 %v1915, 0.5
  %v1932 = vmul.f32 %v1916, 0.5
  %v1933 = vmul.f32 %v1917, 0.5
  %v1934 = vmul.f32 %v1918, 0.5
  %v1935 = vmul.f32 %v1919, 0.5
  %v1936 = vmul.f32 %v1920, 0.5
  %v1937 = vadd.f32 %v1921, 0.5
  %v1938 = vadd.f32 %v1922, 0.5
  %v1939 = vadd.f32 %v1923, 0.5
  %v1940 = vadd.f32 %v1924, 0.5
  %v1941 = vadd.f32 %v1925, 0.5
  %v1942 = vadd.f32 %v1926, 0.5
  %v1943 = vadd.f32 %v1927, 0.5
  %v1944 = vadd.f32 %v1928, 0.5
  %v1945 = vadd.f32 %v1929, 0.5
  %v1946 = vadd.f32 %v1930, 0.5
  %v1947 = vadd.f32 %v1931, 0.5
  %v1948 = vadd.f32 %v1932, 0.5
  %v1949 = vadd.f32 %v1933, 0.5
  %v1950 = vadd.f32 %v1934, 0.5
  %v1951 = vadd.f32 %v1935, 0.5
  %v1952 = vadd.f32 %v1936, 0.5
  %v1953 = vmul.f32 %v1841, %v340
  %v1954 = vmul.f32 %v1842, %v341
  %v1955 = vmul.f32 %v1843, %v342
  %v1956 = vmul.f32 %v1844, %v343
  %v1957 = vmul.f32 %v1845, %v344
  %v1958 = vmul.f32 %v1846, %v345
  %v1959 = vmul.f32 %v1847, %v346
  %v1960 = vmul.f32 %v1848, %v347
  %v1961 = vmul.f32 %v1849, %v348
  %v1962 = vmul.f32 %v1850, %v349
  %v1963 = vmul.f32 %v1851, %v350
  %v1964 = vmul.f32 %v1852, %v351
  %v1965 = vmul.f32 %v1853, %v352
  %v1966 = vmul.f32 %v1854, %v353
  %v1967 = vmul.f32 %v1855, %v354
  %v1968 = vmul.f32 %v1856, %v355
  %v1969 = vmul.f32 %v1681, %v1745
  %v1970 = vmul.f32 %v1682, %v1746
  %v1971 = vmul.f32 %v1683, %v1747
  %v1972 = vmul.f32 %v1684, %v1748
  %v1973 = vmul.f32 %v1685, %v1749
  %v1974 = vmul.f32 %v1686, %v1750
  %v1975 = vmul.f32 %v1687, %v1751
  %v1976 = vmul.f32 %v1688, %v1752
  %v1977 = vmul.f32 %v1689, %v1753
  %v1978 = vmul.f32 %v1690, %v1754
  %v1979 = vmul.f32 %v1691, %v1755
  %v1980 = vmul.f32 %v1692, %v1756
  %v1981 = vmul.f32 %v1693, %v1757
  %v1982 = vmul.f32 %v1694, %v1758
  %v1983 = vmul.f32 %v1695, %v1759
  %v1984 = vmul.f32 %v1696, %v1760
  %v1985 = vadd.f32 %v1953, %v1969
  %v1986 = vadd.f32 %v1954, %v1970
  %v1987 = vadd.f32 %v1955, %v1971
  %v1988 = vadd.f32 %v1956, %v1972
  %v1989 = vadd.f32 %v1957, %v1973
  %v1990 = vadd.f32 %v1958, %v1974
  %v1991 = vadd.f32 %v1959, %v1975
  %v1992 = vadd.f32 %v1960, %v1976
  %v1993 = vadd.f32 %v1961, %v1977
  %v1994 = vadd.f32 %v1962, %v1978
  %v1995 = vadd.f32 %v1963, %v1979
  %v1996 = vadd.f32 %v1964, %v1980
  %v1997 = vadd.f32 %v1965, %v1981
  %v1998 = vadd.f32 %v1966, %v1982
  %v1999 = vadd.f32 %v1967, %v1983
  %v2000 = vadd.f32 %v1968, %v1984
  %2001 = vst.msk [vmem:[%s10] sm:$0xff] %vm410, %v1985
  %2002 = vst.msk [vmem:[%s10 + $0x8] sm:$0xff] %vm410, %v1986
  %2003 = vst.msk [vmem:[%s10 + $0x10] sm:$0xff] %vm410, %v1987
  %2004 = vst.msk [vmem:[%s10 + $0x18] sm:$0xff] %vm410, %v1988
  %2005 = vst.msk [vmem:[%s10 + $0x20] sm:$0xff] %vm410, %v1989
  %2006 = vst.msk [vmem:[%s10 + $0x28] sm:$0xff] %vm410, %v1990
  %2007 = vst.msk [vmem:[%s10 + $0x30] sm:$0xff] %vm410, %v1991
  %2008 = vst.msk [vmem:[%s10 + $0x38] sm:$0xff] %vm410, %v1992
  %2009 = vst.msk [vmem:[%s10 + $0x40] sm:$0xff] %vm410, %v1993
  %2010 = vst.msk [vmem:[%s10 + $0x48] sm:$0xff] %vm410, %v1994
  %2011 = vst.msk [vmem:[%s10 + $0x50] sm:$0xff] %vm410, %v1995
  %2012 = vst.msk [vmem:[%s10 + $0x58] sm:$0xff] %vm410, %v1996
  %2013 = vst.msk [vmem:[%s10 + $0x60] sm:$0xff] %vm410, %v1997
  %2014 = vst.msk [vmem:[%s10 + $0x68] sm:$0xff] %vm410, %v1998
  %2015 = vst.msk [vmem:[%s10 + $0x70] sm:$0xff] %vm410, %v1999
  %2016 = vst.msk [vmem:[%s10 + $0x78] sm:$0xff] %vm410, %v2000
  %v2017 = vmul.f32 %v1601, %v1713
  %v2018 = vmul.f32 %v1602, %v1714
  %v2019 = vmul.f32 %v1603, %v1715
  %v2020 = vmul.f32 %v1604, %v1716
  %v2021 = vmul.f32 %v1605, %v1717
  %v2022 = vmul.f32 %v1606, %v1718
  %v2023 = vmul.f32 %v1607, %v1719
  %v2024 = vmul.f32 %v1608, %v1720
  %v2025 = vmul.f32 %v1609, %v1721
  %v2026 = vmul.f32 %v1610, %v1722
  %v2027 = vmul.f32 %v1611, %v1723
  %v2028 = vmul.f32 %v1612, %v1724
  %v2029 = vmul.f32 %v1613, %v1725
  %v2030 = vmul.f32 %v1614, %v1726
  %v2031 = vmul.f32 %v1615, %v1727
  %v2032 = vmul.f32 %v1616, %v1728
  %v2033 = vadd.f32 %v1521, %v2017
  %v2034 = vadd.f32 %v1522, %v2018
  %v2035 = vadd.f32 %v1523, %v2019
  %v2036 = vadd.f32 %v1524, %v2020
  %v2037 = vadd.f32 %v1525, %v2021
  %v2038 = vadd.f32 %v1526, %v2022
  %v2039 = vadd.f32 %v1527, %v2023
  %v2040 = vadd.f32 %v1528, %v2024
  %v2041 = vadd.f32 %v1529, %v2025
  %v2042 = vadd.f32 %v1530, %v2026
  %v2043 = vadd.f32 %v1531, %v2027
  %v2044 = vadd.f32 %v1532, %v2028
  %v2045 = vadd.f32 %v1533, %v2029
  %v2046 = vadd.f32 %v1534, %v2030
  %v2047 = vadd.f32 %v1535, %v2031
  %v2048 = vadd.f32 %v1536, %v2032
  %2049 = vst.msk [vmem:[%s9] sm:$0xff] %vm410, %v2033
  %2050 = vst.msk [vmem:[%s9 + $0x8] sm:$0xff] %vm410, %v2034
  %2051 = vst.msk [vmem:[%s9 + $0x10] sm:$0xff] %vm410, %v2035
  %2052 = vst.msk [vmem:[%s9 + $0x18] sm:$0xff] %vm410, %v2036
  %2053 = vst.msk [vmem:[%s9 + $0x20] sm:$0xff] %vm410, %v2037
  %2054 = vst.msk [vmem:[%s9 + $0x28] sm:$0xff] %vm410, %v2038
  %2055 = vst.msk [vmem:[%s9 + $0x30] sm:$0xff] %vm410, %v2039
  %2056 = vst.msk [vmem:[%s9 + $0x38] sm:$0xff] %vm410, %v2040
  %2057 = vst.msk [vmem:[%s9 + $0x40] sm:$0xff] %vm410, %v2041
  %2058 = vst.msk [vmem:[%s9 + $0x48] sm:$0xff] %vm410, %v2042
  %2059 = vst.msk [vmem:[%s9 + $0x50] sm:$0xff] %vm410, %v2043
  %2060 = vst.msk [vmem:[%s9 + $0x58] sm:$0xff] %vm410, %v2044
  %2061 = vst.msk [vmem:[%s9 + $0x60] sm:$0xff] %vm410, %v2045
  %2062 = vst.msk [vmem:[%s9 + $0x68] sm:$0xff] %vm410, %v2046
  %2063 = vst.msk [vmem:[%s9 + $0x70] sm:$0xff] %vm410, %v2047
  %2064 = vst.msk [vmem:[%s9 + $0x78] sm:$0xff] %vm410, %v2048
  %2065 = vst.msk [vmem:[%s11] sm:$0xff] %vm410, %v1937
  %2066 = vst.msk [vmem:[%s11 + $0x8] sm:$0xff] %vm410, %v1938
  %2067 = vst.msk [vmem:[%s11 + $0x10] sm:$0xff] %vm410, %v1939
  %2068 = vst.msk [vmem:[%s11 + $0x18] sm:$0xff] %vm410, %v1940
  %2069 = vst.msk [vmem:[%s11 + $0x20] sm:$0xff] %vm410, %v1941
  %2070 = vst.msk [vmem:[%s11 + $0x28] sm:$0xff] %vm410, %v1942
  %2071 = vst.msk [vmem:[%s11 + $0x30] sm:$0xff] %vm410, %v1943
  %2072 = vst.msk [vmem:[%s11 + $0x38] sm:$0xff] %vm410, %v1944
  %2073 = vst.msk [vmem:[%s11 + $0x40] sm:$0xff] %vm410, %v1945
  %2074 = vst.msk [vmem:[%s11 + $0x48] sm:$0xff] %vm410, %v1946
  %2075 = vst.msk [vmem:[%s11 + $0x50] sm:$0xff] %vm410, %v1947
  %2076 = vst.msk [vmem:[%s11 + $0x58] sm:$0xff] %vm410, %v1948
  %2077 = vst.msk [vmem:[%s11 + $0x60] sm:$0xff] %vm410, %v1949
  %2078 = vst.msk [vmem:[%s11 + $0x68] sm:$0xff] %vm410, %v1950
  %2079 = vst.msk [vmem:[%s11 + $0x70] sm:$0xff] %vm410, %v1951
  %2080 = vst.msk [vmem:[%s11 + $0x78] sm:$0xff] %vm410, %v1952
  // Predicated region
  $region38: #{mimblock_forward.12} parent=0 // pred_check
    _
  $region39: #{mimblock_forward.12} parent=0 // pred_check_branch
    %2082 = sbr.rel (0) target = $region41
  $region40: #{mimblock_forward.12} parent=0 // pred_region
    _
  $region41: #{mimblock_forward.12} parent=0 // pred_fallthru
    _
  // Predicated region
  $region42: #{mimblock_forward.12} parent=0 // pred_check
    _
  $region43: #{mimblock_forward.12} parent=0 // pred_check_branch
    %2084 = sbr.rel (0) target = $region45
  $region44: #{mimblock_forward.12} parent=0 // pred_region
    _
  $region45: #{mimblock_forward.12} parent=0 // pred_fallthru
    _
  // Predicated region
  $region46: #{mimblock_forward.12} parent=0 // pred_check
    _
  $region47: #{mimblock_forward.12} parent=0 // pred_check_branch
    %2086 = sbr.rel (0) target = $region49
  $region48: #{mimblock_forward.12} parent=0 // pred_region
    _
  $region49: #{mimblock_forward.12} parent=0 // pred_fallthru
    _
  // Predicated region
  $region50: #{mimblock_forward.12} parent=0 // pred_check
    _
  $region51: #{mimblock_forward.12} parent=0 // pred_check_branch
    %2088 = sbr.rel (0) target = $region53
  $region52: #{mimblock_forward.12} parent=0 // pred_region
    _
  $region53: #{mimblock_forward.12} parent=0 // pred_fallthru
    _
  // Predicated region
  $region54: #{mimblock_forward.12} parent=0 // pred_check
    _
  $region55: #{mimblock_forward.12} parent=0 // pred_check_branch
    %2090 = sbr.rel (0) target = $region57
  $region56: #{mimblock_forward.12} parent=0 // pred_region
    _
  $region57: #{mimblock_forward.12} parent=0 // pred_fallthru
    _
  // Predicated region
  $region58: #{mimblock_forward.12} parent=0 // pred_check
    _
  $region59: #{mimblock_forward.12} parent=0 // pred_check_branch
    %2092 = sbr.rel (0) target = $region61
  $region60: #{mimblock_forward.12} parent=0 // pred_region
    _
  $region61: #{mimblock_forward.12} parent=0 // pred_fallthru
    _

</llo_original>
